<compile_context>
chip_gen: v7x
topology: tpu7x:2x2x1
jax: 0.10.0
libtpu: 0.0.40
codegen_flags: <defaults>
</compile_context>

<pallas_src>
import functools

import jax
import jax.numpy as jnp
from jax import lax
from jax.experimental import pallas as pl
from jax.experimental.pallas import tpu as pltpu


VP_KEYS = ("wc1", "b1", "g1", "be1", "wc2", "b2", "g2", "be2", "wl", "bl")


# ----------------------------------------------------------------------------
# Fused kernel: per batch element
#   3x [Conv1d(k=3,pad=1) -> ReLU -> LN -> Conv1d -> ReLU -> LN -> Linear -> mask]
#   + 2x [bucketize -> embedding lookup -> add]
#   + duration exp/round/clamp + cumsum + length-regulator expansion
# ----------------------------------------------------------------------------
def _fused_adaptor_kernel(p_control, e_control, d_control,
                          x_ref, mask_ref, *refs):
    del e_control  # original module scales energy prediction by p_control (reproduced)

    d_prm = refs[0:10]
    p_prm = refs[10:20]
    e_prm = refs[20:30]
    p_bins_ref, p_emb_ref, e_bins_ref, e_emb_ref = refs[30:34]
    (xmel_ref, ppred_ref, epred_ref,
     ldur_ref, drnd_ref, mlen_ref) = refs[34:40]

    x = x_ref[0]                                  # (T, H) f32
    mask = mask_ref[0]                            # (T, 1) f32, 1.0 = padding
    T = x.shape[0]
    M = xmel_ref.shape[1]

    def shift3(h):
        # h_prev[t] = h[t-1] (zero row at t=0), h_next[t] = h[t+1] (zero row at t=T-1):
        # kernel-size-3 "same" padding.  Static sublane slice + concat; robust under
        # both the Mosaic compiler and interpret mode (pltpu.roll requires shift >= 0
        # and was the source of the previous compile failure).
        zrow = jnp.zeros((1, h.shape[1]), h.dtype)
        h_prev = jnp.concatenate([zrow, h[:-1, :]], axis=0)
        h_next = jnp.concatenate([h[1:, :], zrow], axis=0)
        return jnp.concatenate([h_prev, h, h_next], axis=-1)        # (T, 3C)

    def layer_norm(h, g_ref, b_ref):
        mu = jnp.mean(h, axis=-1, keepdims=True)
        var = jnp.mean(h * h, axis=-1, keepdims=True) - mu * mu     # single-pass
        return (h - mu) * lax.rsqrt(var + 1e-5) * g_ref[...] + b_ref[...]

    def predictor(h_in, prm):
        wc1, b1, g1, be1, wc2, b2, g2, be2, wl, bl = prm
        h = jnp.dot(shift3(h_in), wc1[...],
                    preferred_element_type=jnp.float32) + b1[...]
        h = jnp.maximum(h, 0.0)
        h = layer_norm(h, g1, be1)
        # dropout_1: identity (eval mode)
        h = jnp.dot(shift3(h), wc2[...],
                    preferred_element_type=jnp.float32) + b2[...]
        h = jnp.maximum(h, 0.0)
        h = layer_norm(h, g2, be2)
        # dropout_2: identity (eval mode)
        pred = jnp.dot(h, wl[...], preferred_element_type=jnp.float32) + bl[...]
        return jnp.where(mask > 0.5, 0.0, pred)                      # (T, 1)

    def bucket_embed(pred, bins_ref, emb_ref):
        # torch.bucketize(right=False): idx = #{bins < value}
        bins = bins_ref[...]                                         # (1, NB-1)
        idx = jnp.sum((bins < pred).astype(jnp.int32), axis=-1, keepdims=True)
        nb = emb_ref.shape[0]
        lane = lax.broadcasted_iota(jnp.int32, (T, nb), 1)
        onehot = (lane == idx).astype(jnp.float32)                   # (T, NB)
        return jnp.dot(onehot, emb_ref[...], preferred_element_type=jnp.float32)

    # --- duration / pitch / energy predictors + variance embeddings ---------
    log_dur = predictor(x, d_prm)                                    # (T, 1)
    ldur_ref[0] = log_dur

    pitch_pred = predictor(x, p_prm) * p_control
    ppred_ref[0] = pitch_pred
    x = x + bucket_embed(pitch_pred, p_bins_ref, p_emb_ref)

    energy_pred = predictor(x, e_prm) * p_control    # p_control: reproduced from module
    epred_ref[0] = energy_pred
    x = x + bucket_embed(energy_pred, e_bins_ref, e_emb_ref)

    # --- duration rounding + length regulation ------------------------------
    dur_col = jnp.maximum(jnp.round(jnp.exp(log_dur) - 1.0) * d_control, 0.0)  # (T,1)
    drnd_ref[0] = dur_col

    # transpose (T,1) -> (1,T) with an eye-mask + sublane reduce (no XLU transpose op)
    r2 = lax.broadcasted_iota(jnp.int32, (T, T), 0)
    c2 = lax.broadcasted_iota(jnp.int32, (T, T), 1)
    eye = (r2 == c2).astype(jnp.float32)
    dur_row = jnp.sum(dur_col * eye, axis=0, keepdims=True)          # (1, T)

    tri = (r2 <= c2).astype(jnp.float32)                             # tri[s,t] = s <= t
    cum_row = jnp.dot(dur_row, tri, preferred_element_type=jnp.float32)  # inclusive cumsum
    cumprev_row = cum_row - dur_row
    mlen_ref[0] = cum_row[:, T - 1:T]                                # (1, 1)

    # frame m copies phoneme t iff cumprev[t] <= m < cum[t]; frames >= mel_len are zero,
    # matching expand + cat + zero-pad.
    m_idx = lax.broadcasted_iota(jnp.int32, (M, T), 0).astype(jnp.float32)
    sel = jnp.logical_and(m_idx >= cumprev_row, m_idx < cum_row).astype(jnp.float32)
    xmel_ref[0] = jnp.dot(sel, x, preferred_element_type=jnp.float32)


# ----------------------------------------------------------------------------
# Wrapper: one pallas_call for the whole VarianceAdaptor forward (inference path)
# ----------------------------------------------------------------------------
def _vp_arrays(p):
    return [p[k] for k in VP_KEYS]


def _const_spec(arr):
    n = arr.ndim
    return pl.BlockSpec(arr.shape, lambda b, _n=n: (0,) * _n)


@functools.partial(jax.jit,
                   static_argnames=("max_mel", "p_control", "e_control", "d_control"))
def variance_adaptor_forward(x, src_mask, params, *, max_mel,
                             p_control=1.0, e_control=1.0, d_control=1.0):
    B, T, H = x.shape
    mask_f = src_mask.astype(jnp.float32)[..., None]                 # (B, T, 1)

    const_arrays = (_vp_arrays(params["dur"]) + _vp_arrays(params["pitch"])
                    + _vp_arrays(params["energy"])
                    + [params["pitch_bins"], params["pitch_emb"],
                       params["energy_bins"], params["energy_emb"]])

    in_specs = ([pl.BlockSpec((1, T, H), lambda b: (b, 0, 0)),
                 pl.BlockSpec((1, T, 1), lambda b: (b, 0, 0))]
                + [_const_spec(a) for a in const_arrays])

    seq_spec = pl.BlockSpec((1, T, 1), lambda b: (b, 0, 0))
    out_shape = (jax.ShapeDtypeStruct((B, max_mel, H), jnp.float32),  # x_mel
                 jax.ShapeDtypeStruct((B, T, 1), jnp.float32),        # pitch_pred
                 jax.ShapeDtypeStruct((B, T, 1), jnp.float32),        # energy_pred
                 jax.ShapeDtypeStruct((B, T, 1), jnp.float32),        # log_dur
                 jax.ShapeDtypeStruct((B, T, 1), jnp.float32),        # dur_rounded
                 jax.ShapeDtypeStruct((B, 1, 1), jnp.float32))        # mel_len (raw)
    out_specs = (pl.BlockSpec((1, max_mel, H), lambda b: (b, 0, 0)),
                 seq_spec, seq_spec, seq_spec, seq_spec,
                 pl.BlockSpec((1, 1, 1), lambda b: (b, 0, 0)))

    kernel = functools.partial(_fused_adaptor_kernel,
                               float(p_control), float(e_control), float(d_control))

    # grid=(B,) marked "parallel": on v7x the 2 TensorCores split the batch; on v5e/v6e
    # this is a short serial loop whose per-step overhead is amortized by the full fusion.
    (x_mel, pitch_pred, energy_pred, log_dur, dur_rounded, mlen_raw) = pl.pallas_call(
        kernel,
        grid=(B,),
        in_specs=in_specs,
        out_specs=out_specs,
        out_shape=out_shape,
        compiler_params=pltpu.CompilerParams(dimension_semantics=("parallel",)),
    )(x, mask_f, *const_arrays)

    # TODO(synk): PyTorch pads to the per-batch max mel length when max_len is None;
    # here the output length is the static `max_mel`, so mel_len is clamped to it.
    mel_len = jnp.minimum(mlen_raw[:, 0, 0], float(max_mel)).astype(jnp.int32)
    mel_mask = jnp.arange(max_mel, dtype=jnp.int32)[None, :] >= mel_len[:, None]

    return (x_mel, pitch_pred[..., 0], energy_pred[..., 0],
            log_dur[..., 0], dur_rounded[..., 0], mel_len, mel_mask)


# ----------------------------------------------------------------------------
# Deterministic synthetic parameter initialization
#   Conv weights are stored pre-fused for the 3-tap conv: (3*C_in, F) = [W_k0; W_k1; W_k2]
#   where W_k[c, f] = torch_conv_weight[f, c, k].
# ----------------------------------------------------------------------------
def _init_vp(key, H, F_, final_bias=0.0):
    k0, k1, k2 = jax.random.split(key, 3)
    s1 = (2.0 / (H + F_)) ** 0.5
    s2 = (2.0 / (F_ + F_)) ** 0.5
    return dict(
        wc1=jax.random.normal(k0, (3 * H, F_), jnp.float32) * s1,
        b1=jnp.zeros((1, F_), jnp.float32),
        g1=jnp.ones((1, F_), jnp.float32),
        be1=jnp.zeros((1, F_), jnp.float32),
        wc2=jax.random.normal(k1, (3 * F_, F_), jnp.float32) * s2,
        b2=jnp.zeros((1, F_), jnp.float32),
        g2=jnp.ones((1, F_), jnp.float32),
        be2=jnp.zeros((1, F_), jnp.float32),
        wl=jax.random.normal(k2, (F_, 1), jnp.float32) * 0.1,
        bl=jnp.full((1, 1), final_bias, jnp.float32),
    )


def init_params(key, H, F_, n_bins):
    kd, kp, ke, kpe, kee = jax.random.split(key, 5)
    # synthetic stats.json replacement (linear quantization)
    pitch_min, pitch_max = -2.0, 10.0
    energy_min, energy_max = -1.5, 8.0
    return dict(
        dur=_init_vp(kd, H, F_, final_bias=1.0),   # bias so durations ~ 2 frames/phoneme
        pitch=_init_vp(kp, H, F_),
        energy=_init_vp(ke, H, F_),
        pitch_bins=jnp.linspace(pitch_min, pitch_max, n_bins - 1,
                                dtype=jnp.float32).reshape(1, n_bins - 1),
        energy_bins=jnp.linspace(energy_min, energy_max, n_bins - 1,
                                 dtype=jnp.float32).reshape(1, n_bins - 1),
        pitch_emb=jax.random.normal(kpe, (n_bins, H), jnp.float32) * 0.02,
        energy_emb=jax.random.normal(kee, (n_bins, H), jnp.float32) * 0.02,
    )


if __name__ == "__main__":
    B, T, H = 2, 8, 32          # batch, phoneme seq len, encoder_hidden
    F_ = 32                     # variance_predictor filter_size
    N_BINS = 256
    MAX_MEL = 32

    key = jax.random.PRNGKey(0)
    kx, kp = jax.random.split(key)
    x = jax.random.normal(kx, (B, T, H), jnp.float32)
    src_lens = jnp.array([8, 6], jnp.int32)
    src_mask = jnp.arange(T)[None, :] >= src_lens[:, None]    # True = padding

    params = init_params(kp, H, F_, N_BINS)

    outs = variance_adaptor_forward(x, src_mask, params, max_mel=MAX_MEL,
                                    p_control=1.0, e_control=1.0, d_control=1.0)
    outs = jax.block_until_ready(outs)

    (x_mel, pitch_pred, energy_pred, log_dur, dur_rounded, mel_len, mel_mask) = outs
    assert x_mel.shape == (B, MAX_MEL, H)
    assert pitch_pred.shape == (B, T) and energy_pred.shape == (B, T)
    assert log_dur.shape == (B, T) and dur_rounded.shape == (B, T)
    assert mel_len.shape == (B,) and mel_mask.shape == (B, MAX_MEL)
    print("KERNEL_OK")
</pallas_src>

<mosaic_0001>
module attributes {stable_mosaic.version = 11 : i64} {
  func.func @_fused_adaptor_kernel(%arg0: i32, %arg1: memref<1x8x32xf32, #tpu.memory_space<vmem>>, %arg2: memref<1x8x1xf32, #tpu.memory_space<vmem>>, %arg3: memref<96x32xf32, #tpu.memory_space<vmem>>, %arg4: memref<1x32xf32, #tpu.memory_space<vmem>>, %arg5: memref<1x32xf32, #tpu.memory_space<vmem>>, %arg6: memref<1x32xf32, #tpu.memory_space<vmem>>, %arg7: memref<96x32xf32, #tpu.memory_space<vmem>>, %arg8: memref<1x32xf32, #tpu.memory_space<vmem>>, %arg9: memref<1x32xf32, #tpu.memory_space<vmem>>, %arg10: memref<1x32xf32, #tpu.memory_space<vmem>>, %arg11: memref<32x1xf32, #tpu.memory_space<vmem>>, %arg12: memref<1x1xf32, #tpu.memory_space<vmem>>, %arg13: memref<96x32xf32, #tpu.memory_space<vmem>>, %arg14: memref<1x32xf32, #tpu.memory_space<vmem>>, %arg15: memref<1x32xf32, #tpu.memory_space<vmem>>, %arg16: memref<1x32xf32, #tpu.memory_space<vmem>>, %arg17: memref<96x32xf32, #tpu.memory_space<vmem>>, %arg18: memref<1x32xf32, #tpu.memory_space<vmem>>, %arg19: memref<1x32xf32, #tpu.memory_space<vmem>>, %arg20: memref<1x32xf32, #tpu.memory_space<vmem>>, %arg21: memref<32x1xf32, #tpu.memory_space<vmem>>, %arg22: memref<1x1xf32, #tpu.memory_space<vmem>>, %arg23: memref<96x32xf32, #tpu.memory_space<vmem>>, %arg24: memref<1x32xf32, #tpu.memory_space<vmem>>, %arg25: memref<1x32xf32, #tpu.memory_space<vmem>>, %arg26: memref<1x32xf32, #tpu.memory_space<vmem>>, %arg27: memref<96x32xf32, #tpu.memory_space<vmem>>, %arg28: memref<1x32xf32, #tpu.memory_space<vmem>>, %arg29: memref<1x32xf32, #tpu.memory_space<vmem>>, %arg30: memref<1x32xf32, #tpu.memory_space<vmem>>, %arg31: memref<32x1xf32, #tpu.memory_space<vmem>>, %arg32: memref<1x1xf32, #tpu.memory_space<vmem>>, %arg33: memref<1x255xf32, #tpu.memory_space<vmem>>, %arg34: memref<256x32xf32, #tpu.memory_space<vmem>>, %arg35: memref<1x255xf32, #tpu.memory_space<vmem>>, %arg36: memref<256x32xf32, #tpu.memory_space<vmem>>, %arg37: memref<1x32x32xf32, #tpu.memory_space<vmem>>, %arg38: memref<1x8x1xf32, #tpu.memory_space<vmem>>, %arg39: memref<1x8x1xf32, #tpu.memory_space<vmem>>, %arg40: memref<1x8x1xf32, #tpu.memory_space<vmem>>, %arg41: memref<1x8x1xf32, #tpu.memory_space<vmem>>, %arg42: memref<1x1x1xf32, #tpu.memory_space<vmem>>) attributes {dimension_semantics = [#tpu.dimension_semantics<parallel>], iteration_bounds = array<i64: 2>, scalar_prefetch = 0 : i64, scratch_operands = 0 : i64, tpu.core_type = #tpu.core_type<tc>, window_params = [{transform_indices = @transform_0, window_bounds = array<i64: 1, 8, 32>}, {transform_indices = @transform_1, window_bounds = array<i64: 1, 8, 1>}, {pipeline_mode = #tpu.pipeline_mode<synchronous>, transform_indices = @transform_2, window_bounds = array<i64: 96, 32>}, {pipeline_mode = #tpu.pipeline_mode<synchronous>, transform_indices = @transform_3, window_bounds = array<i64: 1, 32>}, {pipeline_mode = #tpu.pipeline_mode<synchronous>, transform_indices = @transform_4, window_bounds = array<i64: 1, 32>}, {pipeline_mode = #tpu.pipeline_mode<synchronous>, transform_indices = @transform_5, window_bounds = array<i64: 1, 32>}, {pipeline_mode = #tpu.pipeline_mode<synchronous>, transform_indices = @transform_6, window_bounds = array<i64: 96, 32>}, {pipeline_mode = #tpu.pipeline_mode<synchronous>, transform_indices = @transform_7, window_bounds = array<i64: 1, 32>}, {pipeline_mode = #tpu.pipeline_mode<synchronous>, transform_indices = @transform_8, window_bounds = array<i64: 1, 32>}, {pipeline_mode = #tpu.pipeline_mode<synchronous>, transform_indices = @transform_9, window_bounds = array<i64: 1, 32>}, {pipeline_mode = #tpu.pipeline_mode<synchronous>, transform_indices = @transform_10, window_bounds = array<i64: 32, 1>}, {pipeline_mode = #tpu.pipeline_mode<synchronous>, transform_indices = @transform_11, window_bounds = array<i64: 1, 1>}, {pipeline_mode = #tpu.pipeline_mode<synchronous>, transform_indices = @transform_12, window_bounds = array<i64: 96, 32>}, {pipeline_mode = #tpu.pipeline_mode<synchronous>, transform_indices = @transform_13, window_bounds = array<i64: 1, 32>}, {pipeline_mode = #tpu.pipeline_mode<synchronous>, transform_indices = @transform_14, window_bounds = array<i64: 1, 32>}, {pipeline_mode = #tpu.pipeline_mode<synchronous>, transform_indices = @transform_15, window_bounds = array<i64: 1, 32>}, {pipeline_mode = #tpu.pipeline_mode<synchronous>, transform_indices = @transform_16, window_bounds = array<i64: 96, 32>}, {pipeline_mode = #tpu.pipeline_mode<synchronous>, transform_indices = @transform_17, window_bounds = array<i64: 1, 32>}, {pipeline_mode = #tpu.pipeline_mode<synchronous>, transform_indices = @transform_18, window_bounds = array<i64: 1, 32>}, {pipeline_mode = #tpu.pipeline_mode<synchronous>, transform_indices = @transform_19, window_bounds = array<i64: 1, 32>}, {pipeline_mode = #tpu.pipeline_mode<synchronous>, transform_indices = @transform_20, window_bounds = array<i64: 32, 1>}, {pipeline_mode = #tpu.pipeline_mode<synchronous>, transform_indices = @transform_21, window_bounds = array<i64: 1, 1>}, {pipeline_mode = #tpu.pipeline_mode<synchronous>, transform_indices = @transform_22, window_bounds = array<i64: 96, 32>}, {pipeline_mode = #tpu.pipeline_mode<synchronous>, transform_indices = @transform_23, window_bounds = array<i64: 1, 32>}, {pipeline_mode = #tpu.pipeline_mode<synchronous>, transform_indices = @transform_24, window_bounds = array<i64: 1, 32>}, {pipeline_mode = #tpu.pipeline_mode<synchronous>, transform_indices = @transform_25, window_bounds = array<i64: 1, 32>}, {pipeline_mode = #tpu.pipeline_mode<synchronous>, transform_indices = @transform_26, window_bounds = array<i64: 96, 32>}, {pipeline_mode = #tpu.pipeline_mode<synchronous>, transform_indices = @transform_27, window_bounds = array<i64: 1, 32>}, {pipeline_mode = #tpu.pipeline_mode<synchronous>, transform_indices = @transform_28, window_bounds = array<i64: 1, 32>}, {pipeline_mode = #tpu.pipeline_mode<synchronous>, transform_indices = @transform_29, window_bounds = array<i64: 1, 32>}, {pipeline_mode = #tpu.pipeline_mode<synchronous>, transform_indices = @transform_30, window_bounds = array<i64: 32, 1>}, {pipeline_mode = #tpu.pipeline_mode<synchronous>, transform_indices = @transform_31, window_bounds = array<i64: 1, 1>}, {pipeline_mode = #tpu.pipeline_mode<synchronous>, transform_indices = @transform_32, window_bounds = array<i64: 1, 255>}, {pipeline_mode = #tpu.pipeline_mode<synchronous>, transform_indices = @transform_33, window_bounds = array<i64: 256, 32>}, {pipeline_mode = #tpu.pipeline_mode<synchronous>, transform_indices = @transform_34, window_bounds = array<i64: 1, 255>}, {pipeline_mode = #tpu.pipeline_mode<synchronous>, transform_indices = @transform_35, window_bounds = array<i64: 256, 32>}, {transform_indices = @transform_36, window_bounds = array<i64: 1, 32, 32>}, {transform_indices = @transform_37, window_bounds = array<i64: 1, 8, 1>}, {transform_indices = @transform_38, window_bounds = array<i64: 1, 8, 1>}, {transform_indices = @transform_39, window_bounds = array<i64: 1, 8, 1>}, {transform_indices = @transform_40, window_bounds = array<i64: 1, 8, 1>}, {transform_indices = @transform_41, window_bounds = array<i64: 1, 1, 1>}]} {
    %c0 = arith.constant 0 : index
    %c0_0 = arith.constant 0 : index
    %c0_1 = arith.constant 0 : index
    %0 = vector.load %arg1[%c0, %c0_0, %c0_1] : memref<1x8x32xf32, #tpu.memory_space<vmem>>, vector<1x8x32xf32>
    %1 = vector.shape_cast %0 : vector<1x8x32xf32> to vector<8x32xf32>
    %c0_2 = arith.constant 0 : index
    %c0_3 = arith.constant 0 : index
    %c0_4 = arith.constant 0 : index
    %2 = vector.load %arg2[%c0_2, %c0_3, %c0_4] : memref<1x8x1xf32, #tpu.memory_space<vmem>>, vector<1x8x1xf32>
    %3 = vector.shape_cast %2 : vector<1x8x1xf32> to vector<8x1xf32>
    %cst = arith.constant 0.000000e+00 : f32
    %4 = vector.broadcast %cst : f32 to vector<1x32xf32>
    %5 = vector.extract_strided_slice %1 {offsets = [0, 0], sizes = [7, 32], strides = [1, 1]} : vector<8x32xf32> to vector<7x32xf32>
    %6 = tpu.concatenate %4, %5 in 0 : vector<1x32xf32>, vector<7x32xf32> -> vector<8x32xf32>
    %7 = vector.extract_strided_slice %1 {offsets = [1, 0], sizes = [7, 32], strides = [1, 1]} : vector<8x32xf32> to vector<7x32xf32>
    %8 = tpu.concatenate %7, %4 in 0 : vector<7x32xf32>, vector<1x32xf32> -> vector<8x32xf32>
    %9 = tpu.concatenate %6, %1, %8 in 1 : vector<8x32xf32>, vector<8x32xf32>, vector<8x32xf32> -> vector<8x96xf32>
    %c0_5 = arith.constant 0 : index
    %c0_6 = arith.constant 0 : index
    %10 = vector.load %arg3[%c0_5, %c0_6] : memref<96x32xf32, #tpu.memory_space<vmem>>, vector<96x32xf32>
    %cst_7 = arith.constant dense<0.000000e+00> : vector<8x32xf32>
    %11 = tpu.matmul %9, %10, %cst_7 {dimension_numbers = #tpu.dot_dimension_numbers<[1], [0], [0], [1], [0, 0, 1, 1], [], []>} : vector<8x96xf32>, vector<96x32xf32>, vector<8x32xf32> -> vector<8x32xf32>
    %c0_8 = arith.constant 0 : index
    %c0_9 = arith.constant 0 : index
    %12 = vector.load %arg4[%c0_8, %c0_9] : memref<1x32xf32, #tpu.memory_space<vmem>>, vector<1x32xf32>
    %13 = vector.broadcast %12 : vector<1x32xf32> to vector<8x32xf32>
    %14 = arith.addf %11, %13 : vector<8x32xf32>
    %cst_10 = arith.constant 0.000000e+00 : f32
    %15 = vector.broadcast %cst_10 : f32 to vector<8x32xf32>
    %16 = arith.maximumf %14, %15 : vector<8x32xf32>
    %cst_11 = arith.constant dense<0.000000e+00> : vector<8xf32>
    %17 = vector.multi_reduction <add>, %16, %cst_11 [1] : vector<8x32xf32> to vector<8xf32>
    %18 = vector.shape_cast %17 : vector<8xf32> to vector<8x1xf32>
    %cst_12 = arith.constant 3.200000e+01 : f32
    %19 = vector.broadcast %cst_12 : f32 to vector<8x1xf32>
    %20 = arith.divf %18, %19 : vector<8x1xf32>
    %21 = arith.mulf %16, %16 : vector<8x32xf32>
    %cst_13 = arith.constant dense<0.000000e+00> : vector<8xf32>
    %22 = vector.multi_reduction <add>, %21, %cst_13 [1] : vector<8x32xf32> to vector<8xf32>
    %23 = vector.shape_cast %22 : vector<8xf32> to vector<8x1xf32>
    %cst_14 = arith.constant 3.200000e+01 : f32
    %24 = vector.broadcast %cst_14 : f32 to vector<8x1xf32>
    %25 = arith.divf %23, %24 : vector<8x1xf32>
    %26 = arith.mulf %20, %20 : vector<8x1xf32>
    %27 = arith.subf %25, %26 : vector<8x1xf32>
    %28 = vector.broadcast %20 : vector<8x1xf32> to vector<8x32xf32>
    %29 = arith.subf %16, %28 : vector<8x32xf32>
    %cst_15 = arith.constant 9.99999974E-6 : f32
    %30 = vector.broadcast %cst_15 : f32 to vector<8x1xf32>
    %31 = arith.addf %27, %30 : vector<8x1xf32>
    %32 = math.rsqrt %31 : vector<8x1xf32>
    %33 = vector.broadcast %32 : vector<8x1xf32> to vector<8x32xf32>
    %34 = arith.mulf %29, %33 : vector<8x32xf32>
    %c0_16 = arith.constant 0 : index
    %c0_17 = arith.constant 0 : index
    %35 = vector.load %arg5[%c0_16, %c0_17] : memref<1x32xf32, #tpu.memory_space<vmem>>, vector<1x32xf32>
    %36 = vector.broadcast %35 : vector<1x32xf32> to vector<8x32xf32>
    %37 = arith.mulf %34, %36 : vector<8x32xf32>
    %c0_18 = arith.constant 0 : index
    %c0_19 = arith.constant 0 : index
    %38 = vector.load %arg6[%c0_18, %c0_19] : memref<1x32xf32, #tpu.memory_space<vmem>>, vector<1x32xf32>
    %39 = vector.broadcast %38 : vector<1x32xf32> to vector<8x32xf32>
    %40 = arith.addf %37, %39 : vector<8x32xf32>
    %cst_20 = arith.constant 0.000000e+00 : f32
    %41 = vector.broadcast %cst_20 : f32 to vector<1x32xf32>
    %42 = vector.extract_strided_slice %40 {offsets = [0, 0], sizes = [7, 32], strides = [1, 1]} : vector<8x32xf32> to vector<7x32xf32>
    %43 = tpu.concatenate %41, %42 in 0 : vector<1x32xf32>, vector<7x32xf32> -> vector<8x32xf32>
    %44 = vector.extract_strided_slice %40 {offsets = [1, 0], sizes = [7, 32], strides = [1, 1]} : vector<8x32xf32> to vector<7x32xf32>
    %45 = tpu.concatenate %44, %41 in 0 : vector<7x32xf32>, vector<1x32xf32> -> vector<8x32xf32>
    %46 = tpu.concatenate %43, %40, %45 in 1 : vector<8x32xf32>, vector<8x32xf32>, vector<8x32xf32> -> vector<8x96xf32>
    %c0_21 = arith.constant 0 : index
    %c0_22 = arith.constant 0 : index
    %47 = vector.load %arg7[%c0_21, %c0_22] : memref<96x32xf32, #tpu.memory_space<vmem>>, vector<96x32xf32>
    %cst_23 = arith.constant dense<0.000000e+00> : vector<8x32xf32>
    %48 = tpu.matmul %46, %47, %cst_23 {dimension_numbers = #tpu.dot_dimension_numbers<[1], [0], [0], [1], [0, 0, 1, 1], [], []>} : vector<8x96xf32>, vector<96x32xf32>, vector<8x32xf32> -> vector<8x32xf32>
    %c0_24 = arith.constant 0 : index
    %c0_25 = arith.constant 0 : index
    %49 = vector.load %arg8[%c0_24, %c0_25] : memref<1x32xf32, #tpu.memory_space<vmem>>, vector<1x32xf32>
    %50 = vector.broadcast %49 : vector<1x32xf32> to vector<8x32xf32>
    %51 = arith.addf %48, %50 : vector<8x32xf32>
    %cst_26 = arith.constant 0.000000e+00 : f32
    %52 = vector.broadcast %cst_26 : f32 to vector<8x32xf32>
    %53 = arith.maximumf %51, %52 : vector<8x32xf32>
    %cst_27 = arith.constant dense<0.000000e+00> : vector<8xf32>
    %54 = vector.multi_reduction <add>, %53, %cst_27 [1] : vector<8x32xf32> to vector<8xf32>
    %55 = vector.shape_cast %54 : vector<8xf32> to vector<8x1xf32>
    %cst_28 = arith.constant 3.200000e+01 : f32
    %56 = vector.broadcast %cst_28 : f32 to vector<8x1xf32>
    %57 = arith.divf %55, %56 : vector<8x1xf32>
    %58 = arith.mulf %53, %53 : vector<8x32xf32>
    %cst_29 = arith.constant dense<0.000000e+00> : vector<8xf32>
    %59 = vector.multi_reduction <add>, %58, %cst_29 [1] : vector<8x32xf32> to vector<8xf32>
    %60 = vector.shape_cast %59 : vector<8xf32> to vector<8x1xf32>
    %cst_30 = arith.constant 3.200000e+01 : f32
    %61 = vector.broadcast %cst_30 : f32 to vector<8x1xf32>
    %62 = arith.divf %60, %61 : vector<8x1xf32>
    %63 = arith.mulf %57, %57 : vector<8x1xf32>
    %64 = arith.subf %62, %63 : vector<8x1xf32>
    %65 = vector.broadcast %57 : vector<8x1xf32> to vector<8x32xf32>
    %66 = arith.subf %53, %65 : vector<8x32xf32>
    %cst_31 = arith.constant 9.99999974E-6 : f32
    %67 = vector.broadcast %cst_31 : f32 to vector<8x1xf32>
    %68 = arith.addf %64, %67 : vector<8x1xf32>
    %69 = math.rsqrt %68 : vector<8x1xf32>
    %70 = vector.broadcast %69 : vector<8x1xf32> to vector<8x32xf32>
    %71 = arith.mulf %66, %70 : vector<8x32xf32>
    %c0_32 = arith.constant 0 : index
    %c0_33 = arith.constant 0 : index
    %72 = vector.load %arg9[%c0_32, %c0_33] : memref<1x32xf32, #tpu.memory_space<vmem>>, vector<1x32xf32>
    %73 = vector.broadcast %72 : vector<1x32xf32> to vector<8x32xf32>
    %74 = arith.mulf %71, %73 : vector<8x32xf32>
    %c0_34 = arith.constant 0 : index
    %c0_35 = arith.constant 0 : index
    %75 = vector.load %arg10[%c0_34, %c0_35] : memref<1x32xf32, #tpu.memory_space<vmem>>, vector<1x32xf32>
    %76 = vector.broadcast %75 : vector<1x32xf32> to vector<8x32xf32>
    %77 = arith.addf %74, %76 : vector<8x32xf32>
    %c0_36 = arith.constant 0 : index
    %c0_37 = arith.constant 0 : index
    %78 = vector.load %arg11[%c0_36, %c0_37] : memref<32x1xf32, #tpu.memory_space<vmem>>, vector<32x1xf32>
    %cst_38 = arith.constant dense<0.000000e+00> : vector<8x1xf32>
    %79 = tpu.matmul %77, %78, %cst_38 {dimension_numbers = #tpu.dot_dimension_numbers<[1], [0], [0], [1], [0, 0, 1, 1], [], []>} : vector<8x32xf32>, vector<32x1xf32>, vector<8x1xf32> -> vector<8x1xf32>
    %c0_39 = arith.constant 0 : index
    %c0_40 = arith.constant 0 : index
    %80 = vector.load %arg12[%c0_39, %c0_40] : memref<1x1xf32, #tpu.memory_space<vmem>>, vector<1x1xf32>
    %81 = vector.broadcast %80 : vector<1x1xf32> to vector<8x1xf32>
    %82 = arith.addf %79, %81 : vector<8x1xf32>
    %cst_41 = arith.constant 5.000000e-01 : f32
    %83 = vector.broadcast %cst_41 : f32 to vector<8x1xf32>
    %84 = arith.cmpf ogt, %3, %83 : vector<8x1xf32>
    %cst_42 = arith.constant 0.000000e+00 : f32
    %85 = vector.broadcast %cst_42 : f32 to vector<8x1xf32>
    %86 = arith.select %84, %85, %82 : vector<8x1xi1>, vector<8x1xf32>
    %c0_43 = arith.constant 0 : index
    %c0_44 = arith.constant 0 : index
    %c0_45 = arith.constant 0 : index
    %87 = vector.load %arg40[%c0_43, %c0_44, %c0_45] : memref<1x8x1xf32, #tpu.memory_space<vmem>>, vector<1x8x1xf32>
    %88 = vector.shape_cast %87 : vector<1x8x1xf32> to vector<8x1xf32>
    %89 = vector.shape_cast %86 : vector<8x1xf32> to vector<1x8x1xf32>
    tpu.vector_store %arg40[%c0_43, %c0_44, %c0_45], %89 {strides = array<i32>} : memref<1x8x1xf32, #tpu.memory_space<vmem>>, vector<1x8x1xf32>,
    %cst_46 = arith.constant 0.000000e+00 : f32
    %90 = vector.broadcast %cst_46 : f32 to vector<1x32xf32>
    %91 = vector.extract_strided_slice %1 {offsets = [0, 0], sizes = [7, 32], strides = [1, 1]} : vector<8x32xf32> to vector<7x32xf32>
    %92 = tpu.concatenate %90, %91 in 0 : vector<1x32xf32>, vector<7x32xf32> -> vector<8x32xf32>
    %93 = vector.extract_strided_slice %1 {offsets = [1, 0], sizes = [7, 32], strides = [1, 1]} : vector<8x32xf32> to vector<7x32xf32>
    %94 = tpu.concatenate %93, %90 in 0 : vector<7x32xf32>, vector<1x32xf32> -> vector<8x32xf32>
    %95 = tpu.concatenate %92, %1, %94 in 1 : vector<8x32xf32>, vector<8x32xf32>, vector<8x32xf32> -> vector<8x96xf32>
    %c0_47 = arith.constant 0 : index
    %c0_48 = arith.constant 0 : index
    %96 = vector.load %arg13[%c0_47, %c0_48] : memref<96x32xf32, #tpu.memory_space<vmem>>, vector<96x32xf32>
    %cst_49 = arith.constant dense<0.000000e+00> : vector<8x32xf32>
    %97 = tpu.matmul %95, %96, %cst_49 {dimension_numbers = #tpu.dot_dimension_numbers<[1], [0], [0], [1], [0, 0, 1, 1], [], []>} : vector<8x96xf32>, vector<96x32xf32>, vector<8x32xf32> -> vector<8x32xf32>
    %c0_50 = arith.constant 0 : index
    %c0_51 = arith.constant 0 : index
    %98 = vector.load %arg14[%c0_50, %c0_51] : memref<1x32xf32, #tpu.memory_space<vmem>>, vector<1x32xf32>
    %99 = vector.broadcast %98 : vector<1x32xf32> to vector<8x32xf32>
    %100 = arith.addf %97, %99 : vector<8x32xf32>
    %cst_52 = arith.constant 0.000000e+00 : f32
    %101 = vector.broadcast %cst_52 : f32 to vector<8x32xf32>
    %102 = arith.maximumf %100, %101 : vector<8x32xf32>
    %cst_53 = arith.constant dense<0.000000e+00> : vector<8xf32>
    %103 = vector.multi_reduction <add>, %102, %cst_53 [1] : vector<8x32xf32> to vector<8xf32>
    %104 = vector.shape_cast %103 : vector<8xf32> to vector<8x1xf32>
    %cst_54 = arith.constant 3.200000e+01 : f32
    %105 = vector.broadcast %cst_54 : f32 to vector<8x1xf32>
    %106 = arith.divf %104, %105 : vector<8x1xf32>
    %107 = arith.mulf %102, %102 : vector<8x32xf32>
    %cst_55 = arith.constant dense<0.000000e+00> : vector<8xf32>
    %108 = vector.multi_reduction <add>, %107, %cst_55 [1] : vector<8x32xf32> to vector<8xf32>
    %109 = vector.shape_cast %108 : vector<8xf32> to vector<8x1xf32>
    %cst_56 = arith.constant 3.200000e+01 : f32
    %110 = vector.broadcast %cst_56 : f32 to vector<8x1xf32>
    %111 = arith.divf %109, %110 : vector<8x1xf32>
    %112 = arith.mulf %106, %106 : vector<8x1xf32>
    %113 = arith.subf %111, %112 : vector<8x1xf32>
    %114 = vector.broadcast %106 : vector<8x1xf32> to vector<8x32xf32>
    %115 = arith.subf %102, %114 : vector<8x32xf32>
    %cst_57 = arith.constant 9.99999974E-6 : f32
    %116 = vector.broadcast %cst_57 : f32 to vector<8x1xf32>
    %117 = arith.addf %113, %116 : vector<8x1xf32>
    %118 = math.rsqrt %117 : vector<8x1xf32>
    %119 = vector.broadcast %118 : vector<8x1xf32> to vector<8x32xf32>
    %120 = arith.mulf %115, %119 : vector<8x32xf32>
    %c0_58 = arith.constant 0 : index
    %c0_59 = arith.constant 0 : index
    %121 = vector.load %arg15[%c0_58, %c0_59] : memref<1x32xf32, #tpu.memory_space<vmem>>, vector<1x32xf32>
    %122 = vector.broadcast %121 : vector<1x32xf32> to vector<8x32xf32>
    %123 = arith.mulf %120, %122 : vector<8x32xf32>
    %c0_60 = arith.constant 0 : index
    %c0_61 = arith.constant 0 : index
    %124 = vector.load %arg16[%c0_60, %c0_61] : memref<1x32xf32, #tpu.memory_space<vmem>>, vector<1x32xf32>
    %125 = vector.broadcast %124 : vector<1x32xf32> to vector<8x32xf32>
    %126 = arith.addf %123, %125 : vector<8x32xf32>
    %cst_62 = arith.constant 0.000000e+00 : f32
    %127 = vector.broadcast %cst_62 : f32 to vector<1x32xf32>
    %128 = vector.extract_strided_slice %126 {offsets = [0, 0], sizes = [7, 32], strides = [1, 1]} : vector<8x32xf32> to vector<7x32xf32>
    %129 = tpu.concatenate %127, %128 in 0 : vector<1x32xf32>, vector<7x32xf32> -> vector<8x32xf32>
    %130 = vector.extract_strided_slice %126 {offsets = [1, 0], sizes = [7, 32], strides = [1, 1]} : vector<8x32xf32> to vector<7x32xf32>
    %131 = tpu.concatenate %130, %127 in 0 : vector<7x32xf32>, vector<1x32xf32> -> vector<8x32xf32>
    %132 = tpu.concatenate %129, %126, %131 in 1 : vector<8x32xf32>, vector<8x32xf32>, vector<8x32xf32> -> vector<8x96xf32>
    %c0_63 = arith.constant 0 : index
    %c0_64 = arith.constant 0 : index
    %133 = vector.load %arg17[%c0_63, %c0_64] : memref<96x32xf32, #tpu.memory_space<vmem>>, vector<96x32xf32>
    %cst_65 = arith.constant dense<0.000000e+00> : vector<8x32xf32>
    %134 = tpu.matmul %132, %133, %cst_65 {dimension_numbers = #tpu.dot_dimension_numbers<[1], [0], [0], [1], [0, 0, 1, 1], [], []>} : vector<8x96xf32>, vector<96x32xf32>, vector<8x32xf32> -> vector<8x32xf32>
    %c0_66 = arith.constant 0 : index
    %c0_67 = arith.constant 0 : index
    %135 = vector.load %arg18[%c0_66, %c0_67] : memref<1x32xf32, #tpu.memory_space<vmem>>, vector<1x32xf32>
    %136 = vector.broadcast %135 : vector<1x32xf32> to vector<8x32xf32>
    %137 = arith.addf %134, %136 : vector<8x32xf32>
    %cst_68 = arith.constant 0.000000e+00 : f32
    %138 = vector.broadcast %cst_68 : f32 to vector<8x32xf32>
    %139 = arith.maximumf %137, %138 : vector<8x32xf32>
    %cst_69 = arith.constant dense<0.000000e+00> : vector<8xf32>
    %140 = vector.multi_reduction <add>, %139, %cst_69 [1] : vector<8x32xf32> to vector<8xf32>
    %141 = vector.shape_cast %140 : vector<8xf32> to vector<8x1xf32>
    %cst_70 = arith.constant 3.200000e+01 : f32
    %142 = vector.broadcast %cst_70 : f32 to vector<8x1xf32>
    %143 = arith.divf %141, %142 : vector<8x1xf32>
    %144 = arith.mulf %139, %139 : vector<8x32xf32>
    %cst_71 = arith.constant dense<0.000000e+00> : vector<8xf32>
    %145 = vector.multi_reduction <add>, %144, %cst_71 [1] : vector<8x32xf32> to vector<8xf32>
    %146 = vector.shape_cast %145 : vector<8xf32> to vector<8x1xf32>
    %cst_72 = arith.constant 3.200000e+01 : f32
    %147 = vector.broadcast %cst_72 : f32 to vector<8x1xf32>
    %148 = arith.divf %146, %147 : vector<8x1xf32>
    %149 = arith.mulf %143, %143 : vector<8x1xf32>
    %150 = arith.subf %148, %149 : vector<8x1xf32>
    %151 = vector.broadcast %143 : vector<8x1xf32> to vector<8x32xf32>
    %152 = arith.subf %139, %151 : vector<8x32xf32>
    %cst_73 = arith.constant 9.99999974E-6 : f32
    %153 = vector.broadcast %cst_73 : f32 to vector<8x1xf32>
    %154 = arith.addf %150, %153 : vector<8x1xf32>
    %155 = math.rsqrt %154 : vector<8x1xf32>
    %156 = vector.broadcast %155 : vector<8x1xf32> to vector<8x32xf32>
    %157 = arith.mulf %152, %156 : vector<8x32xf32>
    %c0_74 = arith.constant 0 : index
    %c0_75 = arith.constant 0 : index
    %158 = vector.load %arg19[%c0_74, %c0_75] : memref<1x32xf32, #tpu.memory_space<vmem>>, vector<1x32xf32>
    %159 = vector.broadcast %158 : vector<1x32xf32> to vector<8x32xf32>
    %160 = arith.mulf %157, %159 : vector<8x32xf32>
    %c0_76 = arith.constant 0 : index
    %c0_77 = arith.constant 0 : index
    %161 = vector.load %arg20[%c0_76, %c0_77] : memref<1x32xf32, #tpu.memory_space<vmem>>, vector<1x32xf32>
    %162 = vector.broadcast %161 : vector<1x32xf32> to vector<8x32xf32>
    %163 = arith.addf %160, %162 : vector<8x32xf32>
    %c0_78 = arith.constant 0 : index
    %c0_79 = arith.constant 0 : index
    %164 = vector.load %arg21[%c0_78, %c0_79] : memref<32x1xf32, #tpu.memory_space<vmem>>, vector<32x1xf32>
    %cst_80 = arith.constant dense<0.000000e+00> : vector<8x1xf32>
    %165 = tpu.matmul %163, %164, %cst_80 {dimension_numbers = #tpu.dot_dimension_numbers<[1], [0], [0], [1], [0, 0, 1, 1], [], []>} : vector<8x32xf32>, vector<32x1xf32>, vector<8x1xf32> -> vector<8x1xf32>
    %c0_81 = arith.constant 0 : index
    %c0_82 = arith.constant 0 : index
    %166 = vector.load %arg22[%c0_81, %c0_82] : memref<1x1xf32, #tpu.memory_space<vmem>>, vector<1x1xf32>
    %167 = vector.broadcast %166 : vector<1x1xf32> to vector<8x1xf32>
    %168 = arith.addf %165, %167 : vector<8x1xf32>
    %cst_83 = arith.constant 5.000000e-01 : f32
    %169 = vector.broadcast %cst_83 : f32 to vector<8x1xf32>
    %170 = arith.cmpf ogt, %3, %169 : vector<8x1xf32>
    %cst_84 = arith.constant 0.000000e+00 : f32
    %171 = vector.broadcast %cst_84 : f32 to vector<8x1xf32>
    %172 = arith.select %170, %171, %168 : vector<8x1xi1>, vector<8x1xf32>
    %cst_85 = arith.constant 1.000000e+00 : f32
    %173 = vector.broadcast %cst_85 : f32 to vector<8x1xf32>
    %174 = arith.mulf %172, %173 : vector<8x1xf32>
    %c0_86 = arith.constant 0 : index
    %c0_87 = arith.constant 0 : index
    %c0_88 = arith.constant 0 : index
    %175 = vector.load %arg38[%c0_86, %c0_87, %c0_88] : memref<1x8x1xf32, #tpu.memory_space<vmem>>, vector<1x8x1xf32>
    %176 = vector.shape_cast %175 : vector<1x8x1xf32> to vector<8x1xf32>
    %177 = vector.shape_cast %174 : vector<8x1xf32> to vector<1x8x1xf32>
    tpu.vector_store %arg38[%c0_86, %c0_87, %c0_88], %177 {strides = array<i32>} : memref<1x8x1xf32, #tpu.memory_space<vmem>>, vector<1x8x1xf32>,
    %c0_89 = arith.constant 0 : index
    %c0_90 = arith.constant 0 : index
    %178 = vector.load %arg33[%c0_89, %c0_90] : memref<1x255xf32, #tpu.memory_space<vmem>>, vector<1x255xf32>
    %179 = vector.broadcast %178 : vector<1x255xf32> to vector<8x255xf32>
    %180 = vector.broadcast %174 : vector<8x1xf32> to vector<8x255xf32>
    %181 = arith.cmpf olt, %179, %180 : vector<8x255xf32>
    %182 = arith.extui %181 : vector<8x255xi1> to vector<8x255xi32>
    %cst_91 = arith.constant dense<0> : vector<8xi32>
    %183 = vector.multi_reduction <add>, %182, %cst_91 [1] : vector<8x255xi32> to vector<8xi32>
    %184 = vector.shape_cast %183 : vector<8xi32> to vector<8x1xi32>
    %185 = tpu.iota {dimensions = array<i32: 1>} : vector<8x256xi32>
    %186 = vector.broadcast %184 : vector<8x1xi32> to vector<8x256xi32>
    %187 = arith.cmpi eq, %185, %186 : vector<8x256xi32>
    %188 = arith.extui %187 : vector<8x256xi1> to vector<8x256xi32>
    %189 = arith.sitofp %188 : vector<8x256xi32> to vector<8x256xf32>
    %c0_92 = arith.constant 0 : index
    %c0_93 = arith.constant 0 : index
    %190 = vector.load %arg34[%c0_92, %c0_93] : memref<256x32xf32, #tpu.memory_space<vmem>>, vector<256x32xf32>
    %cst_94 = arith.constant dense<0.000000e+00> : vector<8x32xf32>
    %191 = tpu.matmul %189, %190, %cst_94 {dimension_numbers = #tpu.dot_dimension_numbers<[1], [0], [0], [1], [0, 0, 1, 1], [], []>} : vector<8x256xf32>, vector<256x32xf32>, vector<8x32xf32> -> vector<8x32xf32>
    %192 = arith.addf %1, %191 : vector<8x32xf32>
    %cst_95 = arith.constant 0.000000e+00 : f32
    %193 = vector.broadcast %cst_95 : f32 to vector<1x32xf32>
    %194 = vector.extract_strided_slice %192 {offsets = [0, 0], sizes = [7, 32], strides = [1, 1]} : vector<8x32xf32> to vector<7x32xf32>
    %195 = tpu.concatenate %193, %194 in 0 : vector<1x32xf32>, vector<7x32xf32> -> vector<8x32xf32>
    %196 = vector.extract_strided_slice %192 {offsets = [1, 0], sizes = [7, 32], strides = [1, 1]} : vector<8x32xf32> to vector<7x32xf32>
    %197 = tpu.concatenate %196, %193 in 0 : vector<7x32xf32>, vector<1x32xf32> -> vector<8x32xf32>
    %198 = tpu.concatenate %195, %192, %197 in 1 : vector<8x32xf32>, vector<8x32xf32>, vector<8x32xf32> -> vector<8x96xf32>
    %c0_96 = arith.constant 0 : index
    %c0_97 = arith.constant 0 : index
    %199 = vector.load %arg23[%c0_96, %c0_97] : memref<96x32xf32, #tpu.memory_space<vmem>>, vector<96x32xf32>
    %cst_98 = arith.constant dense<0.000000e+00> : vector<8x32xf32>
    %200 = tpu.matmul %198, %199, %cst_98 {dimension_numbers = #tpu.dot_dimension_numbers<[1], [0], [0], [1], [0, 0, 1, 1], [], []>} : vector<8x96xf32>, vector<96x32xf32>, vector<8x32xf32> -> vector<8x32xf32>
    %c0_99 = arith.constant 0 : index
    %c0_100 = arith.constant 0 : index
    %201 = vector.load %arg24[%c0_99, %c0_100] : memref<1x32xf32, #tpu.memory_space<vmem>>, vector<1x32xf32>
    %202 = vector.broadcast %201 : vector<1x32xf32> to vector<8x32xf32>
    %203 = arith.addf %200, %202 : vector<8x32xf32>
    %cst_101 = arith.constant 0.000000e+00 : f32
    %204 = vector.broadcast %cst_101 : f32 to vector<8x32xf32>
    %205 = arith.maximumf %203, %204 : vector<8x32xf32>
    %cst_102 = arith.constant dense<0.000000e+00> : vector<8xf32>
    %206 = vector.multi_reduction <add>, %205, %cst_102 [1] : vector<8x32xf32> to vector<8xf32>
    %207 = vector.shape_cast %206 : vector<8xf32> to vector<8x1xf32>
    %cst_103 = arith.constant 3.200000e+01 : f32
    %208 = vector.broadcast %cst_103 : f32 to vector<8x1xf32>
    %209 = arith.divf %207, %208 : vector<8x1xf32>
    %210 = arith.mulf %205, %205 : vector<8x32xf32>
    %cst_104 = arith.constant dense<0.000000e+00> : vector<8xf32>
    %211 = vector.multi_reduction <add>, %210, %cst_104 [1] : vector<8x32xf32> to vector<8xf32>
    %212 = vector.shape_cast %211 : vector<8xf32> to vector<8x1xf32>
    %cst_105 = arith.constant 3.200000e+01 : f32
    %213 = vector.broadcast %cst_105 : f32 to vector<8x1xf32>
    %214 = arith.divf %212, %213 : vector<8x1xf32>
    %215 = arith.mulf %209, %209 : vector<8x1xf32>
    %216 = arith.subf %214, %215 : vector<8x1xf32>
    %217 = vector.broadcast %209 : vector<8x1xf32> to vector<8x32xf32>
    %218 = arith.subf %205, %217 : vector<8x32xf32>
    %cst_106 = arith.constant 9.99999974E-6 : f32
    %219 = vector.broadcast %cst_106 : f32 to vector<8x1xf32>
    %220 = arith.addf %216, %219 : vector<8x1xf32>
    %221 = math.rsqrt %220 : vector<8x1xf32>
    %222 = vector.broadcast %221 : vector<8x1xf32> to vector<8x32xf32>
    %223 = arith.mulf %218, %222 : vector<8x32xf32>
    %c0_107 = arith.constant 0 : index
    %c0_108 = arith.constant 0 : index
    %224 = vector.load %arg25[%c0_107, %c0_108] : memref<1x32xf32, #tpu.memory_space<vmem>>, vector<1x32xf32>
    %225 = vector.broadcast %224 : vector<1x32xf32> to vector<8x32xf32>
    %226 = arith.mulf %223, %225 : vector<8x32xf32>
    %c0_109 = arith.constant 0 : index
    %c0_110 = arith.constant 0 : index
    %227 = vector.load %arg26[%c0_109, %c0_110] : memref<1x32xf32, #tpu.memory_space<vmem>>, vector<1x32xf32>
    %228 = vector.broadcast %227 : vector<1x32xf32> to vector<8x32xf32>
    %229 = arith.addf %226, %228 : vector<8x32xf32>
    %cst_111 = arith.constant 0.000000e+00 : f32
    %230 = vector.broadcast %cst_111 : f32 to vector<1x32xf32>
    %231 = vector.extract_strided_slice %229 {offsets = [0, 0], sizes = [7, 32], strides = [1, 1]} : vector<8x32xf32> to vector<7x32xf32>
    %232 = tpu.concatenate %230, %231 in 0 : vector<1x32xf32>, vector<7x32xf32> -> vector<8x32xf32>
    %233 = vector.extract_strided_slice %229 {offsets = [1, 0], sizes = [7, 32], strides = [1, 1]} : vector<8x32xf32> to vector<7x32xf32>
    %234 = tpu.concatenate %233, %230 in 0 : vector<7x32xf32>, vector<1x32xf32> -> vector<8x32xf32>
    %235 = tpu.concatenate %232, %229, %234 in 1 : vector<8x32xf32>, vector<8x32xf32>, vector<8x32xf32> -> vector<8x96xf32>
    %c0_112 = arith.constant 0 : index
    %c0_113 = arith.constant 0 : index
    %236 = vector.load %arg27[%c0_112, %c0_113] : memref<96x32xf32, #tpu.memory_space<vmem>>, vector<96x32xf32>
    %cst_114 = arith.constant dense<0.000000e+00> : vector<8x32xf32>
    %237 = tpu.matmul %235, %236, %cst_114 {dimension_numbers = #tpu.dot_dimension_numbers<[1], [0], [0], [1], [0, 0, 1, 1], [], []>} : vector<8x96xf32>, vector<96x32xf32>, vector<8x32xf32> -> vector<8x32xf32>
    %c0_115 = arith.constant 0 : index
    %c0_116 = arith.constant 0 : index
    %238 = vector.load %arg28[%c0_115, %c0_116] : memref<1x32xf32, #tpu.memory_space<vmem>>, vector<1x32xf32>
    %239 = vector.broadcast %238 : vector<1x32xf32> to vector<8x32xf32>
    %240 = arith.addf %237, %239 : vector<8x32xf32>
    %cst_117 = arith.constant 0.000000e+00 : f32
    %241 = vector.broadcast %cst_117 : f32 to vector<8x32xf32>
    %242 = arith.maximumf %240, %241 : vector<8x32xf32>
    %cst_118 = arith.constant dense<0.000000e+00> : vector<8xf32>
    %243 = vector.multi_reduction <add>, %242, %cst_118 [1] : vector<8x32xf32> to vector<8xf32>
    %244 = vector.shape_cast %243 : vector<8xf32> to vector<8x1xf32>
    %cst_119 = arith.constant 3.200000e+01 : f32
    %245 = vector.broadcast %cst_119 : f32 to vector<8x1xf32>
    %246 = arith.divf %244, %245 : vector<8x1xf32>
    %247 = arith.mulf %242, %242 : vector<8x32xf32>
    %cst_120 = arith.constant dense<0.000000e+00> : vector<8xf32>
    %248 = vector.multi_reduction <add>, %247, %cst_120 [1] : vector<8x32xf32> to vector<8xf32>
    %249 = vector.shape_cast %248 : vector<8xf32> to vector<8x1xf32>
    %cst_121 = arith.constant 3.200000e+01 : f32
    %250 = vector.broadcast %cst_121 : f32 to vector<8x1xf32>
    %251 = arith.divf %249, %250 : vector<8x1xf32>
    %252 = arith.mulf %246, %246 : vector<8x1xf32>
    %253 = arith.subf %251, %252 : vector<8x1xf32>
    %254 = vector.broadcast %246 : vector<8x1xf32> to vector<8x32xf32>
    %255 = arith.subf %242, %254 : vector<8x32xf32>
    %cst_122 = arith.constant 9.99999974E-6 : f32
    %256 = vector.broadcast %cst_122 : f32 to vector<8x1xf32>
    %257 = arith.addf %253, %256 : vector<8x1xf32>
    %258 = math.rsqrt %257 : vector<8x1xf32>
    %259 = vector.broadcast %258 : vector<8x1xf32> to vector<8x32xf32>
    %260 = arith.mulf %255, %259 : vector<8x32xf32>
    %c0_123 = arith.constant 0 : index
    %c0_124 = arith.constant 0 : index
    %261 = vector.load %arg29[%c0_123, %c0_124] : memref<1x32xf32, #tpu.memory_space<vmem>>, vector<1x32xf32>
    %262 = vector.broadcast %261 : vector<1x32xf32> to vector<8x32xf32>
    %263 = arith.mulf %260, %262 : vector<8x32xf32>
    %c0_125 = arith.constant 0 : index
    %c0_126 = arith.constant 0 : index
    %264 = vector.load %arg30[%c0_125, %c0_126] : memref<1x32xf32, #tpu.memory_space<vmem>>, vector<1x32xf32>
    %265 = vector.broadcast %264 : vector<1x32xf32> to vector<8x32xf32>
    %266 = arith.addf %263, %265 : vector<8x32xf32>
    %c0_127 = arith.constant 0 : index
    %c0_128 = arith.constant 0 : index
    %267 = vector.load %arg31[%c0_127, %c0_128] : memref<32x1xf32, #tpu.memory_space<vmem>>, vector<32x1xf32>
    %cst_129 = arith.constant dense<0.000000e+00> : vector<8x1xf32>
    %268 = tpu.matmul %266, %267, %cst_129 {dimension_numbers = #tpu.dot_dimension_numbers<[1], [0], [0], [1], [0, 0, 1, 1], [], []>} : vector<8x32xf32>, vector<32x1xf32>, vector<8x1xf32> -> vector<8x1xf32>
    %c0_130 = arith.constant 0 : index
    %c0_131 = arith.constant 0 : index
    %269 = vector.load %arg32[%c0_130, %c0_131] : memref<1x1xf32, #tpu.memory_space<vmem>>, vector<1x1xf32>
    %270 = vector.broadcast %269 : vector<1x1xf32> to vector<8x1xf32>
    %271 = arith.addf %268, %270 : vector<8x1xf32>
    %cst_132 = arith.constant 5.000000e-01 : f32
    %272 = vector.broadcast %cst_132 : f32 to vector<8x1xf32>
    %273 = arith.cmpf ogt, %3, %272 : vector<8x1xf32>
    %cst_133 = arith.constant 0.000000e+00 : f32
    %274 = vector.broadcast %cst_133 : f32 to vector<8x1xf32>
    %275 = arith.select %273, %274, %271 : vector<8x1xi1>, vector<8x1xf32>
    %cst_134 = arith.constant 1.000000e+00 : f32
    %276 = vector.broadcast %cst_134 : f32 to vector<8x1xf32>
    %277 = arith.mulf %275, %276 : vector<8x1xf32>
    %c0_135 = arith.constant 0 : index
    %c0_136 = arith.constant 0 : index
    %c0_137 = arith.constant 0 : index
    %278 = vector.load %arg39[%c0_135, %c0_136, %c0_137] : memref<1x8x1xf32, #tpu.memory_space<vmem>>, vector<1x8x1xf32>
    %279 = vector.shape_cast %278 : vector<1x8x1xf32> to vector<8x1xf32>
    %280 = vector.shape_cast %277 : vector<8x1xf32> to vector<1x8x1xf32>
    tpu.vector_store %arg39[%c0_135, %c0_136, %c0_137], %280 {strides = array<i32>} : memref<1x8x1xf32, #tpu.memory_space<vmem>>, vector<1x8x1xf32>,
    %c0_138 = arith.constant 0 : index
    %c0_139 = arith.constant 0 : index
    %281 = vector.load %arg35[%c0_138, %c0_139] : memref<1x255xf32, #tpu.memory_space<vmem>>, vector<1x255xf32>
    %282 = vector.broadcast %281 : vector<1x255xf32> to vector<8x255xf32>
    %283 = vector.broadcast %277 : vector<8x1xf32> to vector<8x255xf32>
    %284 = arith.cmpf olt, %282, %283 : vector<8x255xf32>
    %285 = arith.extui %284 : vector<8x255xi1> to vector<8x255xi32>
    %cst_140 = arith.constant dense<0> : vector<8xi32>
    %286 = vector.multi_reduction <add>, %285, %cst_140 [1] : vector<8x255xi32> to vector<8xi32>
    %287 = vector.shape_cast %286 : vector<8xi32> to vector<8x1xi32>
    %288 = tpu.iota {dimensions = array<i32: 1>} : vector<8x256xi32>
    %289 = vector.broadcast %287 : vector<8x1xi32> to vector<8x256xi32>
    %290 = arith.cmpi eq, %288, %289 : vector<8x256xi32>
    %291 = arith.extui %290 : vector<8x256xi1> to vector<8x256xi32>
    %292 = arith.sitofp %291 : vector<8x256xi32> to vector<8x256xf32>
    %c0_141 = arith.constant 0 : index
    %c0_142 = arith.constant 0 : index
    %293 = vector.load %arg36[%c0_141, %c0_142] : memref<256x32xf32, #tpu.memory_space<vmem>>, vector<256x32xf32>
    %cst_143 = arith.constant dense<0.000000e+00> : vector<8x32xf32>
    %294 = tpu.matmul %292, %293, %cst_143 {dimension_numbers = #tpu.dot_dimension_numbers<[1], [0], [0], [1], [0, 0, 1, 1], [], []>} : vector<8x256xf32>, vector<256x32xf32>, vector<8x32xf32> -> vector<8x32xf32>
    %295 = arith.addf %192, %294 : vector<8x32xf32>
    %296 = math.exp %86 : vector<8x1xf32>
    %cst_144 = arith.constant 1.000000e+00 : f32
    %297 = vector.broadcast %cst_144 : f32 to vector<8x1xf32>
    %298 = arith.subf %296, %297 : vector<8x1xf32>
    %299 = math.roundeven %298 : vector<8x1xf32>
    %cst_145 = arith.constant 1.000000e+00 : f32
    %300 = vector.broadcast %cst_145 : f32 to vector<8x1xf32>
    %301 = arith.mulf %299, %300 : vector<8x1xf32>
    %cst_146 = arith.constant 0.000000e+00 : f32
    %302 = vector.broadcast %cst_146 : f32 to vector<8x1xf32>
    %303 = arith.maximumf %301, %302 : vector<8x1xf32>
    %c0_147 = arith.constant 0 : index
    %c0_148 = arith.constant 0 : index
    %c0_149 = arith.constant 0 : index
    %304 = vector.load %arg41[%c0_147, %c0_148, %c0_149] : memref<1x8x1xf32, #tpu.memory_space<vmem>>, vector<1x8x1xf32>
    %305 = vector.shape_cast %304 : vector<1x8x1xf32> to vector<8x1xf32>
    %306 = vector.shape_cast %303 : vector<8x1xf32> to vector<1x8x1xf32>
    tpu.vector_store %arg41[%c0_147, %c0_148, %c0_149], %306 {strides = array<i32>} : memref<1x8x1xf32, #tpu.memory_space<vmem>>, vector<1x8x1xf32>,
    %307 = tpu.iota {dimensions = array<i32: 0>} : vector<8x8xi32>
    %308 = tpu.iota {dimensions = array<i32: 1>} : vector<8x8xi32>
    %309 = arith.cmpi eq, %307, %308 : vector<8x8xi32>
    %310 = arith.extui %309 : vector<8x8xi1> to vector<8x8xi32>
    %311 = arith.sitofp %310 : vector<8x8xi32> to vector<8x8xf32>
    %312 = vector.broadcast %303 : vector<8x1xf32> to vector<8x8xf32>
    %313 = arith.mulf %312, %311 : vector<8x8xf32>
    %cst_150 = arith.constant dense<0.000000e+00> : vector<8xf32>
    %314 = vector.multi_reduction <add>, %313, %cst_150 [0] : vector<8x8xf32> to vector<8xf32>
    %315 = vector.shape_cast %314 : vector<8xf32> to vector<1x8xf32>
    %316 = arith.cmpi sle, %307, %308 : vector<8x8xi32>
    %317 = arith.extui %316 : vector<8x8xi1> to vector<8x8xi32>
    %318 = arith.sitofp %317 : vector<8x8xi32> to vector<8x8xf32>
    %cst_151 = arith.constant dense<0.000000e+00> : vector<1x8xf32>
    %319 = tpu.matmul %315, %318, %cst_151 {dimension_numbers = #tpu.dot_dimension_numbers<[1], [0], [0], [1], [0, 0, 1, 1], [], []>} : vector<1x8xf32>, vector<8x8xf32>, vector<1x8xf32> -> vector<1x8xf32>
    %320 = arith.subf %319, %315 : vector<1x8xf32>
    %321 = vector.extract_strided_slice %319 {offsets = [0, 7], sizes = [1, 1], strides = [1, 1]} : vector<1x8xf32> to vector<1x1xf32>
    %c0_152 = arith.constant 0 : index
    %c0_153 = arith.constant 0 : index
    %c0_154 = arith.constant 0 : index
    %322 = vector.load %arg42[%c0_152, %c0_153, %c0_154] : memref<1x1x1xf32, #tpu.memory_space<vmem>>, vector<1x1x1xf32>
    %323 = vector.shape_cast %322 : vector<1x1x1xf32> to vector<1x1xf32>
    %324 = vector.shape_cast %321 : vector<1x1xf32> to vector<1x1x1xf32>
    tpu.vector_store %arg42[%c0_152, %c0_153, %c0_154], %324 {strides = array<i32>} : memref<1x1x1xf32, #tpu.memory_space<vmem>>, vector<1x1x1xf32>,
    %325 = tpu.iota {dimensions = array<i32: 0>} : vector<32x8xi32>
    %326 = arith.sitofp %325 : vector<32x8xi32> to vector<32x8xf32>
    %327 = vector.broadcast %320 : vector<1x8xf32> to vector<32x8xf32>
    %328 = arith.cmpf oge, %326, %327 : vector<32x8xf32>
    %329 = vector.broadcast %319 : vector<1x8xf32> to vector<32x8xf32>
    %330 = arith.cmpf olt, %326, %329 : vector<32x8xf32>
    %331 = arith.andi %328, %330 : vector<32x8xi1>
    %332 = arith.extui %331 : vector<32x8xi1> to vector<32x8xi32>
    %333 = arith.sitofp %332 : vector<32x8xi32> to vector<32x8xf32>
    %cst_155 = arith.constant dense<0.000000e+00> : vector<32x32xf32>
    %334 = tpu.matmul %333, %295, %cst_155 {dimension_numbers = #tpu.dot_dimension_numbers<[1], [0], [0], [1], [0, 0, 1, 1], [], []>} : vector<32x8xf32>, vector<8x32xf32>, vector<32x32xf32> -> vector<32x32xf32>
    %c0_156 = arith.constant 0 : index
    %c0_157 = arith.constant 0 : index
    %c0_158 = arith.constant 0 : index
    %335 = vector.load %arg37[%c0_156, %c0_157, %c0_158] : memref<1x32x32xf32, #tpu.memory_space<vmem>>, vector<1x32x32xf32>
    %336 = vector.shape_cast %335 : vector<1x32x32xf32> to vector<32x32xf32>
    %337 = vector.shape_cast %334 : vector<32x32xf32> to vector<1x32x32xf32>
    tpu.vector_store %arg37[%c0_156, %c0_157, %c0_158], %337 {strides = array<i32>} : memref<1x32x32xf32, #tpu.memory_space<vmem>>, vector<1x32x32xf32>,
    return
  }
  func.func @transform_0(%arg0: i32) -> (i32, i32, i32) {
    %c0_i32 = arith.constant 0 : i32
    %c0_i32_0 = arith.constant 0 : i32
    %c0_i32_1 = arith.constant 0 : i32
    return %arg0, %c0_i32, %c0_i32_0 : i32, i32, i32
  }
  func.func @transform_1(%arg0: i32) -> (i32, i32, i32) {
    %c0_i32 = arith.constant 0 : i32
    %c0_i32_0 = arith.constant 0 : i32
    %c0_i32_1 = arith.constant 0 : i32
    return %arg0, %c0_i32, %c0_i32_0 : i32, i32, i32
  }
  func.func @transform_2(%arg0: i32) -> (i32, i32) {
    %c0_i32 = arith.constant 0 : i32
    %c0_i32_0 = arith.constant 0 : i32
    %c0_i32_1 = arith.constant 0 : i32
    return %c0_i32, %c0_i32_0 : i32, i32
  }
  func.func @transform_3(%arg0: i32) -> (i32, i32) {
    %c0_i32 = arith.constant 0 : i32
    %c0_i32_0 = arith.constant 0 : i32
    %c0_i32_1 = arith.constant 0 : i32
    return %c0_i32, %c0_i32_0 : i32, i32
  }
  func.func @transform_4(%arg0: i32) -> (i32, i32) {
    %c0_i32 = arith.constant 0 : i32
    %c0_i32_0 = arith.constant 0 : i32
    %c0_i32_1 = arith.constant 0 : i32
    return %c0_i32, %c0_i32_0 : i32, i32
  }
  func.func @transform_5(%arg0: i32) -> (i32, i32) {
    %c0_i32 = arith.constant 0 : i32
    %c0_i32_0 = arith.constant 0 : i32
    %c0_i32_1 = arith.constant 0 : i32
    return %c0_i32, %c0_i32_0 : i32, i32
  }
  func.func @transform_6(%arg0: i32) -> (i32, i32) {
    %c0_i32 = arith.constant 0 : i32
    %c0_i32_0 = arith.constant 0 : i32
    %c0_i32_1 = arith.constant 0 : i32
    return %c0_i32, %c0_i32_0 : i32, i32
  }
  func.func @transform_7(%arg0: i32) -> (i32, i32) {
    %c0_i32 = arith.constant 0 : i32
    %c0_i32_0 = arith.constant 0 : i32
    %c0_i32_1 = arith.constant 0 : i32
    return %c0_i32, %c0_i32_0 : i32, i32
  }
  func.func @transform_8(%arg0: i32) -> (i32, i32) {
    %c0_i32 = arith.constant 0 : i32
    %c0_i32_0 = arith.constant 0 : i32
    %c0_i32_1 = arith.constant 0 : i32
    return %c0_i32, %c0_i32_0 : i32, i32
  }
  func.func @transform_9(%arg0: i32) -> (i32, i32) {
    %c0_i32 = arith.constant 0 : i32
    %c0_i32_0 = arith.constant 0 : i32
    %c0_i32_1 = arith.constant 0 : i32
    return %c0_i32, %c0_i32_0 : i32, i32
  }
  func.func @transform_10(%arg0: i32) -> (i32, i32) {
    %c0_i32 = arith.constant 0 : i32
    %c0_i32_0 = arith.constant 0 : i32
    %c0_i32_1 = arith.constant 0 : i32
    return %c0_i32, %c0_i32_0 : i32, i32
  }
  func.func @transform_11(%arg0: i32) -> (i32, i32) {
    %c0_i32 = arith.constant 0 : i32
    %c0_i32_0 = arith.constant 0 : i32
    %c0_i32_1 = arith.constant 0 : i32
    return %c0_i32, %c0_i32_0 : i32, i32
  }
  func.func @transform_12(%arg0: i32) -> (i32, i32) {
    %c0_i32 = arith.constant 0 : i32
    %c0_i32_0 = arith.constant 0 : i32
    %c0_i32_1 = arith.constant 0 : i32
    return %c0_i32, %c0_i32_0 : i32, i32
  }
  func.func @transform_13(%arg0: i32) -> (i32, i32) {
    %c0_i32 = arith.constant 0 : i32
    %c0_i32_0 = arith.constant 0 : i32
    %c0_i32_1 = arith.constant 0 : i32
    return %c0_i32, %c0_i32_0 : i32, i32
  }
  func.func @transform_14(%arg0: i32) -> (i32, i32) {
    %c0_i32 = arith.constant 0 : i32
    %c0_i32_0 = arith.constant 0 : i32
    %c0_i32_1 = arith.constant 0 : i32
    return %c0_i32, %c0_i32_0 : i32, i32
  }
  func.func @transform_15(%arg0: i32) -> (i32, i32) {
    %c0_i32 = arith.constant 0 : i32
    %c0_i32_0 = arith.constant 0 : i32
    %c0_i32_1 = arith.constant 0 : i32
    return %c0_i32, %c0_i32_0 : i32, i32
  }
  func.func @transform_16(%arg0: i32) -> (i32, i32) {
    %c0_i32 = arith.constant 0 : i32
    %c0_i32_0 = arith.constant 0 : i32
    %c0_i32_1 = arith.constant 0 : i32
    return %c0_i32, %c0_i32_0 : i32, i32
  }
  func.func @transform_17(%arg0: i32) -> (i32, i32) {
    %c0_i32 = arith.constant 0 : i32
    %c0_i32_0 = arith.constant 0 : i32
    %c0_i32_1 = arith.constant 0 : i32
    return %c0_i32, %c0_i32_0 : i32, i32
  }
  func.func @transform_18(%arg0: i32) -> (i32, i32) {
    %c0_i32 = arith.constant 0 : i32
    %c0_i32_0 = arith.constant 0 : i32
    %c0_i32_1 = arith.constant 0 : i32
    return %c0_i32, %c0_i32_0 : i32, i32
  }
  func.func @transform_19(%arg0: i32) -> (i32, i32) {
    %c0_i32 = arith.constant 0 : i32
    %c0_i32_0 = arith.constant 0 : i32
    %c0_i32_1 = arith.constant 0 : i32
    return %c0_i32, %c0_i32_0 : i32, i32
  }
  func.func @transform_20(%arg0: i32) -> (i32, i32) {
    %c0_i32 = arith.constant 0 : i32
    %c0_i32_0 = arith.constant 0 : i32
    %c0_i32_1 = arith.constant 0 : i32
    return %c0_i32, %c0_i32_0 : i32, i32
  }
  func.func @transform_21(%arg0: i32) -> (i32, i32) {
    %c0_i32 = arith.constant 0 : i32
    %c0_i32_0 = arith.constant 0 : i32
    %c0_i32_1 = arith.constant 0 : i32
    return %c0_i32, %c0_i32_0 : i32, i32
  }
  func.func @transform_22(%arg0: i32) -> (i32, i32) {
    %c0_i32 = arith.constant 0 : i32
    %c0_i32_0 = arith.constant 0 : i32
    %c0_i32_1 = arith.constant 0 : i32
    return %c0_i32, %c0_i32_0 : i32, i32
  }
  func.func @transform_23(%arg0: i32) -> (i32, i32) {
    %c0_i32 = arith.constant 0 : i32
    %c0_i32_0 = arith.constant 0 : i32
    %c0_i32_1 = arith.constant 0 : i32
    return %c0_i32, %c0_i32_0 : i32, i32
  }
  func.func @transform_24(%arg0: i32) -> (i32, i32) {
    %c0_i32 = arith.constant 0 : i32
    %c0_i32_0 = arith.constant 0 : i32
    %c0_i32_1 = arith.constant 0 : i32
    return %c0_i32, %c0_i32_0 : i32, i32
  }
  func.func @transform_25(%arg0: i32) -> (i32, i32) {
    %c0_i32 = arith.constant 0 : i32
    %c0_i32_0 = arith.constant 0 : i32
    %c0_i32_1 = arith.constant 0 : i32
    return %c0_i32, %c0_i32_0 : i32, i32
  }
  func.func @transform_26(%arg0: i32) -> (i32, i32) {
    %c0_i32 = arith.constant 0 : i32
    %c0_i32_0 = arith.constant 0 : i32
    %c0_i32_1 = arith.constant 0 : i32
    return %c0_i32, %c0_i32_0 : i32, i32
  }
  func.func @transform_27(%arg0: i32) -> (i32, i32) {
    %c0_i32 = arith.constant 0 : i32
    %c0_i32_0 = arith.constant 0 : i32
    %c0_i32_1 = arith.constant 0 : i32
    return %c0_i32, %c0_i32_0 : i32, i32
  }
  func.func @transform_28(%arg0: i32) -> (i32, i32) {
    %c0_i32 = arith.constant 0 : i32
    %c0_i32_0 = arith.constant 0 : i32
    %c0_i32_1 = arith.constant 0 : i32
    return %c0_i32, %c0_i32_0 : i32, i32
  }
  func.func @transform_29(%arg0: i32) -> (i32, i32) {
    %c0_i32 = arith.constant 0 : i32
    %c0_i32_0 = arith.constant 0 : i32
    %c0_i32_1 = arith.constant 0 : i32
    return %c0_i32, %c0_i32_0 : i32, i32
  }
  func.func @transform_30(%arg0: i32) -> (i32, i32) {
    %c0_i32 = arith.constant 0 : i32
    %c0_i32_0 = arith.constant 0 : i32
    %c0_i32_1 = arith.constant 0 : i32
    return %c0_i32, %c0_i32_0 : i32, i32
  }
  func.func @transform_31(%arg0: i32) -> (i32, i32) {
    %c0_i32 = arith.constant 0 : i32
    %c0_i32_0 = arith.constant 0 : i32
    %c0_i32_1 = arith.constant 0 : i32
    return %c0_i32, %c0_i32_0 : i32, i32
  }
  func.func @transform_32(%arg0: i32) -> (i32, i32) {
    %c0_i32 = arith.constant 0 : i32
    %c0_i32_0 = arith.constant 0 : i32
    %c0_i32_1 = arith.constant 0 : i32
    return %c0_i32, %c0_i32_0 : i32, i32
  }
  func.func @transform_33(%arg0: i32) -> (i32, i32) {
    %c0_i32 = arith.constant 0 : i32
    %c0_i32_0 = arith.constant 0 : i32
    %c0_i32_1 = arith.constant 0 : i32
    return %c0_i32, %c0_i32_0 : i32, i32
  }
  func.func @transform_34(%arg0: i32) -> (i32, i32) {
    %c0_i32 = arith.constant 0 : i32
    %c0_i32_0 = arith.constant 0 : i32
    %c0_i32_1 = arith.constant 0 : i32
    return %c0_i32, %c0_i32_0 : i32, i32
  }
  func.func @transform_35(%arg0: i32) -> (i32, i32) {
    %c0_i32 = arith.constant 0 : i32
    %c0_i32_0 = arith.constant 0 : i32
    %c0_i32_1 = arith.constant 0 : i32
    return %c0_i32, %c0_i32_0 : i32, i32
  }
  func.func @transform_36(%arg0: i32) -> (i32, i32, i32) {
    %c0_i32 = arith.constant 0 : i32
    %c0_i32_0 = arith.constant 0 : i32
    %c0_i32_1 = arith.constant 0 : i32
    return %arg0, %c0_i32, %c0_i32_0 : i32, i32, i32
  }
  func.func @transform_37(%arg0: i32) -> (i32, i32, i32) {
    %c0_i32 = arith.constant 0 : i32
    %c0_i32_0 = arith.constant 0 : i32
    %c0_i32_1 = arith.constant 0 : i32
    return %arg0, %c0_i32, %c0_i32_0 : i32, i32, i32
  }
  func.func @transform_38(%arg0: i32) -> (i32, i32, i32) {
    %c0_i32 = arith.constant 0 : i32
    %c0_i32_0 = arith.constant 0 : i32
    %c0_i32_1 = arith.constant 0 : i32
    return %arg0, %c0_i32, %c0_i32_0 : i32, i32, i32
  }
  func.func @transform_39(%arg0: i32) -> (i32, i32, i32) {
    %c0_i32 = arith.constant 0 : i32
    %c0_i32_0 = arith.constant 0 : i32
    %c0_i32_1 = arith.constant 0 : i32
    return %arg0, %c0_i32, %c0_i32_0 : i32, i32, i32
  }
  func.func @transform_40(%arg0: i32) -> (i32, i32, i32) {
    %c0_i32 = arith.constant 0 : i32
    %c0_i32_0 = arith.constant 0 : i32
    %c0_i32_1 = arith.constant 0 : i32
    return %arg0, %c0_i32, %c0_i32_0 : i32, i32, i32
  }
  func.func @transform_41(%arg0: i32) -> (i32, i32, i32) {
    %c0_i32 = arith.constant 0 : i32
    %c0_i32_0 = arith.constant 0 : i32
    %c0_i32_1 = arith.constant 0 : i32
    return %arg0, %c0_i32, %c0_i32_0 : i32, i32, i32
  }
}

</mosaic_0001>

<llo_original>
// kernel: variance_adaptor_forward.1
$region0: #{variance_adaptor_forward.1}
  #allocation0 [shape = 'u32[]', space=smem, size = 0x4, offset = 0x4, fixed_abs, tag = 'smem constant byte address 0x4 - core index']
  #allocation1 [shape = 'u32[144,128]{1,0:T(1,128)}', space=vmem, size = 0x12000, scoped, tag = 'internal scratch']
  #allocation2 [shape = 'f32[1,1]{1,0:T(1,128)S(1)}', space=vmem, size = 0x200, scoped, tag = 'scoped memory for variance_adaptor_forward.1']
  #allocation3 [shape = 'f32[1,1]{1,0:T(1,128)S(1)}', space=vmem, size = 0x200, scoped, tag = 'scoped memory for variance_adaptor_forward.1']
  #allocation4 [shape = 'f32[1,1]{1,0:T(1,128)S(1)}', space=vmem, size = 0x200, scoped, tag = 'scoped memory for variance_adaptor_forward.1']
  %s0 = inlined_call_operand.smem [shape: u32[42], index: -1, kind: input, shape index: {}]
  %s1 = sld [smem:[%s0]]
  %s2 = scalar_lea.smem %s0, 1
  %s3 = sld [smem:[%s2]]
  %s4 = scalar_lea.smem %s0, 2
  %s5 = sld [smem:[%s4]]
  %s6 = scalar_lea.smem %s0, 3
  %s7 = sld [smem:[%s6]]
  %s8 = scalar_lea.smem %s0, 4
  %s9 = sld [smem:[%s8]]
  %s10 = scalar_lea.smem %s0, 5
  %s11 = sld [smem:[%s10]]
  %s12 = scalar_lea.smem %s0, 6
  %s13 = sld [smem:[%s12]]
  %s14 = scalar_lea.smem %s0, 7
  %s15 = sld [smem:[%s14]]
  %s16 = scalar_lea.smem %s0, 8
  %s17 = sld [smem:[%s16]]
  %s18 = scalar_lea.smem %s0, 9
  %s19 = sld [smem:[%s18]]
  %s20 = scalar_lea.smem %s0, 10
  %s21 = sld [smem:[%s20]]
  %s22 = scalar_lea.smem %s0, 11
  %s23 = sld [smem:[%s22]]
  %s24 = scalar_lea.smem %s0, 12
  %s25 = sld [smem:[%s24]]
  %s26 = scalar_lea.smem %s0, 13
  %s27 = sld [smem:[%s26]]
  %s28 = scalar_lea.smem %s0, 14
  %s29 = sld [smem:[%s28]]
  %s30 = scalar_lea.smem %s0, 15
  %s31 = sld [smem:[%s30]]
  %s32 = scalar_lea.smem %s0, 16
  %s33 = sld [smem:[%s32]]
  %s34 = scalar_lea.smem %s0, 17
  %s35 = sld [smem:[%s34]]
  %s36 = scalar_lea.smem %s0, 18
  %s37 = sld [smem:[%s36]]
  %s38 = scalar_lea.smem %s0, 19
  %s39 = sld [smem:[%s38]]
  %s40 = scalar_lea.smem %s0, 20
  %s41 = sld [smem:[%s40]]
  %s42 = scalar_lea.smem %s0, 21
  %s43 = sld [smem:[%s42]]
  %s44 = scalar_lea.smem %s0, 22
  %s45 = sld [smem:[%s44]]
  %s46 = scalar_lea.smem %s0, 23
  %s47 = sld [smem:[%s46]]
  %s48 = scalar_lea.smem %s0, 24
  %s49 = sld [smem:[%s48]]
  %s50 = scalar_lea.smem %s0, 25
  %s51 = sld [smem:[%s50]]
  %s52 = scalar_lea.smem %s0, 26
  %s53 = sld [smem:[%s52]]
  %s54 = scalar_lea.smem %s0, 27
  %s55 = sld [smem:[%s54]]
  %s56 = scalar_lea.smem %s0, 28
  %s57 = sld [smem:[%s56]]
  %s58 = scalar_lea.smem %s0, 29
  %s59 = sld [smem:[%s58]]
  %s60 = scalar_lea.smem %s0, 30
  %s61 = sld [smem:[%s60]]
  %s62 = scalar_lea.smem %s0, 31
  %s63 = sld [smem:[%s62]]
  %s64 = scalar_lea.smem %s0, 32
  %s65 = sld [smem:[%s64]]
  %s66 = scalar_lea.smem %s0, 33
  %s67 = sld [smem:[%s66]]
  %s68 = scalar_lea.smem %s0, 34
  %s69 = sld [smem:[%s68]]
  %s70 = scalar_lea.smem %s0, 35
  %s71 = sld [smem:[%s70]]
  %s72 = scalar_lea.smem %s0, 36
  %s73 = sld [smem:[%s72]]
  %s74 = scalar_lea.smem %s0, 37
  %s75 = sld [smem:[%s74]]
  %s76 = scalar_lea.smem %s0, 38
  %s77 = sld [smem:[%s76]]
  %s78 = scalar_lea.smem %s0, 39
  %s79 = sld [smem:[%s78]]
  %s80 = scalar_lea.smem %s0, 40
  %s81 = sld [smem:[%s80]]
  %s82 = scalar_lea.smem %s0, 41
  %s83 = sld [smem:[%s82]]
  %84 = xla_tuple %s73, %s75, %s77, %s79, %s81, %s83
  %s85 = sld [smem:[#allocation0]]
  $region217: #{variance_adaptor_forward.1} parent=0
    _
  %s87 = ssub.s32 1, %s85
  %s88 = scalar_select 0, %s87, %s85
  %v89 = vstv %s23
  %90 = vst [vmem:[#allocation2] sm:$0x1] %v89
  %v91 = vstv %s43
  %92 = vst [vmem:[#allocation3] sm:$0x1] %v91
  %v93 = vstv %s63
  %94 = vst [vmem:[#allocation4] sm:$0x1] %v93
  $region1: #{variance_adaptor_forward.1} parent=0
    #allocation5 [shape = 'u8[32768]{0}', space=vmem, size = 0x8000, scoped, tag = 'output window, operand 0']
    #allocation6 [shape = 's32[2]{0}', space=sflag, size = 0x8, scoped, tag = 'scoped memory for variance_adaptor_forward.1']
    %95 = vsyncpa [#allocation6], 0
    %s96 = scalar_lea.sflag [#allocation6], 1
    %97 = vsyncpa %s96, 0
    loop: start=0, step=1, limit=4
    $region2: #{variance_adaptor_forward.1} parent=1 // loop_pre_header
      _
    $region3: #{variance_adaptor_forward.1} parent=1 // loop_header
      %s99 = sphi 0, %s103
      %p100 = scmp.ge.s32.totalorder %s99, 4
      %s109 = sphi 0, %s111
      %s112 = sphi 0, %s109
      %s113 = sphi 0, %s112
      %s129 = sphi 0, %s113
      %s135 = sphi 0, %s137
      %s138 = sphi 0, %s135
      %s139 = sphi 0, %s138
      %s155 = sphi 0, %s139
      %s159 = sphi 0, %s159
      %s161 = sphi 0, %s159
      %s162 = sphi 0, %s161
      %s176 = sphi 0, %s162
      %s180 = sphi 0, %s180
      %s182 = sphi 0, %s180
      %s183 = sphi 0, %s182
      %s197 = sphi 0, %s183
      %s201 = sphi 0, %s201
      %s203 = sphi 0, %s201
      %s204 = sphi 0, %s203
      %s218 = sphi 0, %s204
      %s222 = sphi 0, %s222
      %s224 = sphi 0, %s222
      %s225 = sphi 0, %s224
      %s239 = sphi 0, %s225
      %s243 = sphi 0, %s243
      %s245 = sphi 0, %s243
      %s246 = sphi 0, %s245
      %s260 = sphi 0, %s246
      %s264 = sphi 0, %s264
      %s266 = sphi 0, %s264
      %s267 = sphi 0, %s266
      %s281 = sphi 0, %s267
      %s285 = sphi 0, %s285
      %s287 = sphi 0, %s285
      %s288 = sphi 0, %s287
      %s302 = sphi 0, %s288
      %s306 = sphi 0, %s306
      %s308 = sphi 0, %s306
      %s309 = sphi 0, %s308
      %s323 = sphi 0, %s309
      %s327 = sphi 0, %s327
      %s329 = sphi 0, %s327
      %s330 = sphi 0, %s329
      %s344 = sphi 0, %s330
      %s348 = sphi 0, %s348
      %s350 = sphi 0, %s348
      %s351 = sphi 0, %s350
      %s365 = sphi 0, %s351
      %s369 = sphi 0, %s369
      %s371 = sphi 0, %s369
      %s372 = sphi 0, %s371
      %s386 = sphi 0, %s372
      %s390 = sphi 0, %s390
      %s392 = sphi 0, %s390
      %s393 = sphi 0, %s392
      %s407 = sphi 0, %s393
      %s411 = sphi 0, %s411
      %s413 = sphi 0, %s411
      %s414 = sphi 0, %s413
      %s428 = sphi 0, %s414
      %s432 = sphi 0, %s432
      %s434 = sphi 0, %s432
      %s435 = sphi 0, %s434
      %s449 = sphi 0, %s435
      %s453 = sphi 0, %s453
      %s455 = sphi 0, %s453
      %s456 = sphi 0, %s455
      %s470 = sphi 0, %s456
      %s474 = sphi 0, %s474
      %s476 = sphi 0, %s474
      %s477 = sphi 0, %s476
      %s491 = sphi 0, %s477
      %s495 = sphi 0, %s495
      %s497 = sphi 0, %s495
      %s498 = sphi 0, %s497
      %s512 = sphi 0, %s498
      %s516 = sphi 0, %s516
      %s518 = sphi 0, %s516
      %s519 = sphi 0, %s518
      %s533 = sphi 0, %s519
      %s537 = sphi 0, %s537
      %s539 = sphi 0, %s537
      %s540 = sphi 0, %s539
      %s554 = sphi 0, %s540
      %s558 = sphi 0, %s558
      %s560 = sphi 0, %s558
      %s561 = sphi 0, %s560
      %s575 = sphi 0, %s561
      %s579 = sphi 0, %s579
      %s581 = sphi 0, %s579
      %s582 = sphi 0, %s581
      %s596 = sphi 0, %s582
      %s600 = sphi 0, %s600
      %s602 = sphi 0, %s600
      %s603 = sphi 0, %s602
      %s617 = sphi 0, %s603
      %s621 = sphi 0, %s621
      %s623 = sphi 0, %s621
      %s624 = sphi 0, %s623
      %s638 = sphi 0, %s624
      %s642 = sphi 0, %s642
      %s644 = sphi 0, %s642
      %s645 = sphi 0, %s644
      %s659 = sphi 0, %s645
      %s663 = sphi 0, %s663
      %s665 = sphi 0, %s663
      %s666 = sphi 0, %s665
      %s680 = sphi 0, %s666
      %s684 = sphi 0, %s684
      %s686 = sphi 0, %s684
      %s687 = sphi 0, %s686
      %s701 = sphi 0, %s687
      %s705 = sphi 0, %s705
      %s707 = sphi 0, %s705
      %s708 = sphi 0, %s707
      %s722 = sphi 0, %s708
      %s726 = sphi 0, %s726
      %s728 = sphi 0, %s726
      %s729 = sphi 0, %s728
      %s743 = sphi 0, %s729
      %s747 = sphi 0, %s747
      %s749 = sphi 0, %s747
      %s750 = sphi 0, %s749
      %s764 = sphi 0, %s750
      %s768 = sphi 0, %s768
      %s770 = sphi 0, %s768
      %s771 = sphi 0, %s770
      %s785 = sphi 0, %s771
      %s789 = sphi 0, %s789
      %s791 = sphi 0, %s789
      %s792 = sphi 0, %s791
      %s806 = sphi 0, %s792
      %s810 = sphi 0, %s810
      %s812 = sphi 0, %s810
      %s813 = sphi 0, %s812
      %s827 = sphi 0, %s813
      %s831 = sphi 0, %s831
      %s833 = sphi 0, %s831
      %s834 = sphi 0, %s833
      %s848 = sphi 0, %s834
      %s852 = sphi 0, %s852
      %s854 = sphi 0, %s852
      %s855 = sphi 0, %s854
      %s869 = sphi 0, %s855
      %s875 = sphi 0, %s877
      %s878 = sphi 0, %s875
      %s879 = sphi 0, %s878
      %s895 = sphi 0, %s879
      %s901 = sphi 0, %s903
      %s904 = sphi 0, %s901
      %s905 = sphi 0, %s904
      %s921 = sphi 0, %s905
      %s927 = sphi 0, %s929
      %s930 = sphi 0, %s927
      %s931 = sphi 0, %s930
      %s947 = sphi 0, %s931
      %s953 = sphi 0, %s955
      %s956 = sphi 0, %s953
      %s957 = sphi 0, %s956
      %s973 = sphi 0, %s957
      %s979 = sphi 0, %s981
      %s982 = sphi 0, %s979
      %s983 = sphi 0, %s982
      %s999 = sphi 0, %s983
      %s1005 = sphi 0, %s1007
      %s1008 = sphi 0, %s1005
      %s1009 = sphi 0, %s1008
      %s1025 = sphi 0, %s1009
    $region4: #{variance_adaptor_forward.1} parent=1 // loop_header_branch
      %102 = sbr.rel (%p100) target = $region8
    $region5: #{variance_adaptor_forward.1} parent=1 // loop_body
      %s104 = ssub.s32 %s99, 1
      %s105 = ssub.s32 %s99, 2
      %s106 = sadd.s32 %s99, 1
      %s107 = ssub.s32 %s99, %s106
      %p108 = scmp.eq.s32.totalorder %s107, 0
      %s110 = sadd.s32 %s109, 1
      %s111 = scalar_select %p108, %s109, %s110
      %p114 = pneg %p108
      %p115 = scmp.eq.s32.totalorder %s99, 1
      %p116 = por %p114, %p115
      %p117 = scmp.ne.s32.totalorder %s109, %s112
      %p118 = scmp.eq.s32.totalorder %s99, 0
      %p119 = por %p117, %p118
      %p120 = scmp.ne.s32.totalorder %s109, %s112
      %p121 = scmp.eq.s32.totalorder %s104, 1
      %p122 = por %p120, %p121
      %p123 = scmp.ne.s32.totalorder %s112, %s113
      %p124 = scmp.eq.s32.totalorder %s104, 0
      %p125 = por %p123, %p124
      %p126 = scmp.ne.s32.totalorder %s112, %s113
      %p127 = scmp.eq.s32.totalorder %s105, 1
      %p128 = por %p126, %p127
      %p130 = scmp.ne.s32.totalorder %s113, %s129
      %p131 = scmp.eq.s32.totalorder %s105, 0
      %p132 = por %p130, %p131
      %s133 = ssub.s32 %s99, %s106
      %p134 = scmp.eq.s32.totalorder %s133, 0
      %s136 = sadd.s32 %s135, 1
      %s137 = scalar_select %p134, %s135, %s136
      %p140 = pneg %p134
      %p141 = scmp.eq.s32.totalorder %s99, 1
      %p142 = por %p140, %p141
      %p143 = scmp.ne.s32.totalorder %s135, %s138
      %p144 = scmp.eq.s32.totalorder %s99, 0
      %p145 = por %p143, %p144
      %p146 = scmp.ne.s32.totalorder %s135, %s138
      %p147 = scmp.eq.s32.totalorder %s104, 1
      %p148 = por %p146, %p147
      %p149 = scmp.ne.s32.totalorder %s138, %s139
      %p150 = scmp.eq.s32.totalorder %s104, 0
      %p151 = por %p149, %p150
      %p152 = scmp.ne.s32.totalorder %s138, %s139
      %p153 = scmp.eq.s32.totalorder %s105, 1
      %p154 = por %p152, %p153
      %p156 = scmp.ne.s32.totalorder %s139, %s155
      %p157 = scmp.eq.s32.totalorder %s105, 0
      %p158 = por %p156, %p157
      %s160 = sadd.s32 %s159, 1
      %p163 = scmp.eq.s32.totalorder %s99, 1
      %p164 = scmp.ne.s32.totalorder %s159, %s161
      %p165 = scmp.eq.s32.totalorder %s99, 0
      %p166 = por %p164, %p165
      %p167 = scmp.ne.s32.totalorder %s159, %s161
      %p168 = scmp.eq.s32.totalorder %s104, 1
      %p169 = por %p167, %p168
      %p170 = scmp.ne.s32.totalorder %s161, %s162
      %p171 = scmp.eq.s32.totalorder %s104, 0
      %p172 = por %p170, %p171
      %p173 = scmp.ne.s32.totalorder %s161, %s162
      %p174 = scmp.eq.s32.totalorder %s105, 1
      %p175 = por %p173, %p174
      %p177 = scmp.ne.s32.totalorder %s162, %s176
      %p178 = scmp.eq.s32.totalorder %s105, 0
      %p179 = por %p177, %p178
      %s181 = sadd.s32 %s180, 1
      %p184 = scmp.eq.s32.totalorder %s99, 1
      %p185 = scmp.ne.s32.totalorder %s180, %s182
      %p186 = scmp.eq.s32.totalorder %s99, 0
      %p187 = por %p185, %p186
      %p188 = scmp.ne.s32.totalorder %s180, %s182
      %p189 = scmp.eq.s32.totalorder %s104, 1
      %p190 = por %p188, %p189
      %p191 = scmp.ne.s32.totalorder %s182, %s183
      %p192 = scmp.eq.s32.totalorder %s104, 0
      %p193 = por %p191, %p192
      %p194 = scmp.ne.s32.totalorder %s182, %s183
      %p195 = scmp.eq.s32.totalorder %s105, 1
      %p196 = por %p194, %p195
      %p198 = scmp.ne.s32.totalorder %s183, %s197
      %p199 = scmp.eq.s32.totalorder %s105, 0
      %p200 = por %p198, %p199
      %s202 = sadd.s32 %s201, 1
      %p205 = scmp.eq.s32.totalorder %s99, 1
      %p206 = scmp.ne.s32.totalorder %s201, %s203
      %p207 = scmp.eq.s32.totalorder %s99, 0
      %p208 = por %p206, %p207
      %p209 = scmp.ne.s32.totalorder %s201, %s203
      %p210 = scmp.eq.s32.totalorder %s104, 1
      %p211 = por %p209, %p210
      %p212 = scmp.ne.s32.totalorder %s203, %s204
      %p213 = scmp.eq.s32.totalorder %s104, 0
      %p214 = por %p212, %p213
      %p215 = scmp.ne.s32.totalorder %s203, %s204
      %p216 = scmp.eq.s32.totalorder %s105, 1
      %p217 = por %p215, %p216
      %p219 = scmp.ne.s32.totalorder %s204, %s218
      %p220 = scmp.eq.s32.totalorder %s105, 0
      %p221 = por %p219, %p220
      %s223 = sadd.s32 %s222, 1
      %p226 = scmp.eq.s32.totalorder %s99, 1
      %p227 = scmp.ne.s32.totalorder %s222, %s224
      %p228 = scmp.eq.s32.totalorder %s99, 0
      %p229 = por %p227, %p228
      %p230 = scmp.ne.s32.totalorder %s222, %s224
      %p231 = scmp.eq.s32.totalorder %s104, 1
      %p232 = por %p230, %p231
      %p233 = scmp.ne.s32.totalorder %s224, %s225
      %p234 = scmp.eq.s32.totalorder %s104, 0
      %p235 = por %p233, %p234
      %p236 = scmp.ne.s32.totalorder %s224, %s225
      %p237 = scmp.eq.s32.totalorder %s105, 1
      %p238 = por %p236, %p237
      %p240 = scmp.ne.s32.totalorder %s225, %s239
      %p241 = scmp.eq.s32.totalorder %s105, 0
      %p242 = por %p240, %p241
      %s244 = sadd.s32 %s243, 1
      %p247 = scmp.eq.s32.totalorder %s99, 1
      %p248 = scmp.ne.s32.totalorder %s243, %s245
      %p249 = scmp.eq.s32.totalorder %s99, 0
      %p250 = por %p248, %p249
      %p251 = scmp.ne.s32.totalorder %s243, %s245
      %p252 = scmp.eq.s32.totalorder %s104, 1
      %p253 = por %p251, %p252
      %p254 = scmp.ne.s32.totalorder %s245, %s246
      %p255 = scmp.eq.s32.totalorder %s104, 0
      %p256 = por %p254, %p255
      %p257 = scmp.ne.s32.totalorder %s245, %s246
      %p258 = scmp.eq.s32.totalorder %s105, 1
      %p259 = por %p257, %p258
      %p261 = scmp.ne.s32.totalorder %s246, %s260
      %p262 = scmp.eq.s32.totalorder %s105, 0
      %p263 = por %p261, %p262
      %s265 = sadd.s32 %s264, 1
      %p268 = scmp.eq.s32.totalorder %s99, 1
      %p269 = scmp.ne.s32.totalorder %s264, %s266
      %p270 = scmp.eq.s32.totalorder %s99, 0
      %p271 = por %p269, %p270
      %p272 = scmp.ne.s32.totalorder %s264, %s266
      %p273 = scmp.eq.s32.totalorder %s104, 1
      %p274 = por %p272, %p273
      %p275 = scmp.ne.s32.totalorder %s266, %s267
      %p276 = scmp.eq.s32.totalorder %s104, 0
      %p277 = por %p275, %p276
      %p278 = scmp.ne.s32.totalorder %s266, %s267
      %p279 = scmp.eq.s32.totalorder %s105, 1
      %p280 = por %p278, %p279
      %p282 = scmp.ne.s32.totalorder %s267, %s281
      %p283 = scmp.eq.s32.totalorder %s105, 0
      %p284 = por %p282, %p283
      %s286 = sadd.s32 %s285, 1
      %p289 = scmp.eq.s32.totalorder %s99, 1
      %p290 = scmp.ne.s32.totalorder %s285, %s287
      %p291 = scmp.eq.s32.totalorder %s99, 0
      %p292 = por %p290, %p291
      %p293 = scmp.ne.s32.totalorder %s285, %s287
      %p294 = scmp.eq.s32.totalorder %s104, 1
      %p295 = por %p293, %p294
      %p296 = scmp.ne.s32.totalorder %s287, %s288
      %p297 = scmp.eq.s32.totalorder %s104, 0
      %p298 = por %p296, %p297
      %p299 = scmp.ne.s32.totalorder %s287, %s288
      %p300 = scmp.eq.s32.totalorder %s105, 1
      %p301 = por %p299, %p300
      %p303 = scmp.ne.s32.totalorder %s288, %s302
      %p304 = scmp.eq.s32.totalorder %s105, 0
      %p305 = por %p303, %p304
      %s307 = sadd.s32 %s306, 1
      %p310 = scmp.eq.s32.totalorder %s99, 1
      %p311 = scmp.ne.s32.totalorder %s306, %s308
      %p312 = scmp.eq.s32.totalorder %s99, 0
      %p313 = por %p311, %p312
      %p314 = scmp.ne.s32.totalorder %s306, %s308
      %p315 = scmp.eq.s32.totalorder %s104, 1
      %p316 = por %p314, %p315
      %p317 = scmp.ne.s32.totalorder %s308, %s309
      %p318 = scmp.eq.s32.totalorder %s104, 0
      %p319 = por %p317, %p318
      %p320 = scmp.ne.s32.totalorder %s308, %s309
      %p321 = scmp.eq.s32.totalorder %s105, 1
      %p322 = por %p320, %p321
      %p324 = scmp.ne.s32.totalorder %s309, %s323
      %p325 = scmp.eq.s32.totalorder %s105, 0
      %p326 = por %p324, %p325
      %s328 = sadd.s32 %s327, 1
      %p331 = scmp.eq.s32.totalorder %s99, 1
      %p332 = scmp.ne.s32.totalorder %s327, %s329
      %p333 = scmp.eq.s32.totalorder %s99, 0
      %p334 = por %p332, %p333
      %p335 = scmp.ne.s32.totalorder %s327, %s329
      %p336 = scmp.eq.s32.totalorder %s104, 1
      %p337 = por %p335, %p336
      %p338 = scmp.ne.s32.totalorder %s329, %s330
      %p339 = scmp.eq.s32.totalorder %s104, 0
      %p340 = por %p338, %p339
      %p341 = scmp.ne.s32.totalorder %s329, %s330
      %p342 = scmp.eq.s32.totalorder %s105, 1
      %p343 = por %p341, %p342
      %p345 = scmp.ne.s32.totalorder %s330, %s344
      %p346 = scmp.eq.s32.totalorder %s105, 0
      %p347 = por %p345, %p346
      %s349 = sadd.s32 %s348, 1
      %p352 = scmp.eq.s32.totalorder %s99, 1
      %p353 = scmp.ne.s32.totalorder %s348, %s350
      %p354 = scmp.eq.s32.totalorder %s99, 0
      %p355 = por %p353, %p354
      %p356 = scmp.ne.s32.totalorder %s348, %s350
      %p357 = scmp.eq.s32.totalorder %s104, 1
      %p358 = por %p356, %p357
      %p359 = scmp.ne.s32.totalorder %s350, %s351
      %p360 = scmp.eq.s32.totalorder %s104, 0
      %p361 = por %p359, %p360
      %p362 = scmp.ne.s32.totalorder %s350, %s351
      %p363 = scmp.eq.s32.totalorder %s105, 1
      %p364 = por %p362, %p363
      %p366 = scmp.ne.s32.totalorder %s351, %s365
      %p367 = scmp.eq.s32.totalorder %s105, 0
      %p368 = por %p366, %p367
      %s370 = sadd.s32 %s369, 1
      %p373 = scmp.eq.s32.totalorder %s99, 1
      %p374 = scmp.ne.s32.totalorder %s369, %s371
      %p375 = scmp.eq.s32.totalorder %s99, 0
      %p376 = por %p374, %p375
      %p377 = scmp.ne.s32.totalorder %s369, %s371
      %p378 = scmp.eq.s32.totalorder %s104, 1
      %p379 = por %p377, %p378
      %p380 = scmp.ne.s32.totalorder %s371, %s372
      %p381 = scmp.eq.s32.totalorder %s104, 0
      %p382 = por %p380, %p381
      %p383 = scmp.ne.s32.totalorder %s371, %s372
      %p384 = scmp.eq.s32.totalorder %s105, 1
      %p385 = por %p383, %p384
      %p387 = scmp.ne.s32.totalorder %s372, %s386
      %p388 = scmp.eq.s32.totalorder %s105, 0
      %p389 = por %p387, %p388
      %s391 = sadd.s32 %s390, 1
      %p394 = scmp.eq.s32.totalorder %s99, 1
      %p395 = scmp.ne.s32.totalorder %s390, %s392
      %p396 = scmp.eq.s32.totalorder %s99, 0
      %p397 = por %p395, %p396
      %p398 = scmp.ne.s32.totalorder %s390, %s392
      %p399 = scmp.eq.s32.totalorder %s104, 1
      %p400 = por %p398, %p399
      %p401 = scmp.ne.s32.totalorder %s392, %s393
      %p402 = scmp.eq.s32.totalorder %s104, 0
      %p403 = por %p401, %p402
      %p404 = scmp.ne.s32.totalorder %s392, %s393
      %p405 = scmp.eq.s32.totalorder %s105, 1
      %p406 = por %p404, %p405
      %p408 = scmp.ne.s32.totalorder %s393, %s407
      %p409 = scmp.eq.s32.totalorder %s105, 0
      %p410 = por %p408, %p409
      %s412 = sadd.s32 %s411, 1
      %p415 = scmp.eq.s32.totalorder %s99, 1
      %p416 = scmp.ne.s32.totalorder %s411, %s413
      %p417 = scmp.eq.s32.totalorder %s99, 0
      %p418 = por %p416, %p417
      %p419 = scmp.ne.s32.totalorder %s411, %s413
      %p420 = scmp.eq.s32.totalorder %s104, 1
      %p421 = por %p419, %p420
      %p422 = scmp.ne.s32.totalorder %s413, %s414
      %p423 = scmp.eq.s32.totalorder %s104, 0
      %p424 = por %p422, %p423
      %p425 = scmp.ne.s32.totalorder %s413, %s414
      %p426 = scmp.eq.s32.totalorder %s105, 1
      %p427 = por %p425, %p426
      %p429 = scmp.ne.s32.totalorder %s414, %s428
      %p430 = scmp.eq.s32.totalorder %s105, 0
      %p431 = por %p429, %p430
      %s433 = sadd.s32 %s432, 1
      %p436 = scmp.eq.s32.totalorder %s99, 1
      %p437 = scmp.ne.s32.totalorder %s432, %s434
      %p438 = scmp.eq.s32.totalorder %s99, 0
      %p439 = por %p437, %p438
      %p440 = scmp.ne.s32.totalorder %s432, %s434
      %p441 = scmp.eq.s32.totalorder %s104, 1
      %p442 = por %p440, %p441
      %p443 = scmp.ne.s32.totalorder %s434, %s435
      %p444 = scmp.eq.s32.totalorder %s104, 0
      %p445 = por %p443, %p444
      %p446 = scmp.ne.s32.totalorder %s434, %s435
      %p447 = scmp.eq.s32.totalorder %s105, 1
      %p448 = por %p446, %p447
      %p450 = scmp.ne.s32.totalorder %s435, %s449
      %p451 = scmp.eq.s32.totalorder %s105, 0
      %p452 = por %p450, %p451
      %s454 = sadd.s32 %s453, 1
      %p457 = scmp.eq.s32.totalorder %s99, 1
      %p458 = scmp.ne.s32.totalorder %s453, %s455
      %p459 = scmp.eq.s32.totalorder %s99, 0
      %p460 = por %p458, %p459
      %p461 = scmp.ne.s32.totalorder %s453, %s455
      %p462 = scmp.eq.s32.totalorder %s104, 1
      %p463 = por %p461, %p462
      %p464 = scmp.ne.s32.totalorder %s455, %s456
      %p465 = scmp.eq.s32.totalorder %s104, 0
      %p466 = por %p464, %p465
      %p467 = scmp.ne.s32.totalorder %s455, %s456
      %p468 = scmp.eq.s32.totalorder %s105, 1
      %p469 = por %p467, %p468
      %p471 = scmp.ne.s32.totalorder %s456, %s470
      %p472 = scmp.eq.s32.totalorder %s105, 0
      %p473 = por %p471, %p472
      %s475 = sadd.s32 %s474, 1
      %p478 = scmp.eq.s32.totalorder %s99, 1
      %p479 = scmp.ne.s32.totalorder %s474, %s476
      %p480 = scmp.eq.s32.totalorder %s99, 0
      %p481 = por %p479, %p480
      %p482 = scmp.ne.s32.totalorder %s474, %s476
      %p483 = scmp.eq.s32.totalorder %s104, 1
      %p484 = por %p482, %p483
      %p485 = scmp.ne.s32.totalorder %s476, %s477
      %p486 = scmp.eq.s32.totalorder %s104, 0
      %p487 = por %p485, %p486
      %p488 = scmp.ne.s32.totalorder %s476, %s477
      %p489 = scmp.eq.s32.totalorder %s105, 1
      %p490 = por %p488, %p489
      %p492 = scmp.ne.s32.totalorder %s477, %s491
      %p493 = scmp.eq.s32.totalorder %s105, 0
      %p494 = por %p492, %p493
      %s496 = sadd.s32 %s495, 1
      %p499 = scmp.eq.s32.totalorder %s99, 1
      %p500 = scmp.ne.s32.totalorder %s495, %s497
      %p501 = scmp.eq.s32.totalorder %s99, 0
      %p502 = por %p500, %p501
      %p503 = scmp.ne.s32.totalorder %s495, %s497
      %p504 = scmp.eq.s32.totalorder %s104, 1
      %p505 = por %p503, %p504
      %p506 = scmp.ne.s32.totalorder %s497, %s498
      %p507 = scmp.eq.s32.totalorder %s104, 0
      %p508 = por %p506, %p507
      %p509 = scmp.ne.s32.totalorder %s497, %s498
      %p510 = scmp.eq.s32.totalorder %s105, 1
      %p511 = por %p509, %p510
      %p513 = scmp.ne.s32.totalorder %s498, %s512
      %p514 = scmp.eq.s32.totalorder %s105, 0
      %p515 = por %p513, %p514
      %s517 = sadd.s32 %s516, 1
      %p520 = scmp.eq.s32.totalorder %s99, 1
      %p521 = scmp.ne.s32.totalorder %s516, %s518
      %p522 = scmp.eq.s32.totalorder %s99, 0
      %p523 = por %p521, %p522
      %p524 = scmp.ne.s32.totalorder %s516, %s518
      %p525 = scmp.eq.s32.totalorder %s104, 1
      %p526 = por %p524, %p525
      %p527 = scmp.ne.s32.totalorder %s518, %s519
      %p528 = scmp.eq.s32.totalorder %s104, 0
      %p529 = por %p527, %p528
      %p530 = scmp.ne.s32.totalorder %s518, %s519
      %p531 = scmp.eq.s32.totalorder %s105, 1
      %p532 = por %p530, %p531
      %p534 = scmp.ne.s32.totalorder %s519, %s533
      %p535 = scmp.eq.s32.totalorder %s105, 0
      %p536 = por %p534, %p535
      %s538 = sadd.s32 %s537, 1
      %p541 = scmp.eq.s32.totalorder %s99, 1
      %p542 = scmp.ne.s32.totalorder %s537, %s539
      %p543 = scmp.eq.s32.totalorder %s99, 0
      %p544 = por %p542, %p543
      %p545 = scmp.ne.s32.totalorder %s537, %s539
      %p546 = scmp.eq.s32.totalorder %s104, 1
      %p547 = por %p545, %p546
      %p548 = scmp.ne.s32.totalorder %s539, %s540
      %p549 = scmp.eq.s32.totalorder %s104, 0
      %p550 = por %p548, %p549
      %p551 = scmp.ne.s32.totalorder %s539, %s540
      %p552 = scmp.eq.s32.totalorder %s105, 1
      %p553 = por %p551, %p552
      %p555 = scmp.ne.s32.totalorder %s540, %s554
      %p556 = scmp.eq.s32.totalorder %s105, 0
      %p557 = por %p555, %p556
      %s559 = sadd.s32 %s558, 1
      %p562 = scmp.eq.s32.totalorder %s99, 1
      %p563 = scmp.ne.s32.totalorder %s558, %s560
      %p564 = scmp.eq.s32.totalorder %s99, 0
      %p565 = por %p563, %p564
      %p566 = scmp.ne.s32.totalorder %s558, %s560
      %p567 = scmp.eq.s32.totalorder %s104, 1
      %p568 = por %p566, %p567
      %p569 = scmp.ne.s32.totalorder %s560, %s561
      %p570 = scmp.eq.s32.totalorder %s104, 0
      %p571 = por %p569, %p570
      %p572 = scmp.ne.s32.totalorder %s560, %s561
      %p573 = scmp.eq.s32.totalorder %s105, 1
      %p574 = por %p572, %p573
      %p576 = scmp.ne.s32.totalorder %s561, %s575
      %p577 = scmp.eq.s32.totalorder %s105, 0
      %p578 = por %p576, %p577
      %s580 = sadd.s32 %s579, 1
      %p583 = scmp.eq.s32.totalorder %s99, 1
      %p584 = scmp.ne.s32.totalorder %s579, %s581
      %p585 = scmp.eq.s32.totalorder %s99, 0
      %p586 = por %p584, %p585
      %p587 = scmp.ne.s32.totalorder %s579, %s581
      %p588 = scmp.eq.s32.totalorder %s104, 1
      %p589 = por %p587, %p588
      %p590 = scmp.ne.s32.totalorder %s581, %s582
      %p591 = scmp.eq.s32.totalorder %s104, 0
      %p592 = por %p590, %p591
      %p593 = scmp.ne.s32.totalorder %s581, %s582
      %p594 = scmp.eq.s32.totalorder %s105, 1
      %p595 = por %p593, %p594
      %p597 = scmp.ne.s32.totalorder %s582, %s596
      %p598 = scmp.eq.s32.totalorder %s105, 0
      %p599 = por %p597, %p598
      %s601 = sadd.s32 %s600, 1
      %p604 = scmp.eq.s32.totalorder %s99, 1
      %p605 = scmp.ne.s32.totalorder %s600, %s602
      %p606 = scmp.eq.s32.totalorder %s99, 0
      %p607 = por %p605, %p606
      %p608 = scmp.ne.s32.totalorder %s600, %s602
      %p609 = scmp.eq.s32.totalorder %s104, 1
      %p610 = por %p608, %p609
      %p611 = scmp.ne.s32.totalorder %s602, %s603
      %p612 = scmp.eq.s32.totalorder %s104, 0
      %p613 = por %p611, %p612
      %p614 = scmp.ne.s32.totalorder %s602, %s603
      %p615 = scmp.eq.s32.totalorder %s105, 1
      %p616 = por %p614, %p615
      %p618 = scmp.ne.s32.totalorder %s603, %s617
      %p619 = scmp.eq.s32.totalorder %s105, 0
      %p620 = por %p618, %p619
      %s622 = sadd.s32 %s621, 1
      %p625 = scmp.eq.s32.totalorder %s99, 1
      %p626 = scmp.ne.s32.totalorder %s621, %s623
      %p627 = scmp.eq.s32.totalorder %s99, 0
      %p628 = por %p626, %p627
      %p629 = scmp.ne.s32.totalorder %s621, %s623
      %p630 = scmp.eq.s32.totalorder %s104, 1
      %p631 = por %p629, %p630
      %p632 = scmp.ne.s32.totalorder %s623, %s624
      %p633 = scmp.eq.s32.totalorder %s104, 0
      %p634 = por %p632, %p633
      %p635 = scmp.ne.s32.totalorder %s623, %s624
      %p636 = scmp.eq.s32.totalorder %s105, 1
      %p637 = por %p635, %p636
      %p639 = scmp.ne.s32.totalorder %s624, %s638
      %p640 = scmp.eq.s32.totalorder %s105, 0
      %p641 = por %p639, %p640
      %s643 = sadd.s32 %s642, 1
      %p646 = scmp.eq.s32.totalorder %s99, 1
      %p647 = scmp.ne.s32.totalorder %s642, %s644
      %p648 = scmp.eq.s32.totalorder %s99, 0
      %p649 = por %p647, %p648
      %p650 = scmp.ne.s32.totalorder %s642, %s644
      %p651 = scmp.eq.s32.totalorder %s104, 1
      %p652 = por %p650, %p651
      %p653 = scmp.ne.s32.totalorder %s644, %s645
      %p654 = scmp.eq.s32.totalorder %s104, 0
      %p655 = por %p653, %p654
      %p656 = scmp.ne.s32.totalorder %s644, %s645
      %p657 = scmp.eq.s32.totalorder %s105, 1
      %p658 = por %p656, %p657
      %p660 = scmp.ne.s32.totalorder %s645, %s659
      %p661 = scmp.eq.s32.totalorder %s105, 0
      %p662 = por %p660, %p661
      %s664 = sadd.s32 %s663, 1
      %p667 = scmp.eq.s32.totalorder %s99, 1
      %p668 = scmp.ne.s32.totalorder %s663, %s665
      %p669 = scmp.eq.s32.totalorder %s99, 0
      %p670 = por %p668, %p669
      %p671 = scmp.ne.s32.totalorder %s663, %s665
      %p672 = scmp.eq.s32.totalorder %s104, 1
      %p673 = por %p671, %p672
      %p674 = scmp.ne.s32.totalorder %s665, %s666
      %p675 = scmp.eq.s32.totalorder %s104, 0
      %p676 = por %p674, %p675
      %p677 = scmp.ne.s32.totalorder %s665, %s666
      %p678 = scmp.eq.s32.totalorder %s105, 1
      %p679 = por %p677, %p678
      %p681 = scmp.ne.s32.totalorder %s666, %s680
      %p682 = scmp.eq.s32.totalorder %s105, 0
      %p683 = por %p681, %p682
      %s685 = sadd.s32 %s684, 1
      %p688 = scmp.eq.s32.totalorder %s99, 1
      %p689 = scmp.ne.s32.totalorder %s684, %s686
      %p690 = scmp.eq.s32.totalorder %s99, 0
      %p691 = por %p689, %p690
      %p692 = scmp.ne.s32.totalorder %s684, %s686
      %p693 = scmp.eq.s32.totalorder %s104, 1
      %p694 = por %p692, %p693
      %p695 = scmp.ne.s32.totalorder %s686, %s687
      %p696 = scmp.eq.s32.totalorder %s104, 0
      %p697 = por %p695, %p696
      %p698 = scmp.ne.s32.totalorder %s686, %s687
      %p699 = scmp.eq.s32.totalorder %s105, 1
      %p700 = por %p698, %p699
      %p702 = scmp.ne.s32.totalorder %s687, %s701
      %p703 = scmp.eq.s32.totalorder %s105, 0
      %p704 = por %p702, %p703
      %s706 = sadd.s32 %s705, 1
      %p709 = scmp.eq.s32.totalorder %s99, 1
      %p710 = scmp.ne.s32.totalorder %s705, %s707
      %p711 = scmp.eq.s32.totalorder %s99, 0
      %p712 = por %p710, %p711
      %p713 = scmp.ne.s32.totalorder %s705, %s707
      %p714 = scmp.eq.s32.totalorder %s104, 1
      %p715 = por %p713, %p714
      %p716 = scmp.ne.s32.totalorder %s707, %s708
      %p717 = scmp.eq.s32.totalorder %s104, 0
      %p718 = por %p716, %p717
      %p719 = scmp.ne.s32.totalorder %s707, %s708
      %p720 = scmp.eq.s32.totalorder %s105, 1
      %p721 = por %p719, %p720
      %p723 = scmp.ne.s32.totalorder %s708, %s722
      %p724 = scmp.eq.s32.totalorder %s105, 0
      %p725 = por %p723, %p724
      %s727 = sadd.s32 %s726, 1
      %p730 = scmp.eq.s32.totalorder %s99, 1
      %p731 = scmp.ne.s32.totalorder %s726, %s728
      %p732 = scmp.eq.s32.totalorder %s99, 0
      %p733 = por %p731, %p732
      %p734 = scmp.ne.s32.totalorder %s726, %s728
      %p735 = scmp.eq.s32.totalorder %s104, 1
      %p736 = por %p734, %p735
      %p737 = scmp.ne.s32.totalorder %s728, %s729
      %p738 = scmp.eq.s32.totalorder %s104, 0
      %p739 = por %p737, %p738
      %p740 = scmp.ne.s32.totalorder %s728, %s729
      %p741 = scmp.eq.s32.totalorder %s105, 1
      %p742 = por %p740, %p741
      %p744 = scmp.ne.s32.totalorder %s729, %s743
      %p745 = scmp.eq.s32.totalorder %s105, 0
      %p746 = por %p744, %p745
      %s748 = sadd.s32 %s747, 1
      %p751 = scmp.eq.s32.totalorder %s99, 1
      %p752 = scmp.ne.s32.totalorder %s747, %s749
      %p753 = scmp.eq.s32.totalorder %s99, 0
      %p754 = por %p752, %p753
      %p755 = scmp.ne.s32.totalorder %s747, %s749
      %p756 = scmp.eq.s32.totalorder %s104, 1
      %p757 = por %p755, %p756
      %p758 = scmp.ne.s32.totalorder %s749, %s750
      %p759 = scmp.eq.s32.totalorder %s104, 0
      %p760 = por %p758, %p759
      %p761 = scmp.ne.s32.totalorder %s749, %s750
      %p762 = scmp.eq.s32.totalorder %s105, 1
      %p763 = por %p761, %p762
      %p765 = scmp.ne.s32.totalorder %s750, %s764
      %p766 = scmp.eq.s32.totalorder %s105, 0
      %p767 = por %p765, %p766
      %s769 = sadd.s32 %s768, 1
      %p772 = scmp.eq.s32.totalorder %s99, 1
      %p773 = scmp.ne.s32.totalorder %s768, %s770
      %p774 = scmp.eq.s32.totalorder %s99, 0
      %p775 = por %p773, %p774
      %p776 = scmp.ne.s32.totalorder %s768, %s770
      %p777 = scmp.eq.s32.totalorder %s104, 1
      %p778 = por %p776, %p777
      %p779 = scmp.ne.s32.totalorder %s770, %s771
      %p780 = scmp.eq.s32.totalorder %s104, 0
      %p781 = por %p779, %p780
      %p782 = scmp.ne.s32.totalorder %s770, %s771
      %p783 = scmp.eq.s32.totalorder %s105, 1
      %p784 = por %p782, %p783
      %p786 = scmp.ne.s32.totalorder %s771, %s785
      %p787 = scmp.eq.s32.totalorder %s105, 0
      %p788 = por %p786, %p787
      %s790 = sadd.s32 %s789, 1
      %p793 = scmp.eq.s32.totalorder %s99, 1
      %p794 = scmp.ne.s32.totalorder %s789, %s791
      %p795 = scmp.eq.s32.totalorder %s99, 0
      %p796 = por %p794, %p795
      %p797 = scmp.ne.s32.totalorder %s789, %s791
      %p798 = scmp.eq.s32.totalorder %s104, 1
      %p799 = por %p797, %p798
      %p800 = scmp.ne.s32.totalorder %s791, %s792
      %p801 = scmp.eq.s32.totalorder %s104, 0
      %p802 = por %p800, %p801
      %p803 = scmp.ne.s32.totalorder %s791, %s792
      %p804 = scmp.eq.s32.totalorder %s105, 1
      %p805 = por %p803, %p804
      %p807 = scmp.ne.s32.totalorder %s792, %s806
      %p808 = scmp.eq.s32.totalorder %s105, 0
      %p809 = por %p807, %p808
      %s811 = sadd.s32 %s810, 1
      %p814 = scmp.eq.s32.totalorder %s99, 1
      %p815 = scmp.ne.s32.totalorder %s810, %s812
      %p816 = scmp.eq.s32.totalorder %s99, 0
      %p817 = por %p815, %p816
      %p818 = scmp.ne.s32.totalorder %s810, %s812
      %p819 = scmp.eq.s32.totalorder %s104, 1
      %p820 = por %p818, %p819
      %p821 = scmp.ne.s32.totalorder %s812, %s813
      %p822 = scmp.eq.s32.totalorder %s104, 0
      %p823 = por %p821, %p822
      %p824 = scmp.ne.s32.totalorder %s812, %s813
      %p825 = scmp.eq.s32.totalorder %s105, 1
      %p826 = por %p824, %p825
      %p828 = scmp.ne.s32.totalorder %s813, %s827
      %p829 = scmp.eq.s32.totalorder %s105, 0
      %p830 = por %p828, %p829
      %s832 = sadd.s32 %s831, 1
      %p835 = scmp.eq.s32.totalorder %s99, 1
      %p836 = scmp.ne.s32.totalorder %s831, %s833
      %p837 = scmp.eq.s32.totalorder %s99, 0
      %p838 = por %p836, %p837
      %p839 = scmp.ne.s32.totalorder %s831, %s833
      %p840 = scmp.eq.s32.totalorder %s104, 1
      %p841 = por %p839, %p840
      %p842 = scmp.ne.s32.totalorder %s833, %s834
      %p843 = scmp.eq.s32.totalorder %s104, 0
      %p844 = por %p842, %p843
      %p845 = scmp.ne.s32.totalorder %s833, %s834
      %p846 = scmp.eq.s32.totalorder %s105, 1
      %p847 = por %p845, %p846
      %p849 = scmp.ne.s32.totalorder %s834, %s848
      %p850 = scmp.eq.s32.totalorder %s105, 0
      %p851 = por %p849, %p850
      %s853 = sadd.s32 %s852, 1
      %p856 = scmp.eq.s32.totalorder %s99, 1
      %p857 = scmp.ne.s32.totalorder %s852, %s854
      %p858 = scmp.eq.s32.totalorder %s99, 0
      %p859 = por %p857, %p858
      %p860 = scmp.ne.s32.totalorder %s852, %s854
      %p861 = scmp.eq.s32.totalorder %s104, 1
      %p862 = por %p860, %p861
      %p863 = scmp.ne.s32.totalorder %s854, %s855
      %p864 = scmp.eq.s32.totalorder %s104, 0
      %p865 = por %p863, %p864
      %p866 = scmp.ne.s32.totalorder %s854, %s855
      %p867 = scmp.eq.s32.totalorder %s105, 1
      %p868 = por %p866, %p867
      %p870 = scmp.ne.s32.totalorder %s855, %s869
      %p871 = scmp.eq.s32.totalorder %s105, 0
      %p872 = por %p870, %p871
      %s873 = ssub.s32 %s99, %s106
      %p874 = scmp.eq.s32.totalorder %s873, 0
      %s876 = sadd.s32 %s875, 1
      %s877 = scalar_select %p874, %s875, %s876
      %p880 = pneg %p874
      %p881 = scmp.eq.s32.totalorder %s99, 1
      %p882 = por %p880, %p881
      %p883 = scmp.ne.s32.totalorder %s875, %s878
      %p884 = scmp.eq.s32.totalorder %s99, 0
      %p885 = por %p883, %p884
      %p886 = scmp.ne.s32.totalorder %s875, %s878
      %p887 = scmp.eq.s32.totalorder %s104, 1
      %p888 = por %p886, %p887
      %p889 = scmp.ne.s32.totalorder %s878, %s879
      %p890 = scmp.eq.s32.totalorder %s104, 0
      %p891 = por %p889, %p890
      %p892 = scmp.ne.s32.totalorder %s878, %s879
      %p893 = scmp.eq.s32.totalorder %s105, 1
      %p894 = por %p892, %p893
      %p896 = scmp.ne.s32.totalorder %s879, %s895
      %p897 = scmp.eq.s32.totalorder %s105, 0
      %p898 = por %p896, %p897
      %s899 = ssub.s32 %s99, %s106
      %p900 = scmp.eq.s32.totalorder %s899, 0
      %s902 = sadd.s32 %s901, 1
      %s903 = scalar_select %p900, %s901, %s902
      %p906 = pneg %p900
      %p907 = scmp.eq.s32.totalorder %s99, 1
      %p908 = por %p906, %p907
      %p909 = scmp.ne.s32.totalorder %s901, %s904
      %p910 = scmp.eq.s32.totalorder %s99, 0
      %p911 = por %p909, %p910
      %p912 = scmp.ne.s32.totalorder %s901, %s904
      %p913 = scmp.eq.s32.totalorder %s104, 1
      %p914 = por %p912, %p913
      %p915 = scmp.ne.s32.totalorder %s904, %s905
      %p916 = scmp.eq.s32.totalorder %s104, 0
      %p917 = por %p915, %p916
      %p918 = scmp.ne.s32.totalorder %s904, %s905
      %p919 = scmp.eq.s32.totalorder %s105, 1
      %p920 = por %p918, %p919
      %p922 = scmp.ne.s32.totalorder %s905, %s921
      %p923 = scmp.eq.s32.totalorder %s105, 0
      %p924 = por %p922, %p923
      %s925 = ssub.s32 %s99, %s106
      %p926 = scmp.eq.s32.totalorder %s925, 0
      %s928 = sadd.s32 %s927, 1
      %s929 = scalar_select %p926, %s927, %s928
      %p932 = pneg %p926
      %p933 = scmp.eq.s32.totalorder %s99, 1
      %p934 = por %p932, %p933
      %p935 = scmp.ne.s32.totalorder %s927, %s930
      %p936 = scmp.eq.s32.totalorder %s99, 0
      %p937 = por %p935, %p936
      %p938 = scmp.ne.s32.totalorder %s927, %s930
      %p939 = scmp.eq.s32.totalorder %s104, 1
      %p940 = por %p938, %p939
      %p941 = scmp.ne.s32.totalorder %s930, %s931
      %p942 = scmp.eq.s32.totalorder %s104, 0
      %p943 = por %p941, %p942
      %p944 = scmp.ne.s32.totalorder %s930, %s931
      %p945 = scmp.eq.s32.totalorder %s105, 1
      %p946 = por %p944, %p945
      %p948 = scmp.ne.s32.totalorder %s931, %s947
      %p949 = scmp.eq.s32.totalorder %s105, 0
      %p950 = por %p948, %p949
      %s951 = ssub.s32 %s99, %s106
      %p952 = scmp.eq.s32.totalorder %s951, 0
      %s954 = sadd.s32 %s953, 1
      %s955 = scalar_select %p952, %s953, %s954
      %p958 = pneg %p952
      %p959 = scmp.eq.s32.totalorder %s99, 1
      %p960 = por %p958, %p959
      %p961 = scmp.ne.s32.totalorder %s953, %s956
      %p962 = scmp.eq.s32.totalorder %s99, 0
      %p963 = por %p961, %p962
      %p964 = scmp.ne.s32.totalorder %s953, %s956
      %p965 = scmp.eq.s32.totalorder %s104, 1
      %p966 = por %p964, %p965
      %p967 = scmp.ne.s32.totalorder %s956, %s957
      %p968 = scmp.eq.s32.totalorder %s104, 0
      %p969 = por %p967, %p968
      %p970 = scmp.ne.s32.totalorder %s956, %s957
      %p971 = scmp.eq.s32.totalorder %s105, 1
      %p972 = por %p970, %p971
      %p974 = scmp.ne.s32.totalorder %s957, %s973
      %p975 = scmp.eq.s32.totalorder %s105, 0
      %p976 = por %p974, %p975
      %s977 = ssub.s32 %s99, %s106
      %p978 = scmp.eq.s32.totalorder %s977, 0
      %s980 = sadd.s32 %s979, 1
      %s981 = scalar_select %p978, %s979, %s980
      %p984 = pneg %p978
      %p985 = scmp.eq.s32.totalorder %s99, 1
      %p986 = por %p984, %p985
      %p987 = scmp.ne.s32.totalorder %s979, %s982
      %p988 = scmp.eq.s32.totalorder %s99, 0
      %p989 = por %p987, %p988
      %p990 = scmp.ne.s32.totalorder %s979, %s982
      %p991 = scmp.eq.s32.totalorder %s104, 1
      %p992 = por %p990, %p991
      %p993 = scmp.ne.s32.totalorder %s982, %s983
      %p994 = scmp.eq.s32.totalorder %s104, 0
      %p995 = por %p993, %p994
      %p996 = scmp.ne.s32.totalorder %s982, %s983
      %p997 = scmp.eq.s32.totalorder %s105, 1
      %p998 = por %p996, %p997
      %p1000 = scmp.ne.s32.totalorder %s983, %s999
      %p1001 = scmp.eq.s32.totalorder %s105, 0
      %p1002 = por %p1000, %p1001
      %s1003 = ssub.s32 %s99, %s106
      %p1004 = scmp.eq.s32.totalorder %s1003, 0
      %s1006 = sadd.s32 %s1005, 1
      %s1007 = scalar_select %p1004, %s1005, %s1006
      %p1010 = pneg %p1004
      %p1011 = scmp.eq.s32.totalorder %s99, 1
      %p1012 = por %p1010, %p1011
      %p1013 = scmp.ne.s32.totalorder %s1005, %s1008
      %p1014 = scmp.eq.s32.totalorder %s99, 0
      %p1015 = por %p1013, %p1014
      %p1016 = scmp.ne.s32.totalorder %s1005, %s1008
      %p1017 = scmp.eq.s32.totalorder %s104, 1
      %p1018 = por %p1016, %p1017
      %p1019 = scmp.ne.s32.totalorder %s1008, %s1009
      %p1020 = scmp.eq.s32.totalorder %s104, 0
      %p1021 = por %p1019, %p1020
      %p1022 = scmp.ne.s32.totalorder %s1008, %s1009
      %p1023 = scmp.eq.s32.totalorder %s105, 1
      %p1024 = por %p1022, %p1023
      %p1026 = scmp.ne.s32.totalorder %s1009, %s1025
      %p1027 = scmp.eq.s32.totalorder %s105, 0
      %p1028 = por %p1026, %p1027
      %p1029 = scmp.le.s32.totalorder 1, %s99
      %p1030 = scmp.lt.s32.totalorder %s99, 3
      %p1031 = pnand %p1029, %p1030
      %p1032 = pneg %p1031
      // Predicated region
      $region9: #{variance_adaptor_forward.1} parent=5 // pred_check
        _
      $region10: #{variance_adaptor_forward.1} parent=5 // pred_check_branch
        %1034 = sbr.rel (%p1031) target = $region12
      $region11: #{variance_adaptor_forward.1} parent=5 // pred_region
        %s1035 = ssub.s32 %s99, 1
        // Predicated region
        $region13: #{variance_adaptor_forward.1} parent=11 // pred_check
          %p1036 = pneg %p172
        $region14: #{variance_adaptor_forward.1} parent=11 // pred_check_branch
          %1038 = sbr.rel (%p1036) target = $region16
        $region15: #{variance_adaptor_forward.1} parent=11 // pred_region
          _
        $region16: #{variance_adaptor_forward.1} parent=11 // pred_fallthru
          _
        // Predicated region
        $region17: #{variance_adaptor_forward.1} parent=11 // pred_check
          %p1039 = pneg %p193
        $region18: #{variance_adaptor_forward.1} parent=11 // pred_check_branch
          %1041 = sbr.rel (%p1039) target = $region20
        $region19: #{variance_adaptor_forward.1} parent=11 // pred_region
          _
        $region20: #{variance_adaptor_forward.1} parent=11 // pred_fallthru
          _
        // Predicated region
        $region21: #{variance_adaptor_forward.1} parent=11 // pred_check
          %p1042 = pneg %p214
        $region22: #{variance_adaptor_forward.1} parent=11 // pred_check_branch
          %1044 = sbr.rel (%p1042) target = $region24
        $region23: #{variance_adaptor_forward.1} parent=11 // pred_region
          _
        $region24: #{variance_adaptor_forward.1} parent=11 // pred_fallthru
          _
        // Predicated region
        $region25: #{variance_adaptor_forward.1} parent=11 // pred_check
          %p1045 = pneg %p235
        $region26: #{variance_adaptor_forward.1} parent=11 // pred_check_branch
          %1047 = sbr.rel (%p1045) target = $region28
        $region27: #{variance_adaptor_forward.1} parent=11 // pred_region
          _
        $region28: #{variance_adaptor_forward.1} parent=11 // pred_fallthru
          _
        // Predicated region
        $region29: #{variance_adaptor_forward.1} parent=11 // pred_check
          %p1048 = pneg %p256
        $region30: #{variance_adaptor_forward.1} parent=11 // pred_check_branch
          %1050 = sbr.rel (%p1048) target = $region32
        $region31: #{variance_adaptor_forward.1} parent=11 // pred_region
          _
        $region32: #{variance_adaptor_forward.1} parent=11 // pred_fallthru
          _
        // Predicated region
        $region33: #{variance_adaptor_forward.1} parent=11 // pred_check
          %p1051 = pneg %p277
        $region34: #{variance_adaptor_forward.1} parent=11 // pred_check_branch
          %1053 = sbr.rel (%p1051) target = $region36
        $region35: #{variance_adaptor_forward.1} parent=11 // pred_region
          _
        $region36: #{variance_adaptor_forward.1} parent=11 // pred_fallthru
          _
        // Predicated region
        $region37: #{variance_adaptor_forward.1} parent=11 // pred_check
          %p1054 = pneg %p298
        $region38: #{variance_adaptor_forward.1} parent=11 // pred_check_branch
          %1056 = sbr.rel (%p1054) target = $region40
        $region39: #{variance_adaptor_forward.1} parent=11 // pred_region
          _
        $region40: #{variance_adaptor_forward.1} parent=11 // pred_fallthru
          _
        // Predicated region
        $region41: #{variance_adaptor_forward.1} parent=11 // pred_check
          %p1057 = pneg %p319
        $region42: #{variance_adaptor_forward.1} parent=11 // pred_check_branch
          %1059 = sbr.rel (%p1057) target = $region44
        $region43: #{variance_adaptor_forward.1} parent=11 // pred_region
          _
        $region44: #{variance_adaptor_forward.1} parent=11 // pred_fallthru
          _
        // Predicated region
        $region45: #{variance_adaptor_forward.1} parent=11 // pred_check
          %p1060 = pneg %p340
        $region46: #{variance_adaptor_forward.1} parent=11 // pred_check_branch
          %1062 = sbr.rel (%p1060) target = $region48
        $region47: #{variance_adaptor_forward.1} parent=11 // pred_region
          _
        $region48: #{variance_adaptor_forward.1} parent=11 // pred_fallthru
          _
        // Predicated region
        $region49: #{variance_adaptor_forward.1} parent=11 // pred_check
          %p1063 = pneg %p361
        $region50: #{variance_adaptor_forward.1} parent=11 // pred_check_branch
          %1065 = sbr.rel (%p1063) target = $region52
        $region51: #{variance_adaptor_forward.1} parent=11 // pred_region
          _
        $region52: #{variance_adaptor_forward.1} parent=11 // pred_fallthru
          _
        // Predicated region
        $region53: #{variance_adaptor_forward.1} parent=11 // pred_check
          %p1066 = pneg %p382
        $region54: #{variance_adaptor_forward.1} parent=11 // pred_check_branch
          %1068 = sbr.rel (%p1066) target = $region56
        $region55: #{variance_adaptor_forward.1} parent=11 // pred_region
          _
        $region56: #{variance_adaptor_forward.1} parent=11 // pred_fallthru
          _
        // Predicated region
        $region57: #{variance_adaptor_forward.1} parent=11 // pred_check
          %p1069 = pneg %p403
        $region58: #{variance_adaptor_forward.1} parent=11 // pred_check_branch
          %1071 = sbr.rel (%p1069) target = $region60
        $region59: #{variance_adaptor_forward.1} parent=11 // pred_region
          _
        $region60: #{variance_adaptor_forward.1} parent=11 // pred_fallthru
          _
        // Predicated region
        $region61: #{variance_adaptor_forward.1} parent=11 // pred_check
          %p1072 = pneg %p424
        $region62: #{variance_adaptor_forward.1} parent=11 // pred_check_branch
          %1074 = sbr.rel (%p1072) target = $region64
        $region63: #{variance_adaptor_forward.1} parent=11 // pred_region
          _
        $region64: #{variance_adaptor_forward.1} parent=11 // pred_fallthru
          _
        // Predicated region
        $region65: #{variance_adaptor_forward.1} parent=11 // pred_check
          %p1075 = pneg %p445
        $region66: #{variance_adaptor_forward.1} parent=11 // pred_check_branch
          %1077 = sbr.rel (%p1075) target = $region68
        $region67: #{variance_adaptor_forward.1} parent=11 // pred_region
          _
        $region68: #{variance_adaptor_forward.1} parent=11 // pred_fallthru
          _
        // Predicated region
        $region69: #{variance_adaptor_forward.1} parent=11 // pred_check
          %p1078 = pneg %p466
        $region70: #{variance_adaptor_forward.1} parent=11 // pred_check_branch
          %1080 = sbr.rel (%p1078) target = $region72
        $region71: #{variance_adaptor_forward.1} parent=11 // pred_region
          _
        $region72: #{variance_adaptor_forward.1} parent=11 // pred_fallthru
          _
        // Predicated region
        $region73: #{variance_adaptor_forward.1} parent=11 // pred_check
          %p1081 = pneg %p487
        $region74: #{variance_adaptor_forward.1} parent=11 // pred_check_branch
          %1083 = sbr.rel (%p1081) target = $region76
        $region75: #{variance_adaptor_forward.1} parent=11 // pred_region
          _
        $region76: #{variance_adaptor_forward.1} parent=11 // pred_fallthru
          _
        // Predicated region
        $region77: #{variance_adaptor_forward.1} parent=11 // pred_check
          %p1084 = pneg %p508
        $region78: #{variance_adaptor_forward.1} parent=11 // pred_check_branch
          %1086 = sbr.rel (%p1084) target = $region80
        $region79: #{variance_adaptor_forward.1} parent=11 // pred_region
          _
        $region80: #{variance_adaptor_forward.1} parent=11 // pred_fallthru
          _
        // Predicated region
        $region81: #{variance_adaptor_forward.1} parent=11 // pred_check
          %p1087 = pneg %p529
        $region82: #{variance_adaptor_forward.1} parent=11 // pred_check_branch
          %1089 = sbr.rel (%p1087) target = $region84
        $region83: #{variance_adaptor_forward.1} parent=11 // pred_region
          _
        $region84: #{variance_adaptor_forward.1} parent=11 // pred_fallthru
          _
        // Predicated region
        $region85: #{variance_adaptor_forward.1} parent=11 // pred_check
          %p1090 = pneg %p550
        $region86: #{variance_adaptor_forward.1} parent=11 // pred_check_branch
          %1092 = sbr.rel (%p1090) target = $region88
        $region87: #{variance_adaptor_forward.1} parent=11 // pred_region
          _
        $region88: #{variance_adaptor_forward.1} parent=11 // pred_fallthru
          _
        // Predicated region
        $region89: #{variance_adaptor_forward.1} parent=11 // pred_check
          %p1093 = pneg %p571
        $region90: #{variance_adaptor_forward.1} parent=11 // pred_check_branch
          %1095 = sbr.rel (%p1093) target = $region92
        $region91: #{variance_adaptor_forward.1} parent=11 // pred_region
          _
        $region92: #{variance_adaptor_forward.1} parent=11 // pred_fallthru
          _
        // Predicated region
        $region93: #{variance_adaptor_forward.1} parent=11 // pred_check
          %p1096 = pneg %p592
        $region94: #{variance_adaptor_forward.1} parent=11 // pred_check_branch
          %1098 = sbr.rel (%p1096) target = $region96
        $region95: #{variance_adaptor_forward.1} parent=11 // pred_region
          _
        $region96: #{variance_adaptor_forward.1} parent=11 // pred_fallthru
          _
        // Predicated region
        $region97: #{variance_adaptor_forward.1} parent=11 // pred_check
          %p1099 = pneg %p613
        $region98: #{variance_adaptor_forward.1} parent=11 // pred_check_branch
          %1101 = sbr.rel (%p1099) target = $region100
        $region99: #{variance_adaptor_forward.1} parent=11 // pred_region
          _
        $region100: #{variance_adaptor_forward.1} parent=11 // pred_fallthru
          _
        // Predicated region
        $region101: #{variance_adaptor_forward.1} parent=11 // pred_check
          %p1102 = pneg %p634
        $region102: #{variance_adaptor_forward.1} parent=11 // pred_check_branch
          %1104 = sbr.rel (%p1102) target = $region104
        $region103: #{variance_adaptor_forward.1} parent=11 // pred_region
          _
        $region104: #{variance_adaptor_forward.1} parent=11 // pred_fallthru
          _
        // Predicated region
        $region105: #{variance_adaptor_forward.1} parent=11 // pred_check
          %p1105 = pneg %p655
        $region106: #{variance_adaptor_forward.1} parent=11 // pred_check_branch
          %1107 = sbr.rel (%p1105) target = $region108
        $region107: #{variance_adaptor_forward.1} parent=11 // pred_region
          _
        $region108: #{variance_adaptor_forward.1} parent=11 // pred_fallthru
          _
        // Predicated region
        $region109: #{variance_adaptor_forward.1} parent=11 // pred_check
          %p1108 = pneg %p676
        $region110: #{variance_adaptor_forward.1} parent=11 // pred_check_branch
          %1110 = sbr.rel (%p1108) target = $region112
        $region111: #{variance_adaptor_forward.1} parent=11 // pred_region
          _
        $region112: #{variance_adaptor_forward.1} parent=11 // pred_fallthru
          _
        // Predicated region
        $region113: #{variance_adaptor_forward.1} parent=11 // pred_check
          %p1111 = pneg %p697
        $region114: #{variance_adaptor_forward.1} parent=11 // pred_check_branch
          %1113 = sbr.rel (%p1111) target = $region116
        $region115: #{variance_adaptor_forward.1} parent=11 // pred_region
          _
        $region116: #{variance_adaptor_forward.1} parent=11 // pred_fallthru
          _
        // Predicated region
        $region117: #{variance_adaptor_forward.1} parent=11 // pred_check
          %p1114 = pneg %p718
        $region118: #{variance_adaptor_forward.1} parent=11 // pred_check_branch
          %1116 = sbr.rel (%p1114) target = $region120
        $region119: #{variance_adaptor_forward.1} parent=11 // pred_region
          _
        $region120: #{variance_adaptor_forward.1} parent=11 // pred_fallthru
          _
        // Predicated region
        $region121: #{variance_adaptor_forward.1} parent=11 // pred_check
          %p1117 = pneg %p739
        $region122: #{variance_adaptor_forward.1} parent=11 // pred_check_branch
          %1119 = sbr.rel (%p1117) target = $region124
        $region123: #{variance_adaptor_forward.1} parent=11 // pred_region
          _
        $region124: #{variance_adaptor_forward.1} parent=11 // pred_fallthru
          _
        // Predicated region
        $region125: #{variance_adaptor_forward.1} parent=11 // pred_check
          %p1120 = pneg %p760
        $region126: #{variance_adaptor_forward.1} parent=11 // pred_check_branch
          %1122 = sbr.rel (%p1120) target = $region128
        $region127: #{variance_adaptor_forward.1} parent=11 // pred_region
          _
        $region128: #{variance_adaptor_forward.1} parent=11 // pred_fallthru
          _
        // Predicated region
        $region129: #{variance_adaptor_forward.1} parent=11 // pred_check
          %p1123 = pneg %p781
        $region130: #{variance_adaptor_forward.1} parent=11 // pred_check_branch
          %1125 = sbr.rel (%p1123) target = $region132
        $region131: #{variance_adaptor_forward.1} parent=11 // pred_region
          _
        $region132: #{variance_adaptor_forward.1} parent=11 // pred_fallthru
          _
        // Predicated region
        $region133: #{variance_adaptor_forward.1} parent=11 // pred_check
          %p1126 = pneg %p802
        $region134: #{variance_adaptor_forward.1} parent=11 // pred_check_branch
          %1128 = sbr.rel (%p1126) target = $region136
        $region135: #{variance_adaptor_forward.1} parent=11 // pred_region
          _
        $region136: #{variance_adaptor_forward.1} parent=11 // pred_fallthru
          _
        // Predicated region
        $region137: #{variance_adaptor_forward.1} parent=11 // pred_check
          %p1129 = pneg %p823
        $region138: #{variance_adaptor_forward.1} parent=11 // pred_check_branch
          %1131 = sbr.rel (%p1129) target = $region140
        $region139: #{variance_adaptor_forward.1} parent=11 // pred_region
          _
        $region140: #{variance_adaptor_forward.1} parent=11 // pred_fallthru
          _
        // Predicated region
        $region141: #{variance_adaptor_forward.1} parent=11 // pred_check
          %p1132 = pneg %p844
        $region142: #{variance_adaptor_forward.1} parent=11 // pred_check_branch
          %1134 = sbr.rel (%p1132) target = $region144
        $region143: #{variance_adaptor_forward.1} parent=11 // pred_region
          _
        $region144: #{variance_adaptor_forward.1} parent=11 // pred_fallthru
          _
        // Predicated region
        $region145: #{variance_adaptor_forward.1} parent=11 // pred_check
          %p1135 = pneg %p865
        $region146: #{variance_adaptor_forward.1} parent=11 // pred_check_branch
          %1137 = sbr.rel (%p1135) target = $region148
        $region147: #{variance_adaptor_forward.1} parent=11 // pred_region
          _
        $region148: #{variance_adaptor_forward.1} parent=11 // pred_fallthru
          _
      $region12: #{variance_adaptor_forward.1} parent=5 // pred_fallthru
        _
      %p1138 = scmp.lt.s32.totalorder %s99, 2
      // Predicated region
      $region149: #{variance_adaptor_forward.1} parent=5 // pred_check
        %p1139 = pneg %p1138
      $region150: #{variance_adaptor_forward.1} parent=5 // pred_check_branch
        %1141 = sbr.rel (%p1139) target = $region152
      $region151: #{variance_adaptor_forward.1} parent=5 // pred_region
        // Predicated region
        $region153: #{variance_adaptor_forward.1} parent=151 // pred_check
          %p1142 = pneg %p119
        $region154: #{variance_adaptor_forward.1} parent=151 // pred_check_branch
          %1144 = sbr.rel (%p1142) target = $region156
        $region155: #{variance_adaptor_forward.1} parent=151 // pred_region
          %p1145 = scmp.lt.s32.totalorder %s99, 1
          %s1146 = scalar_select %p1145, %s99, 1
          %s1147 = smul.addr %s1146, 8
          %s1148 = scalar_lea.vmem %s1, %s1147
        $region156: #{variance_adaptor_forward.1} parent=151 // pred_fallthru
          _
        // Predicated region
        $region157: #{variance_adaptor_forward.1} parent=151 // pred_check
          %p1149 = pneg %p145
        $region158: #{variance_adaptor_forward.1} parent=151 // pred_check_branch
          %1151 = sbr.rel (%p1149) target = $region160
        $region159: #{variance_adaptor_forward.1} parent=151 // pred_region
          %p1152 = scmp.lt.s32.totalorder %s99, 1
          %s1153 = scalar_select %p1152, %s99, 1
          %s1154 = smul.addr %s1153, 8
          %s1155 = scalar_lea.vmem %s3, %s1154
        $region160: #{variance_adaptor_forward.1} parent=151 // pred_fallthru
          _
      $region152: #{variance_adaptor_forward.1} parent=5 // pred_fallthru
        _
      %p1156 = scmp.le.s32.totalorder 1, %s99
      %p1157 = scmp.lt.s32.totalorder %s99, 3
      %p1158 = pnand %p1156, %p1157
      %p1159 = pneg %p1158
      // Predicated region
      $region161: #{variance_adaptor_forward.1} parent=5 // pred_check
        _
      $region162: #{variance_adaptor_forward.1} parent=5 // pred_check_branch
        %1161 = sbr.rel (%p1158) target = $region164
      $region163: #{variance_adaptor_forward.1} parent=5 // pred_region
        %s1162 = ssub.s32 %s99, 1
        %p1163 = scmp.lt.s32.totalorder %s104, 1
        %s1164 = scalar_select %p1163, %s104, 1
        %s1165 = smul.addr %s1164, 8
        %s1166 = scalar_lea.vmem %s1, %s1165
        %p1167 = pneg %p125
        %p1168 = pneg %p122
        %p1169 = scmp.lt.s32.totalorder %s104, 1
        %s1170 = scalar_select %p1169, %s104, 1
        %s1171 = smul.addr %s1170, 8
        %s1172 = scalar_lea.vmem %s3, %s1171
        %p1173 = pneg %p151
        %p1174 = pneg %p148
        %p1175 = pneg %p172
        %p1176 = pneg %p169
        %p1177 = pneg %p193
        %p1178 = pneg %p190
        %p1179 = pneg %p214
        %p1180 = pneg %p211
        %p1181 = pneg %p235
        %p1182 = pneg %p232
        %p1183 = pneg %p256
        %p1184 = pneg %p253
        %p1185 = pneg %p277
        %p1186 = pneg %p274
        %p1187 = pneg %p298
        %p1188 = pneg %p295
        %p1189 = pneg %p319
        %p1190 = pneg %p316
        %p1191 = pneg %p340
        %p1192 = pneg %p337
        %p1193 = pneg %p361
        %p1194 = pneg %p358
        %p1195 = pneg %p382
        %p1196 = pneg %p379
        %p1197 = pneg %p403
        %p1198 = pneg %p400
        %p1199 = pneg %p424
        %p1200 = pneg %p421
        %p1201 = pneg %p445
        %p1202 = pneg %p442
        %p1203 = pneg %p466
        %p1204 = pneg %p463
        %p1205 = pneg %p487
        %p1206 = pneg %p484
        %p1207 = pneg %p508
        %p1208 = pneg %p505
        %p1209 = pneg %p529
        %p1210 = pneg %p526
        %p1211 = pneg %p550
        %p1212 = pneg %p547
        %p1213 = pneg %p571
        %p1214 = pneg %p568
        %p1215 = pneg %p592
        %p1216 = pneg %p589
        %p1217 = pneg %p613
        %p1218 = pneg %p610
        %p1219 = pneg %p634
        %p1220 = pneg %p631
        %p1221 = pneg %p655
        %p1222 = pneg %p652
        %p1223 = pneg %p676
        %p1224 = pneg %p673
        %p1225 = pneg %p697
        %p1226 = pneg %p694
        %p1227 = pneg %p718
        %p1228 = pneg %p715
        %p1229 = pneg %p739
        %p1230 = pneg %p736
        %p1231 = pneg %p760
        %p1232 = pneg %p757
        %p1233 = pneg %p781
        %p1234 = pneg %p778
        %p1235 = pneg %p802
        %p1236 = pneg %p799
        %p1237 = pneg %p823
        %p1238 = pneg %p820
        %p1239 = pneg %p844
        %p1240 = pneg %p841
        %p1241 = pneg %p865
        %p1242 = pneg %p862
        %p1243 = pneg %p891
        %p1244 = pneg %p888
        %s1245 = sand.u32 %s878, 1
        %s1246 = scalar_lea.sflag [#allocation6], %s1245
        %s1247 = sand.u32 %s878, 1
        %s1248 = smul.addr %s1247, 32
        %s1249 = scalar_lea.vmem [#allocation5], %s1248
        %p1250 = pneg %p917
        %p1251 = pneg %p914
        %p1252 = scmp.lt.s32.totalorder %s104, 1
        %s1253 = scalar_select %p1252, %s104, 1
        %s1254 = smul.addr %s1253, 8
        %s1255 = scalar_lea.vmem %s75, %s1254
        %p1256 = pneg %p943
        %p1257 = pneg %p940
        %p1258 = scmp.lt.s32.totalorder %s104, 1
        %s1259 = scalar_select %p1258, %s104, 1
        %s1260 = smul.addr %s1259, 8
        %s1261 = scalar_lea.vmem %s77, %s1260
        %p1262 = pneg %p969
        %p1263 = pneg %p966
        %p1264 = scmp.lt.s32.totalorder %s104, 1
        %s1265 = scalar_select %p1264, %s104, 1
        %s1266 = smul.addr %s1265, 8
        %s1267 = scalar_lea.vmem %s79, %s1266
        %p1268 = pneg %p995
        %p1269 = pneg %p992
        %p1270 = scmp.lt.s32.totalorder %s104, 1
        %s1271 = scalar_select %p1270, %s104, 1
        %s1272 = smul.addr %s1271, 8
        %s1273 = scalar_lea.vmem %s81, %s1272
        %p1274 = pneg %p1021
        %p1275 = pneg %p1018
        %p1276 = scmp.lt.s32.totalorder %s104, 1
        %s1277 = scalar_select %p1276, %s104, 1
        %s1278 = scalar_lea.vmem %s83, %s1277
        %p1279 = scmp.lt.s32.totalorder %s104, 1
        %s1280 = scalar_select %p1279, %s104, 1
        %s1281 = smul.addr %s1280, 8
        %s1282 = scalar_lea.vmem %s1, %s1281
        %p1283 = scmp.lt.s32.totalorder %s104, 1
        %s1284 = scalar_select %p1283, %s104, 1
        %s1285 = smul.addr %s1284, 8
        %s1286 = scalar_lea.vmem %s3, %s1285
        %p1287 = scmp.lt.s32.totalorder %s104, 1
        %s1288 = scalar_select %p1287, %s104, 1
        %s1289 = smul.addr %s1288, 8
        %s1290 = scalar_lea.vmem %s75, %s1289
        %p1291 = scmp.lt.s32.totalorder %s104, 1
        %s1292 = scalar_select %p1291, %s104, 1
        %s1293 = smul.addr %s1292, 8
        %s1294 = scalar_lea.vmem %s77, %s1293
        %p1295 = scmp.lt.s32.totalorder %s104, 1
        %s1296 = scalar_select %p1295, %s104, 1
        %s1297 = smul.addr %s1296, 8
        %s1298 = scalar_lea.vmem %s79, %s1297
        %p1299 = scmp.lt.s32.totalorder %s104, 1
        %s1300 = scalar_select %p1299, %s104, 1
        %s1301 = smul.addr %s1300, 8
        %s1302 = scalar_lea.vmem %s81, %s1301
        %p1303 = scmp.lt.s32.totalorder %s104, 1
        %s1304 = scalar_select %p1303, %s104, 1
        %s1305 = scalar_lea.vmem %s83, %s1304
        %v1306 = vld [vmem:[%s1282] sm:$0xff]
        %v1307 = vld [vmem:[%s1286] sm:$0xff]
        %v1309 = vrot.slane %v1306, 7
        %vm1311 = vcmask 1040384
        %v1312 = vsel %vm1311, 0.0, %v1309
        %v1313 = vrot.slane %v1306, 1
        %vm1315 = vcmask 1046528
        %v1316 = vsel %vm1315, %v1313, 0.0
        %1317 = vrot.lane.b32.xlu0 %v1306, 32
        %v1318 = vpop.permute.xlu0 %1317
        %1321 = vrot.lane.b32.xlu0 %v1316, 64
        %v1322 = vpop.permute.xlu0 %1321
        %vm1324 = vcmask 261120
        %v1325 = vsel %vm1324, %v1312, %v1318
        %vm1326 = vcmask 523264
        %v1327 = vsel %vm1326, %v1325, %v1322
        %v1328 = vld [vmem:[%s5] sm:$0xff]
        %v1329 = vld [vmem:[%s5 + $0x8] sm:$0xff]
        %v1330 = vld [vmem:[%s5 + $0x10] sm:$0xff]
        %v1331 = vld [vmem:[%s5 + $0x18] sm:$0xff]
        %v1332 = vld [vmem:[%s5 + $0x20] sm:$0xff]
        %v1333 = vld [vmem:[%s5 + $0x28] sm:$0xff]
        %v1334 = vld [vmem:[%s5 + $0x30] sm:$0xff]
        %v1335 = vld [vmem:[%s5 + $0x38] sm:$0xff]
        %v1336 = vld [vmem:[%s5 + $0x40] sm:$0xff]
        %v1337 = vld [vmem:[%s5 + $0x48] sm:$0xff]
        %v1338 = vld [vmem:[%s5 + $0x50] sm:$0xff]
        %v1339 = vld [vmem:[%s5 + $0x58] sm:$0xff]
        %v1340 = vld [vmem:[%s7] sm:$0x1]
        %v1342 = vlaneseq
        %v1343 = vshrl.u32 %v1342, 7
        %v1344 = vsub.s32 0, %v1343
        %v1345 = vrot.slane %v1340, %v1344
        %vm1347 = vcmask 785408
        %v1349 = vsel %vm1347, %v1327, 0
        %1351 = vmatprep.subr.mxu0 0.0
        %1352 = vmatpush1.msra.mxu0 %v1328
        %1353 = vmatprep.subr.mxu0 0.0
        %1354 = vmatpush1.msra.mxu0 %v1329
        %1355 = vmatprep.subr.mxu0 0.0
        %1356 = vmatpush1.msra.mxu0 %v1330
        %1357 = vmatprep.subr.mxu0 0.0
        %1358 = vmatpush1.msra.mxu0 %v1331
        %1359 = vmatprep.subr.mxu0 0.0
        %1360 = vmatpush1.msra.mxu0 %v1332
        %1361 = vmatprep.subr.mxu0 0.0
        %1362 = vmatpush1.msra.mxu0 %v1333
        %1363 = vmatprep.subr.mxu0 0.0
        %1364 = vmatpush1.msra.mxu0 %v1334
        %1365 = vmatprep.subr.mxu0 0.0
        %1366 = vmatpush1.msra.mxu0 %v1335
        %1367 = vmatprep.subr.mxu0 0.0
        %1368 = vmatpush1.msra.mxu0 %v1336
        %1369 = vmatprep.subr.mxu0 0.0
        %1370 = vmatpush1.msra.mxu0 %v1337
        %1371 = vmatprep.subr.mxu0 0.0
        %1372 = vmatpush1.msra.mxu0 %v1338
        %1373 = vmatprep.subr.mxu0 0.0
        %1374 = vmatpush1.msra.mxu0 %v1339
        %1375 = vmatprep.subr.mxu0 0.0
        %1376 = vmatpush1.msra.mxu0 0.0
        %1377 = vmatprep.subr.mxu0 0.0
        %1378 = vmatpush1.msra.mxu0 0.0
        %1379 = vmatprep.subr.mxu0 0.0
        %1380 = vmatpush1.msra.mxu0 0.0
        %1381 = vmatprep.subr.mxu0 0.0
        %1382 = vmatpush1.msra.mxu0 0.0
        %1383 = vmatprep.subr.mxu0 0.0
        %1384 = vmatpush1.msra.mxu0 0.0
        %1385 = vmatprep.subr.mxu0 0.0
        %1386 = vmatpush1.msra.mxu0 0.0
        %1387 = vmatprep.subr.mxu0 0.0
        %1388 = vmatpush1.msra.mxu0 0.0
        %1389 = vmatprep.subr.mxu0 0.0
        %1390 = vmatpush1.msra.mxu0 0.0
        %1391 = vmatprep.subr.mxu0 0.0
        %1392 = vmatpush1.msra.mxu0 0.0
        %1393 = vmatprep.subr.mxu0 0.0
        %1394 = vmatpush1.msra.mxu0 0.0
        %1395 = vmatprep.subr.mxu0 0.0
        %1396 = vmatpush1.msra.mxu0 0.0
        %1397 = vmatprep.subr.mxu0 0.0
        %1398 = vmatpush1.msra.mxu0 0.0
        %1399 = vmatprep.subr.mxu0 0.0
        %1400 = vmatpush1.msra.mxu0 0.0
        %1401 = vmatprep.subr.mxu0 0.0
        %1402 = vmatpush1.msra.mxu0 0.0
        %1403 = vmatprep.subr.mxu0 0.0
        %1404 = vmatpush1.msra.mxu0 0.0
        %1405 = vmatprep.subr.mxu0 0.0
        %1406 = vmatpush1.msra.mxu0 0.0
        %1407 = vmatprep.subr.mxu0 0.0
        %1408 = vmatpush1.msra.mxu0 0.0
        %1409 = vmatprep.subr.mxu0 0.0
        %1410 = vmatpush1.msra.mxu0 0.0
        %1411 = vmatprep.subr.mxu0 0.0
        %1412 = vmatpush1.msra.mxu0 0.0
        %1413 = vmatprep.subr.mxu0 0.0
        %1414 = vmatpush1.msra.mxu0 0.0
        %1415 = vmatprep.mubr.f32.mxu0 0.0
        %1416 = vmatmul.mubr.f32.gmra.mrb[0].mxu0 %v1349
        %v1417 = vpop.f32.mrb[0].mxu0
        %v1418 = vadd.f32 %v1345, %v1417
        %v1419 = vpop.f32.mrb[0].mxu0
        %1420 = vdwg.mxu0
        %v1421 = vmax.f32 %v1418, 0.0
        %v1422 = vsel %vm1324, %v1421, 0.0
        %1423 = vadd.xlane.f32.xlu0 %v1422
        %v1424 = vpop.xlane.xlu0 %1423
        %v1425 = vrcp.pop 32.0
        %v1426 = vmul.f32 %v1424, %v1425
        %v1427 = vmul.f32 %v1421, %v1421
        %v1428 = vsel %vm1324, %v1427, 0.0
        %1429 = vadd.xlane.f32.xlu0 %v1428
        %v1430 = vpop.xlane.xlu0 %1429
        %v1431 = vmul.f32 %v1430, %v1425
        %v1432 = vmul.f32 %v1426, %v1426
        %v1433 = vsub.f32 %v1431, %v1432
        %v1434 = vsub.f32 %v1421, %v1426
        %v1435 = vadd.f32 %v1433, 1e-05
        %v1436 = vrsqrt.pop %v1435
        %v1437 = vmul.f32 %v1434, %v1436
        %v1438 = vld [vmem:[%s9] sm:$0x1]
        %v1440 = vlaneseq
        %v1441 = vshrl.u32 %v1440, 7
        %v1442 = vsub.s32 0, %v1441
        %v1443 = vrot.slane %v1438, %v1442
        %v1445 = vmul.f32 %v1437, %v1443
        %v1446 = vld [vmem:[%s11] sm:$0x1]
        %v1448 = vlaneseq
        %v1449 = vshrl.u32 %v1448, 7
        %v1450 = vsub.s32 0, %v1449
        %v1451 = vrot.slane %v1446, %v1450
        %v1453 = vadd.f32 %v1445, %v1451
        %v1455 = vrot.slane %v1453, 7
        %v1457 = vsel %vm1311, 0.0, %v1455
        %v1458 = vrot.slane %v1453, 1
        %v1460 = vsel %vm1315, %v1458, 0.0
        %1461 = vrot.lane.b32.xlu0 %v1453, 32
        %v1462 = vpop.permute.xlu0 %1461
        %1465 = vrot.lane.b32.xlu0 %v1460, 64
        %v1466 = vpop.permute.xlu0 %1465
        %v1468 = vsel %vm1324, %v1457, %v1462
        %v1469 = vsel %vm1326, %v1468, %v1466
        %v1470 = vld [vmem:[%s13] sm:$0xff]
        %v1471 = vld [vmem:[%s13 + $0x8] sm:$0xff]
        %v1472 = vld [vmem:[%s13 + $0x10] sm:$0xff]
        %v1473 = vld [vmem:[%s13 + $0x18] sm:$0xff]
        %v1474 = vld [vmem:[%s13 + $0x20] sm:$0xff]
        %v1475 = vld [vmem:[%s13 + $0x28] sm:$0xff]
        %v1476 = vld [vmem:[%s13 + $0x30] sm:$0xff]
        %v1477 = vld [vmem:[%s13 + $0x38] sm:$0xff]
        %v1478 = vld [vmem:[%s13 + $0x40] sm:$0xff]
        %v1479 = vld [vmem:[%s13 + $0x48] sm:$0xff]
        %v1480 = vld [vmem:[%s13 + $0x50] sm:$0xff]
        %v1481 = vld [vmem:[%s13 + $0x58] sm:$0xff]
        %v1482 = vld [vmem:[%s15] sm:$0x1]
        %v1484 = vlaneseq
        %v1485 = vshrl.u32 %v1484, 7
        %v1486 = vsub.s32 0, %v1485
        %v1487 = vrot.slane %v1482, %v1486
        %v1490 = vsel %vm1347, %v1469, 0
        %1492 = vmatprep.subr.mxu0 0.0
        %1493 = vmatpush1.msra.mxu0 %v1470
        %1494 = vmatprep.subr.mxu0 0.0
        %1495 = vmatpush1.msra.mxu0 %v1471
        %1496 = vmatprep.subr.mxu0 0.0
        %1497 = vmatpush1.msra.mxu0 %v1472
        %1498 = vmatprep.subr.mxu0 0.0
        %1499 = vmatpush1.msra.mxu0 %v1473
        %1500 = vmatprep.subr.mxu0 0.0
        %1501 = vmatpush1.msra.mxu0 %v1474
        %1502 = vmatprep.subr.mxu0 0.0
        %1503 = vmatpush1.msra.mxu0 %v1475
        %1504 = vmatprep.subr.mxu0 0.0
        %1505 = vmatpush1.msra.mxu0 %v1476
        %1506 = vmatprep.subr.mxu0 0.0
        %1507 = vmatpush1.msra.mxu0 %v1477
        %1508 = vmatprep.subr.mxu0 0.0
        %1509 = vmatpush1.msra.mxu0 %v1478
        %1510 = vmatprep.subr.mxu0 0.0
        %1511 = vmatpush1.msra.mxu0 %v1479
        %1512 = vmatprep.subr.mxu0 0.0
        %1513 = vmatpush1.msra.mxu0 %v1480
        %1514 = vmatprep.subr.mxu0 0.0
        %1515 = vmatpush1.msra.mxu0 %v1481
        %1516 = vmatprep.subr.mxu0 0.0
        %1517 = vmatpush1.msra.mxu0 0.0
        %1518 = vmatprep.subr.mxu0 0.0
        %1519 = vmatpush1.msra.mxu0 0.0
        %1520 = vmatprep.subr.mxu0 0.0
        %1521 = vmatpush1.msra.mxu0 0.0
        %1522 = vmatprep.subr.mxu0 0.0
        %1523 = vmatpush1.msra.mxu0 0.0
        %1524 = vmatprep.subr.mxu0 0.0
        %1525 = vmatpush1.msra.mxu0 0.0
        %1526 = vmatprep.subr.mxu0 0.0
        %1527 = vmatpush1.msra.mxu0 0.0
        %1528 = vmatprep.subr.mxu0 0.0
        %1529 = vmatpush1.msra.mxu0 0.0
        %1530 = vmatprep.subr.mxu0 0.0
        %1531 = vmatpush1.msra.mxu0 0.0
        %1532 = vmatprep.subr.mxu0 0.0
        %1533 = vmatpush1.msra.mxu0 0.0
        %1534 = vmatprep.subr.mxu0 0.0
        %1535 = vmatpush1.msra.mxu0 0.0
        %1536 = vmatprep.subr.mxu0 0.0
        %1537 = vmatpush1.msra.mxu0 0.0
        %1538 = vmatprep.subr.mxu0 0.0
        %1539 = vmatpush1.msra.mxu0 0.0
        %1540 = vmatprep.subr.mxu0 0.0
        %1541 = vmatpush1.msra.mxu0 0.0
        %1542 = vmatprep.subr.mxu0 0.0
        %1543 = vmatpush1.msra.mxu0 0.0
        %1544 = vmatprep.subr.mxu0 0.0
        %1545 = vmatpush1.msra.mxu0 0.0
        %1546 = vmatprep.subr.mxu0 0.0
        %1547 = vmatpush1.msra.mxu0 0.0
        %1548 = vmatprep.subr.mxu0 0.0
        %1549 = vmatpush1.msra.mxu0 0.0
        %1550 = vmatprep.subr.mxu0 0.0
        %1551 = vmatpush1.msra.mxu0 0.0
        %1552 = vmatprep.subr.mxu0 0.0
        %1553 = vmatpush1.msra.mxu0 0.0
        %1554 = vmatprep.subr.mxu0 0.0
        %1555 = vmatpush1.msra.mxu0 0.0
        %1556 = vmatprep.mubr.f32.mxu0 0.0
        %1557 = vmatmul.mubr.f32.gmra.mrb[0].mxu0 %v1490
        %v1558 = vpop.f32.mrb[0].mxu0
        %v1559 = vadd.f32 %v1487, %v1558
        %v1560 = vpop.f32.mrb[0].mxu0
        %1561 = vdwg.mxu0
        %v1562 = vmax.f32 %v1559, 0.0
        %v1563 = vsel %vm1324, %v1562, 0.0
        %1564 = vadd.xlane.f32.xlu0 %v1563
        %v1565 = vpop.xlane.xlu0 %1564
        %v1566 = vmul.f32 %v1565, %v1425
        %v1567 = vmul.f32 %v1562, %v1562
        %v1568 = vsel %vm1324, %v1567, 0.0
        %1569 = vadd.xlane.f32.xlu0 %v1568
        %v1570 = vpop.xlane.xlu0 %1569
        %v1571 = vmul.f32 %v1570, %v1425
        %v1572 = vmul.f32 %v1566, %v1566
        %v1573 = vsub.f32 %v1571, %v1572
        %v1574 = vsub.f32 %v1562, %v1566
        %v1575 = vadd.f32 %v1573, 1e-05
        %v1576 = vrsqrt.pop %v1575
        %v1577 = vmul.f32 %v1574, %v1576
        %v1578 = vld [vmem:[%s17] sm:$0x1]
        %v1580 = vlaneseq
        %v1581 = vshrl.u32 %v1580, 7
        %v1582 = vsub.s32 0, %v1581
        %v1583 = vrot.slane %v1578, %v1582
        %v1585 = vmul.f32 %v1577, %v1583
        %v1586 = vld [vmem:[%s19] sm:$0x1]
        %v1588 = vlaneseq
        %v1589 = vshrl.u32 %v1588, 7
        %v1590 = vsub.s32 0, %v1589
        %v1591 = vrot.slane %v1586, %v1590
        %v1593 = vadd.f32 %v1585, %v1591
        %v1594 = vld [vmem:[%s21] sm:$0xff]
        %v1595 = vld [vmem:[%s21 + $0x8] sm:$0xff]
        %v1596 = vld [vmem:[%s21 + $0x10] sm:$0xff]
        %v1597 = vld [vmem:[%s21 + $0x18] sm:$0xff]
        %v1598 = vld [vmem:[#allocation2] sm:$0x1]
        %v1600 = vlaneseq
        %v1601 = vshrl.u32 %v1600, 7
        %v1602 = vsub.s32 0, %v1601
        %v1603 = vrot.slane %v1598, %v1602
        %v1606 = vsel %vm1324, %v1593, 0
        %1608 = vmatprep.subr.mxu0 0.0
        %1609 = vmatpush1.msra.mxu0 %v1594
        %1610 = vmatprep.subr.mxu0 0.0
        %1611 = vmatpush1.msra.mxu0 %v1595
        %1612 = vmatprep.subr.mxu0 0.0
        %1613 = vmatpush1.msra.mxu0 %v1596
        %1614 = vmatprep.subr.mxu0 0.0
        %1615 = vmatpush1.msra.mxu0 %v1597
        %1616 = vmatprep.subr.mxu0 0.0
        %1617 = vmatpush1.msra.mxu0 0.0
        %1618 = vmatprep.subr.mxu0 0.0
        %1619 = vmatpush1.msra.mxu0 0.0
        %1620 = vmatprep.subr.mxu0 0.0
        %1621 = vmatpush1.msra.mxu0 0.0
        %1622 = vmatprep.subr.mxu0 0.0
        %1623 = vmatpush1.msra.mxu0 0.0
        %1624 = vmatprep.subr.mxu0 0.0
        %1625 = vmatpush1.msra.mxu0 0.0
        %1626 = vmatprep.subr.mxu0 0.0
        %1627 = vmatpush1.msra.mxu0 0.0
        %1628 = vmatprep.subr.mxu0 0.0
        %1629 = vmatpush1.msra.mxu0 0.0
        %1630 = vmatprep.subr.mxu0 0.0
        %1631 = vmatpush1.msra.mxu0 0.0
        %1632 = vmatprep.subr.mxu0 0.0
        %1633 = vmatpush1.msra.mxu0 0.0
        %1634 = vmatprep.subr.mxu0 0.0
        %1635 = vmatpush1.msra.mxu0 0.0
        %1636 = vmatprep.subr.mxu0 0.0
        %1637 = vmatpush1.msra.mxu0 0.0
        %1638 = vmatprep.subr.mxu0 0.0
        %1639 = vmatpush1.msra.mxu0 0.0
        %1640 = vmatprep.subr.mxu0 0.0
        %1641 = vmatpush1.msra.mxu0 0.0
        %1642 = vmatprep.subr.mxu0 0.0
        %1643 = vmatpush1.msra.mxu0 0.0
        %1644 = vmatprep.subr.mxu0 0.0
        %1645 = vmatpush1.msra.mxu0 0.0
        %1646 = vmatprep.subr.mxu0 0.0
        %1647 = vmatpush1.msra.mxu0 0.0
        %1648 = vmatprep.subr.mxu0 0.0
        %1649 = vmatpush1.msra.mxu0 0.0
        %1650 = vmatprep.subr.mxu0 0.0
        %1651 = vmatpush1.msra.mxu0 0.0
        %1652 = vmatprep.subr.mxu0 0.0
        %1653 = vmatpush1.msra.mxu0 0.0
        %1654 = vmatprep.subr.mxu0 0.0
        %1655 = vmatpush1.msra.mxu0 0.0
        %1656 = vmatprep.subr.mxu0 0.0
        %1657 = vmatpush1.msra.mxu0 0.0
        %1658 = vmatprep.subr.mxu0 0.0
        %1659 = vmatpush1.msra.mxu0 0.0
        %1660 = vmatprep.subr.mxu0 0.0
        %1661 = vmatpush1.msra.mxu0 0.0
        %1662 = vmatprep.subr.mxu0 0.0
        %1663 = vmatpush1.msra.mxu0 0.0
        %1664 = vmatprep.subr.mxu0 0.0
        %1665 = vmatpush1.msra.mxu0 0.0
        %1666 = vmatprep.subr.mxu0 0.0
        %1667 = vmatpush1.msra.mxu0 0.0
        %1668 = vmatprep.subr.mxu0 0.0
        %1669 = vmatpush1.msra.mxu0 0.0
        %1670 = vmatprep.subr.mxu0 0.0
        %1671 = vmatpush1.msra.mxu0 0.0
        %1672 = vmatprep.mubr.f32.mxu0 0.0
        %1673 = vmatmul.mubr.f32.gmra.mrb[0].mxu0 %v1606
        %v1674 = vpop.f32.mrb[0].mxu0
        %v1675 = vadd.f32 %v1603, %v1674
        %v1676 = vpop.f32.mrb[0].mxu0
        %1677 = vdwg.mxu0
        %vm1678 = vcmp.gt.f32.partialorder %v1307, 0.5
        %v1679 = vsel %vm1678, 0.0, %v1675
        %vm1680 = vcmask 7168
        %1681 = vst.msk [vmem:[%s1298] sm:$0xff] %vm1680, %v1679
        %v1682 = vld [vmem:[%s25] sm:$0xff]
        %v1683 = vld [vmem:[%s25 + $0x8] sm:$0xff]
        %v1684 = vld [vmem:[%s25 + $0x10] sm:$0xff]
        %v1685 = vld [vmem:[%s25 + $0x18] sm:$0xff]
        %v1686 = vld [vmem:[%s25 + $0x20] sm:$0xff]
        %v1687 = vld [vmem:[%s25 + $0x28] sm:$0xff]
        %v1688 = vld [vmem:[%s25 + $0x30] sm:$0xff]
        %v1689 = vld [vmem:[%s25 + $0x38] sm:$0xff]
        %v1690 = vld [vmem:[%s25 + $0x40] sm:$0xff]
        %v1691 = vld [vmem:[%s25 + $0x48] sm:$0xff]
        %v1692 = vld [vmem:[%s25 + $0x50] sm:$0xff]
        %v1693 = vld [vmem:[%s25 + $0x58] sm:$0xff]
        %v1694 = vld [vmem:[%s27] sm:$0x1]
        %v1696 = vlaneseq
        %v1697 = vshrl.u32 %v1696, 7
        %v1698 = vsub.s32 0, %v1697
        %v1699 = vrot.slane %v1694, %v1698
        %1701 = vmatprep.subr.mxu0 0.0
        %1702 = vmatpush1.msra.mxu0 %v1682
        %1703 = vmatprep.subr.mxu0 0.0
        %1704 = vmatpush1.msra.mxu0 %v1683
        %1705 = vmatprep.subr.mxu0 0.0
        %1706 = vmatpush1.msra.mxu0 %v1684
        %1707 = vmatprep.subr.mxu0 0.0
        %1708 = vmatpush1.msra.mxu0 %v1685
        %1709 = vmatprep.subr.mxu0 0.0
        %1710 = vmatpush1.msra.mxu0 %v1686
        %1711 = vmatprep.subr.mxu0 0.0
        %1712 = vmatpush1.msra.mxu0 %v1687
        %1713 = vmatprep.subr.mxu0 0.0
        %1714 = vmatpush1.msra.mxu0 %v1688
        %1715 = vmatprep.subr.mxu0 0.0
        %1716 = vmatpush1.msra.mxu0 %v1689
        %1717 = vmatprep.subr.mxu0 0.0
        %1718 = vmatpush1.msra.mxu0 %v1690
        %1719 = vmatprep.subr.mxu0 0.0
        %1720 = vmatpush1.msra.mxu0 %v1691
        %1721 = vmatprep.subr.mxu0 0.0
        %1722 = vmatpush1.msra.mxu0 %v1692
        %1723 = vmatprep.subr.mxu0 0.0
        %1724 = vmatpush1.msra.mxu0 %v1693
        %1725 = vmatprep.subr.mxu0 0.0
        %1726 = vmatpush1.msra.mxu0 0.0
        %1727 = vmatprep.subr.mxu0 0.0
        %1728 = vmatpush1.msra.mxu0 0.0
        %1729 = vmatprep.subr.mxu0 0.0
        %1730 = vmatpush1.msra.mxu0 0.0
        %1731 = vmatprep.subr.mxu0 0.0
        %1732 = vmatpush1.msra.mxu0 0.0
        %1733 = vmatprep.subr.mxu0 0.0
        %1734 = vmatpush1.msra.mxu0 0.0
        %1735 = vmatprep.subr.mxu0 0.0
        %1736 = vmatpush1.msra.mxu0 0.0
        %1737 = vmatprep.subr.mxu0 0.0
        %1738 = vmatpush1.msra.mxu0 0.0
        %1739 = vmatprep.subr.mxu0 0.0
        %1740 = vmatpush1.msra.mxu0 0.0
        %1741 = vmatprep.subr.mxu0 0.0
        %1742 = vmatpush1.msra.mxu0 0.0
        %1743 = vmatprep.subr.mxu0 0.0
        %1744 = vmatpush1.msra.mxu0 0.0
        %1745 = vmatprep.subr.mxu0 0.0
        %1746 = vmatpush1.msra.mxu0 0.0
        %1747 = vmatprep.subr.mxu0 0.0
        %1748 = vmatpush1.msra.mxu0 0.0
        %1749 = vmatprep.subr.mxu0 0.0
        %1750 = vmatpush1.msra.mxu0 0.0
        %1751 = vmatprep.subr.mxu0 0.0
        %1752 = vmatpush1.msra.mxu0 0.0
        %1753 = vmatprep.subr.mxu0 0.0
        %1754 = vmatpush1.msra.mxu0 0.0
        %1755 = vmatprep.subr.mxu0 0.0
        %1756 = vmatpush1.msra.mxu0 0.0
        %1757 = vmatprep.subr.mxu0 0.0
        %1758 = vmatpush1.msra.mxu0 0.0
        %1759 = vmatprep.subr.mxu0 0.0
        %1760 = vmatpush1.msra.mxu0 0.0
        %1761 = vmatprep.subr.mxu0 0.0
        %1762 = vmatpush1.msra.mxu0 0.0
        %1763 = vmatprep.subr.mxu0 0.0
        %1764 = vmatpush1.msra.mxu0 0.0
        %1765 = vmatprep.mubr.f32.mxu0 0.0
        %1766 = vmatmul.mubr.f32.gmra.mrb[0].mxu0 %v1349
        %v1767 = vpop.f32.mrb[0].mxu0
        %v1768 = vadd.f32 %v1699, %v1767
        %v1769 = vpop.f32.mrb[0].mxu0
        %1770 = vdwg.mxu0
        %v1771 = vmax.f32 %v1768, 0.0
        %v1772 = vsel %vm1324, %v1771, 0.0
        %1773 = vadd.xlane.f32.xlu0 %v1772
        %v1774 = vpop.xlane.xlu0 %1773
        %v1775 = vmul.f32 %v1774, %v1425
        %v1776 = vmul.f32 %v1771, %v1771
        %v1777 = vsel %vm1324, %v1776, 0.0
        %1778 = vadd.xlane.f32.xlu0 %v1777
        %v1779 = vpop.xlane.xlu0 %1778
        %v1780 = vmul.f32 %v1779, %v1425
        %v1781 = vmul.f32 %v1775, %v1775
        %v1782 = vsub.f32 %v1780, %v1781
        %v1783 = vsub.f32 %v1771, %v1775
        %v1784 = vadd.f32 %v1782, 1e-05
        %v1785 = vrsqrt.pop %v1784
        %v1786 = vmul.f32 %v1783, %v1785
        %v1787 = vld [vmem:[%s29] sm:$0x1]
        %v1789 = vlaneseq
        %v1790 = vshrl.u32 %v1789, 7
        %v1791 = vsub.s32 0, %v1790
        %v1792 = vrot.slane %v1787, %v1791
        %v1794 = vmul.f32 %v1786, %v1792
        %v1795 = vld [vmem:[%s31] sm:$0x1]
        %v1797 = vlaneseq
        %v1798 = vshrl.u32 %v1797, 7
        %v1799 = vsub.s32 0, %v1798
        %v1800 = vrot.slane %v1795, %v1799
        %v1802 = vadd.f32 %v1794, %v1800
        %v1804 = vrot.slane %v1802, 7
        %v1806 = vsel %vm1311, 0.0, %v1804
        %v1807 = vrot.slane %v1802, 1
        %v1809 = vsel %vm1315, %v1807, 0.0
        %1810 = vrot.lane.b32.xlu0 %v1802, 32
        %v1811 = vpop.permute.xlu0 %1810
        %1814 = vrot.lane.b32.xlu0 %v1809, 64
        %v1815 = vpop.permute.xlu0 %1814
        %v1817 = vsel %vm1324, %v1806, %v1811
        %v1818 = vsel %vm1326, %v1817, %v1815
        %v1819 = vld [vmem:[%s33] sm:$0xff]
        %v1820 = vld [vmem:[%s33 + $0x8] sm:$0xff]
        %v1821 = vld [vmem:[%s33 + $0x10] sm:$0xff]
        %v1822 = vld [vmem:[%s33 + $0x18] sm:$0xff]
        %v1823 = vld [vmem:[%s33 + $0x20] sm:$0xff]
        %v1824 = vld [vmem:[%s33 + $0x28] sm:$0xff]
        %v1825 = vld [vmem:[%s33 + $0x30] sm:$0xff]
        %v1826 = vld [vmem:[%s33 + $0x38] sm:$0xff]
        %v1827 = vld [vmem:[%s33 + $0x40] sm:$0xff]
        %v1828 = vld [vmem:[%s33 + $0x48] sm:$0xff]
        %v1829 = vld [vmem:[%s33 + $0x50] sm:$0xff]
        %v1830 = vld [vmem:[%s33 + $0x58] sm:$0xff]
        %v1831 = vld [vmem:[%s35] sm:$0x1]
        %v1833 = vlaneseq
        %v1834 = vshrl.u32 %v1833, 7
        %v1835 = vsub.s32 0, %v1834
        %v1836 = vrot.slane %v1831, %v1835
        %v1839 = vsel %vm1347, %v1818, 0
        %1841 = vmatprep.subr.mxu0 0.0
        %1842 = vmatpush1.msra.mxu0 %v1819
        %1843 = vmatprep.subr.mxu0 0.0
        %1844 = vmatpush1.msra.mxu0 %v1820
        %1845 = vmatprep.subr.mxu0 0.0
        %1846 = vmatpush1.msra.mxu0 %v1821
        %1847 = vmatprep.subr.mxu0 0.0
        %1848 = vmatpush1.msra.mxu0 %v1822
        %1849 = vmatprep.subr.mxu0 0.0
        %1850 = vmatpush1.msra.mxu0 %v1823
        %1851 = vmatprep.subr.mxu0 0.0
        %1852 = vmatpush1.msra.mxu0 %v1824
        %1853 = vmatprep.subr.mxu0 0.0
        %1854 = vmatpush1.msra.mxu0 %v1825
        %1855 = vmatprep.subr.mxu0 0.0
        %1856 = vmatpush1.msra.mxu0 %v1826
        %1857 = vmatprep.subr.mxu0 0.0
        %1858 = vmatpush1.msra.mxu0 %v1827
        %1859 = vmatprep.subr.mxu0 0.0
        %1860 = vmatpush1.msra.mxu0 %v1828
        %1861 = vmatprep.subr.mxu0 0.0
        %1862 = vmatpush1.msra.mxu0 %v1829
        %1863 = vmatprep.subr.mxu0 0.0
        %1864 = vmatpush1.msra.mxu0 %v1830
        %1865 = vmatprep.subr.mxu0 0.0
        %1866 = vmatpush1.msra.mxu0 0.0
        %1867 = vmatprep.subr.mxu0 0.0
        %1868 = vmatpush1.msra.mxu0 0.0
        %1869 = vmatprep.subr.mxu0 0.0
        %1870 = vmatpush1.msra.mxu0 0.0
        %1871 = vmatprep.subr.mxu0 0.0
        %1872 = vmatpush1.msra.mxu0 0.0
        %1873 = vmatprep.subr.mxu0 0.0
        %1874 = vmatpush1.msra.mxu0 0.0
        %1875 = vmatprep.subr.mxu0 0.0
        %1876 = vmatpush1.msra.mxu0 0.0
        %1877 = vmatprep.subr.mxu0 0.0
        %1878 = vmatpush1.msra.mxu0 0.0
        %1879 = vmatprep.subr.mxu0 0.0
        %1880 = vmatpush1.msra.mxu0 0.0
        %1881 = vmatprep.subr.mxu0 0.0
        %1882 = vmatpush1.msra.mxu0 0.0
        %1883 = vmatprep.subr.mxu0 0.0
        %1884 = vmatpush1.msra.mxu0 0.0
        %1885 = vmatprep.subr.mxu0 0.0
        %1886 = vmatpush1.msra.mxu0 0.0
        %1887 = vmatprep.subr.mxu0 0.0
        %1888 = vmatpush1.msra.mxu0 0.0
        %1889 = vmatprep.subr.mxu0 0.0
        %1890 = vmatpush1.msra.mxu0 0.0
        %1891 = vmatprep.subr.mxu0 0.0
        %1892 = vmatpush1.msra.mxu0 0.0
        %1893 = vmatprep.subr.mxu0 0.0
        %1894 = vmatpush1.msra.mxu0 0.0
        %1895 = vmatprep.subr.mxu0 0.0
        %1896 = vmatpush1.msra.mxu0 0.0
        %1897 = vmatprep.subr.mxu0 0.0
        %1898 = vmatpush1.msra.mxu0 0.0
        %1899 = vmatprep.subr.mxu0 0.0
        %1900 = vmatpush1.msra.mxu0 0.0
        %1901 = vmatprep.subr.mxu0 0.0
        %1902 = vmatpush1.msra.mxu0 0.0
        %1903 = vmatprep.subr.mxu0 0.0
        %1904 = vmatpush1.msra.mxu0 0.0
        %1905 = vmatprep.mubr.f32.mxu0 0.0
        %1906 = vmatmul.mubr.f32.gmra.mrb[0].mxu0 %v1839
        %v1907 = vpop.f32.mrb[0].mxu0
        %v1908 = vadd.f32 %v1836, %v1907
        %v1909 = vpop.f32.mrb[0].mxu0
        %1910 = vdwg.mxu0
        %v1911 = vmax.f32 %v1908, 0.0
        %v1912 = vsel %vm1324, %v1911, 0.0
        %1913 = vadd.xlane.f32.xlu0 %v1912
        %v1914 = vpop.xlane.xlu0 %1913
        %v1915 = vmul.f32 %v1914, %v1425
        %v1916 = vmul.f32 %v1911, %v1911
        %v1917 = vsel %vm1324, %v1916, 0.0
        %1918 = vadd.xlane.f32.xlu0 %v1917
        %v1919 = vpop.xlane.xlu0 %1918
        %v1920 = vmul.f32 %v1919, %v1425
        %v1921 = vmul.f32 %v1915, %v1915
        %v1922 = vsub.f32 %v1920, %v1921
        %v1923 = vsub.f32 %v1911, %v1915
        %v1924 = vadd.f32 %v1922, 1e-05
        %v1925 = vrsqrt.pop %v1924
        %v1926 = vmul.f32 %v1923, %v1925
        %v1927 = vld [vmem:[%s37] sm:$0x1]
        %v1929 = vlaneseq
        %v1930 = vshrl.u32 %v1929, 7
        %v1931 = vsub.s32 0, %v1930
        %v1932 = vrot.slane %v1927, %v1931
        %v1934 = vmul.f32 %v1926, %v1932
        %v1935 = vld [vmem:[%s39] sm:$0x1]
        %v1937 = vlaneseq
        %v1938 = vshrl.u32 %v1937, 7
        %v1939 = vsub.s32 0, %v1938
        %v1940 = vrot.slane %v1935, %v1939
        %v1942 = vadd.f32 %v1934, %v1940
        %v1943 = vld [vmem:[%s41] sm:$0xff]
        %v1944 = vld [vmem:[%s41 + $0x8] sm:$0xff]
        %v1945 = vld [vmem:[%s41 + $0x10] sm:$0xff]
        %v1946 = vld [vmem:[%s41 + $0x18] sm:$0xff]
        %v1947 = vld [vmem:[#allocation3] sm:$0x1]
        %v1949 = vlaneseq
        %v1950 = vshrl.u32 %v1949, 7
        %v1951 = vsub.s32 0, %v1950
        %v1952 = vrot.slane %v1947, %v1951
        %v1955 = vsel %vm1324, %v1942, 0
        %1957 = vmatprep.subr.mxu0 0.0
        %1958 = vmatpush1.msra.mxu0 %v1943
        %1959 = vmatprep.subr.mxu0 0.0
        %1960 = vmatpush1.msra.mxu0 %v1944
        %1961 = vmatprep.subr.mxu0 0.0
        %1962 = vmatpush1.msra.mxu0 %v1945
        %1963 = vmatprep.subr.mxu0 0.0
        %1964 = vmatpush1.msra.mxu0 %v1946
        %1965 = vmatprep.subr.mxu0 0.0
        %1966 = vmatpush1.msra.mxu0 0.0
        %1967 = vmatprep.subr.mxu0 0.0
        %1968 = vmatpush1.msra.mxu0 0.0
        %1969 = vmatprep.subr.mxu0 0.0
        %1970 = vmatpush1.msra.mxu0 0.0
        %1971 = vmatprep.subr.mxu0 0.0
        %1972 = vmatpush1.msra.mxu0 0.0
        %1973 = vmatprep.subr.mxu0 0.0
        %1974 = vmatpush1.msra.mxu0 0.0
        %1975 = vmatprep.subr.mxu0 0.0
        %1976 = vmatpush1.msra.mxu0 0.0
        %1977 = vmatprep.subr.mxu0 0.0
        %1978 = vmatpush1.msra.mxu0 0.0
        %1979 = vmatprep.subr.mxu0 0.0
        %1980 = vmatpush1.msra.mxu0 0.0
        %1981 = vmatprep.subr.mxu0 0.0
        %1982 = vmatpush1.msra.mxu0 0.0
        %1983 = vmatprep.subr.mxu0 0.0
        %1984 = vmatpush1.msra.mxu0 0.0
        %1985 = vmatprep.subr.mxu0 0.0
        %1986 = vmatpush1.msra.mxu0 0.0
        %1987 = vmatprep.subr.mxu0 0.0
        %1988 = vmatpush1.msra.mxu0 0.0
        %1989 = vmatprep.subr.mxu0 0.0
        %1990 = vmatpush1.msra.mxu0 0.0
        %1991 = vmatprep.subr.mxu0 0.0
        %1992 = vmatpush1.msra.mxu0 0.0
        %1993 = vmatprep.subr.mxu0 0.0
        %1994 = vmatpush1.msra.mxu0 0.0
        %1995 = vmatprep.subr.mxu0 0.0
        %1996 = vmatpush1.msra.mxu0 0.0
        %1997 = vmatprep.subr.mxu0 0.0
        %1998 = vmatpush1.msra.mxu0 0.0
        %1999 = vmatprep.subr.mxu0 0.0
        %2000 = vmatpush1.msra.mxu0 0.0
        %2001 = vmatprep.subr.mxu0 0.0
        %2002 = vmatpush1.msra.mxu0 0.0
        %2003 = vmatprep.subr.mxu0 0.0
        %2004 = vmatpush1.msra.mxu0 0.0
        %2005 = vmatprep.subr.mxu0 0.0
        %2006 = vmatpush1.msra.mxu0 0.0
        %2007 = vmatprep.subr.mxu0 0.0
        %2008 = vmatpush1.msra.mxu0 0.0
        %2009 = vmatprep.subr.mxu0 0.0
        %2010 = vmatpush1.msra.mxu0 0.0
        %2011 = vmatprep.subr.mxu0 0.0
        %2012 = vmatpush1.msra.mxu0 0.0
        %2013 = vmatprep.subr.mxu0 0.0
        %2014 = vmatpush1.msra.mxu0 0.0
        %2015 = vmatprep.subr.mxu0 0.0
        %2016 = vmatpush1.msra.mxu0 0.0
        %2017 = vmatprep.subr.mxu0 0.0
        %2018 = vmatpush1.msra.mxu0 0.0
        %2019 = vmatprep.subr.mxu0 0.0
        %2020 = vmatpush1.msra.mxu0 0.0
        %2021 = vmatprep.mubr.f32.mxu0 0.0
        %2022 = vmatmul.mubr.f32.gmra.mrb[0].mxu0 %v1955
        %v2023 = vpop.f32.mrb[0].mxu0
        %v2024 = vadd.f32 %v1952, %v2023
        %v2025 = vpop.f32.mrb[0].mxu0
        %2026 = vdwg.mxu0
        %v2027 = vsel %vm1678, 0.0, %v2024
        %2028 = vst.msk [vmem:[%s1290] sm:$0xff] %vm1680, %v2027
        %v2029 = vld [vmem:[%s65] sm:$0x3]
        %v2031 = vlaneseq
        %v2032 = vshrl.u32 %v2031, 7
        %v2033 = vsub.s32 0, %v2032
        %v2034 = vrot.slane %v2029, %v2033
        %v2035 = vlaneseq
        %v2036 = vshrl.u32 %v2035, 7
        %v2037 = vsub.s32 1, %v2036
        %v2038 = vrot.slane %v2029, %v2037
        %2042 = vset.pattern.permute.xlu0 0
        %2043 = vperm.xlu0 %2042, %v2027
        %v2044 = vpop.permute.xlu0 %2043
        %vm2046 = vcmp.lt.f32.partialorder %v2034, %v2044
        %vm2047 = vcmp.lt.f32.partialorder %v2038, %v2044
        %v2048 = vsel %vm2046, 1, 0
        %v2049 = vsel %vm2047, 1, 0
        %vm2050 = vcmask 1039360
        %v2051 = vsel %vm2050, %v2049, 0
        %v2052 = vadd.s32 %v2048, %v2051
        %v2053 = vand.u32 %v2052, 65535
        %v2054 = vshrl.u32 %v2052, 16
        %v2055 = vcvt.s32.f32 %v2053
        %v2056 = vcvt.s32.f32 %v2054
        %2057 = vadd.xlane.f32.xlu0 %v2055
        %v2058 = vpop.xlane.xlu0 %2057
        %2059 = vadd.xlane.f32.xlu0 %v2056
        %v2060 = vpop.xlane.xlu0 %2059
        %v2061 = vcvt.f32.s32 %v2058
        %v2062 = vcvt.f32.s32 %v2060
        %v2063 = vshll.u32 %v2062, 16
        %v2064 = vadd.s32 %v2063, %v2061
        %v2065 = vlaneseq
        %v2066 = vand.u32 %v2065, 127
        %v2067 = vadd.s32 %v2066, 128
        %vm2068 = vcmp.eq.s32.totalorder %v2066, %v2064
        %vm2069 = vcmp.eq.s32.totalorder %v2067, %v2064
        %v2070 = vsel %vm2068, 1, 0
        %v2071 = vsel %vm2069, 1, 0
        %v2072 = vcvt.s32.f32 %v2070
        %v2073 = vcvt.s32.f32 %v2071
        %v2074 = vld [vmem:[%s67] sm:$0xff]
        %v2075 = vld [vmem:[%s67 + $0x8] sm:$0xff]
        %v2076 = vld [vmem:[%s67 + $0x10] sm:$0xff]
        %v2077 = vld [vmem:[%s67 + $0x18] sm:$0xff]
        %v2078 = vld [vmem:[%s67 + $0x20] sm:$0xff]
        %v2079 = vld [vmem:[%s67 + $0x28] sm:$0xff]
        %v2080 = vld [vmem:[%s67 + $0x30] sm:$0xff]
        %v2081 = vld [vmem:[%s67 + $0x38] sm:$0xff]
        %v2082 = vld [vmem:[%s67 + $0x40] sm:$0xff]
        %v2083 = vld [vmem:[%s67 + $0x48] sm:$0xff]
        %v2084 = vld [vmem:[%s67 + $0x50] sm:$0xff]
        %v2085 = vld [vmem:[%s67 + $0x58] sm:$0xff]
        %v2086 = vld [vmem:[%s67 + $0x60] sm:$0xff]
        %v2087 = vld [vmem:[%s67 + $0x68] sm:$0xff]
        %v2088 = vld [vmem:[%s67 + $0x70] sm:$0xff]
        %v2089 = vld [vmem:[%s67 + $0x78] sm:$0xff]
        %v2090 = vld [vmem:[%s67 + $0x80] sm:$0xff]
        %v2091 = vld [vmem:[%s67 + $0x88] sm:$0xff]
        %v2092 = vld [vmem:[%s67 + $0x90] sm:$0xff]
        %v2093 = vld [vmem:[%s67 + $0x98] sm:$0xff]
        %v2094 = vld [vmem:[%s67 + $0xa0] sm:$0xff]
        %v2095 = vld [vmem:[%s67 + $0xa8] sm:$0xff]
        %v2096 = vld [vmem:[%s67 + $0xb0] sm:$0xff]
        %v2097 = vld [vmem:[%s67 + $0xb8] sm:$0xff]
        %v2098 = vld [vmem:[%s67 + $0xc0] sm:$0xff]
        %v2099 = vld [vmem:[%s67 + $0xc8] sm:$0xff]
        %v2100 = vld [vmem:[%s67 + $0xd0] sm:$0xff]
        %v2101 = vld [vmem:[%s67 + $0xd8] sm:$0xff]
        %v2102 = vld [vmem:[%s67 + $0xe0] sm:$0xff]
        %v2103 = vld [vmem:[%s67 + $0xe8] sm:$0xff]
        %v2104 = vld [vmem:[%s67 + $0xf0] sm:$0xff]
        %v2105 = vld [vmem:[%s67 + $0xf8] sm:$0xff]
        %2106 = vmatprep.subr.mxu0 0.0
        %2107 = vmatpush1.msra.mxu0 %v2074
        %2108 = vmatprep.subr.mxu0 0.0
        %2109 = vmatpush1.msra.mxu0 %v2075
        %2110 = vmatprep.subr.mxu0 0.0
        %2111 = vmatpush1.msra.mxu0 %v2076
        %2112 = vmatprep.subr.mxu0 0.0
        %2113 = vmatpush1.msra.mxu0 %v2077
        %2114 = vmatprep.subr.mxu0 0.0
        %2115 = vmatpush1.msra.mxu0 %v2078
        %2116 = vmatprep.subr.mxu0 0.0
        %2117 = vmatpush1.msra.mxu0 %v2079
        %2118 = vmatprep.subr.mxu0 0.0
        %2119 = vmatpush1.msra.mxu0 %v2080
        %2120 = vmatprep.subr.mxu0 0.0
        %2121 = vmatpush1.msra.mxu0 %v2081
        %2122 = vmatprep.subr.mxu0 0.0
        %2123 = vmatpush1.msra.mxu0 %v2082
        %2124 = vmatprep.subr.mxu0 0.0
        %2125 = vmatpush1.msra.mxu0 %v2083
        %2126 = vmatprep.subr.mxu0 0.0
        %2127 = vmatpush1.msra.mxu0 %v2084
        %2128 = vmatprep.subr.mxu0 0.0
        %2129 = vmatpush1.msra.mxu0 %v2085
        %2130 = vmatprep.subr.mxu0 0.0
        %2131 = vmatpush1.msra.mxu0 %v2086
        %2132 = vmatprep.subr.mxu0 0.0
        %2133 = vmatpush1.msra.mxu0 %v2087
        %2134 = vmatprep.subr.mxu0 0.0
        %2135 = vmatpush1.msra.mxu0 %v2088
        %2136 = vmatprep.subr.mxu0 0.0
        %2137 = vmatpush1.msra.mxu0 %v2089
        %2138 = vmatprep.subr.mxu0 0.0
        %2139 = vmatpush1.msra.mxu0 %v2090
        %2140 = vmatprep.subr.mxu0 0.0
        %2141 = vmatpush1.msra.mxu0 %v2091
        %2142 = vmatprep.subr.mxu0 0.0
        %2143 = vmatpush1.msra.mxu0 %v2092
        %2144 = vmatprep.subr.mxu0 0.0
        %2145 = vmatpush1.msra.mxu0 %v2093
        %2146 = vmatprep.subr.mxu0 0.0
        %2147 = vmatpush1.msra.mxu0 %v2094
        %2148 = vmatprep.subr.mxu0 0.0
        %2149 = vmatpush1.msra.mxu0 %v2095
        %2150 = vmatprep.subr.mxu0 0.0
        %2151 = vmatpush1.msra.mxu0 %v2096
        %2152 = vmatprep.subr.mxu0 0.0
        %2153 = vmatpush1.msra.mxu0 %v2097
        %2154 = vmatprep.subr.mxu0 0.0
        %2155 = vmatpush1.msra.mxu0 %v2098
        %2156 = vmatprep.subr.mxu0 0.0
        %2157 = vmatpush1.msra.mxu0 %v2099
        %2158 = vmatprep.subr.mxu0 0.0
        %2159 = vmatpush1.msra.mxu0 %v2100
        %2160 = vmatprep.subr.mxu0 0.0
        %2161 = vmatpush1.msra.mxu0 %v2101
        %2162 = vmatprep.subr.mxu0 0.0
        %2163 = vmatpush1.msra.mxu0 %v2102
        %2164 = vmatprep.subr.mxu0 0.0
        %2165 = vmatpush1.msra.mxu0 %v2103
        %2166 = vmatprep.subr.mxu0 0.0
        %2167 = vmatpush1.msra.mxu0 %v2104
        %2168 = vmatprep.subr.mxu0 0.0
        %2169 = vmatpush1.msra.mxu0 %v2105
        %2170 = vmatprep.mubr.f32.mxu0 %v2073
        %2171 = vmatmul.mubr.f32.gmra.mrb[0].mxu0 %v2072
        %v2172 = vpop.f32.mrb[0].mxu0
        %v2173 = vadd.f32 0.0, %v2172
        %v2174 = vpop.f32.mrb[0].mxu0
        %2175 = vdwg.mxu0
        %v2176 = vadd.f32 %v1306, %v2173
        %v2178 = vrot.slane %v2176, 7
        %v2180 = vsel %vm1311, 0.0, %v2178
        %v2181 = vrot.slane %v2176, 1
        %v2183 = vsel %vm1315, %v2181, 0.0
        %2184 = vrot.lane.b32.xlu0 %v2176, 32
        %v2185 = vpop.permute.xlu0 %2184
        %2188 = vrot.lane.b32.xlu0 %v2183, 64
        %v2189 = vpop.permute.xlu0 %2188
        %v2191 = vsel %vm1324, %v2180, %v2185
        %v2192 = vsel %vm1326, %v2191, %v2189
        %v2193 = vld [vmem:[%s45] sm:$0xff]
        %v2194 = vld [vmem:[%s45 + $0x8] sm:$0xff]
        %v2195 = vld [vmem:[%s45 + $0x10] sm:$0xff]
        %v2196 = vld [vmem:[%s45 + $0x18] sm:$0xff]
        %v2197 = vld [vmem:[%s45 + $0x20] sm:$0xff]
        %v2198 = vld [vmem:[%s45 + $0x28] sm:$0xff]
        %v2199 = vld [vmem:[%s45 + $0x30] sm:$0xff]
        %v2200 = vld [vmem:[%s45 + $0x38] sm:$0xff]
        %v2201 = vld [vmem:[%s45 + $0x40] sm:$0xff]
        %v2202 = vld [vmem:[%s45 + $0x48] sm:$0xff]
        %v2203 = vld [vmem:[%s45 + $0x50] sm:$0xff]
        %v2204 = vld [vmem:[%s45 + $0x58] sm:$0xff]
        %v2205 = vld [vmem:[%s47] sm:$0x1]
        %v2207 = vlaneseq
        %v2208 = vshrl.u32 %v2207, 7
        %v2209 = vsub.s32 0, %v2208
        %v2210 = vrot.slane %v2205, %v2209
        %v2213 = vsel %vm1347, %v2192, 0
        %2215 = vmatprep.subr.mxu0 0.0
        %2216 = vmatpush1.msra.mxu0 %v2193
        %2217 = vmatprep.subr.mxu0 0.0
        %2218 = vmatpush1.msra.mxu0 %v2194
        %2219 = vmatprep.subr.mxu0 0.0
        %2220 = vmatpush1.msra.mxu0 %v2195
        %2221 = vmatprep.subr.mxu0 0.0
        %2222 = vmatpush1.msra.mxu0 %v2196
        %2223 = vmatprep.subr.mxu0 0.0
        %2224 = vmatpush1.msra.mxu0 %v2197
        %2225 = vmatprep.subr.mxu0 0.0
        %2226 = vmatpush1.msra.mxu0 %v2198
        %2227 = vmatprep.subr.mxu0 0.0
        %2228 = vmatpush1.msra.mxu0 %v2199
        %2229 = vmatprep.subr.mxu0 0.0
        %2230 = vmatpush1.msra.mxu0 %v2200
        %2231 = vmatprep.subr.mxu0 0.0
        %2232 = vmatpush1.msra.mxu0 %v2201
        %2233 = vmatprep.subr.mxu0 0.0
        %2234 = vmatpush1.msra.mxu0 %v2202
        %2235 = vmatprep.subr.mxu0 0.0
        %2236 = vmatpush1.msra.mxu0 %v2203
        %2237 = vmatprep.subr.mxu0 0.0
        %2238 = vmatpush1.msra.mxu0 %v2204
        %2239 = vmatprep.subr.mxu0 0.0
        %2240 = vmatpush1.msra.mxu0 0.0
        %2241 = vmatprep.subr.mxu0 0.0
        %2242 = vmatpush1.msra.mxu0 0.0
        %2243 = vmatprep.subr.mxu0 0.0
        %2244 = vmatpush1.msra.mxu0 0.0
        %2245 = vmatprep.subr.mxu0 0.0
        %2246 = vmatpush1.msra.mxu0 0.0
        %2247 = vmatprep.subr.mxu0 0.0
        %2248 = vmatpush1.msra.mxu0 0.0
        %2249 = vmatprep.subr.mxu0 0.0
        %2250 = vmatpush1.msra.mxu0 0.0
        %2251 = vmatprep.subr.mxu0 0.0
        %2252 = vmatpush1.msra.mxu0 0.0
        %2253 = vmatprep.subr.mxu0 0.0
        %2254 = vmatpush1.msra.mxu0 0.0
        %2255 = vmatprep.subr.mxu0 0.0
        %2256 = vmatpush1.msra.mxu0 0.0
        %2257 = vmatprep.subr.mxu0 0.0
        %2258 = vmatpush1.msra.mxu0 0.0
        %2259 = vmatprep.subr.mxu0 0.0
        %2260 = vmatpush1.msra.mxu0 0.0
        %2261 = vmatprep.subr.mxu0 0.0
        %2262 = vmatpush1.msra.mxu0 0.0
        %2263 = vmatprep.subr.mxu0 0.0
        %2264 = vmatpush1.msra.mxu0 0.0
        %2265 = vmatprep.subr.mxu0 0.0
        %2266 = vmatpush1.msra.mxu0 0.0
        %2267 = vmatprep.subr.mxu0 0.0
        %2268 = vmatpush1.msra.mxu0 0.0
        %2269 = vmatprep.subr.mxu0 0.0
        %2270 = vmatpush1.msra.mxu0 0.0
        %2271 = vmatprep.subr.mxu0 0.0
        %2272 = vmatpush1.msra.mxu0 0.0
        %2273 = vmatprep.subr.mxu0 0.0
        %2274 = vmatpush1.msra.mxu0 0.0
        %2275 = vmatprep.subr.mxu0 0.0
        %2276 = vmatpush1.msra.mxu0 0.0
        %2277 = vmatprep.subr.mxu0 0.0
        %2278 = vmatpush1.msra.mxu0 0.0
        %2279 = vmatprep.mubr.f32.mxu0 0.0
        %2280 = vmatmul.mubr.f32.gmra.mrb[0].mxu0 %v2213
        %v2281 = vpop.f32.mrb[0].mxu0
        %v2282 = vadd.f32 %v2210, %v2281
        %v2283 = vpop.f32.mrb[0].mxu0
        %2284 = vdwg.mxu0
        %v2285 = vmax.f32 %v2282, 0.0
        %v2286 = vsel %vm1324, %v2285, 0.0
        %2287 = vadd.xlane.f32.xlu0 %v2286
        %v2288 = vpop.xlane.xlu0 %2287
        %v2289 = vmul.f32 %v2288, %v1425
        %v2290 = vmul.f32 %v2285, %v2285
        %v2291 = vsel %vm1324, %v2290, 0.0
        %2292 = vadd.xlane.f32.xlu0 %v2291
        %v2293 = vpop.xlane.xlu0 %2292
        %v2294 = vmul.f32 %v2293, %v1425
        %v2295 = vmul.f32 %v2289, %v2289
        %v2296 = vsub.f32 %v2294, %v2295
        %v2297 = vsub.f32 %v2285, %v2289
        %v2298 = vadd.f32 %v2296, 1e-05
        %v2299 = vrsqrt.pop %v2298
        %v2300 = vmul.f32 %v2297, %v2299
        %v2301 = vld [vmem:[%s49] sm:$0x1]
        %v2303 = vlaneseq
        %v2304 = vshrl.u32 %v2303, 7
        %v2305 = vsub.s32 0, %v2304
        %v2306 = vrot.slane %v2301, %v2305
        %v2308 = vmul.f32 %v2300, %v2306
        %v2309 = vld [vmem:[%s51] sm:$0x1]
        %v2311 = vlaneseq
        %v2312 = vshrl.u32 %v2311, 7
        %v2313 = vsub.s32 0, %v2312
        %v2314 = vrot.slane %v2309, %v2313
        %v2316 = vadd.f32 %v2308, %v2314
        %v2318 = vrot.slane %v2316, 7
        %v2320 = vsel %vm1311, 0.0, %v2318
        %v2321 = vrot.slane %v2316, 1
        %v2323 = vsel %vm1315, %v2321, 0.0
        %2324 = vrot.lane.b32.xlu0 %v2316, 32
        %v2325 = vpop.permute.xlu0 %2324
        %2328 = vrot.lane.b32.xlu0 %v2323, 64
        %v2329 = vpop.permute.xlu0 %2328
        %v2331 = vsel %vm1324, %v2320, %v2325
        %v2332 = vsel %vm1326, %v2331, %v2329
        %v2333 = vld [vmem:[%s53] sm:$0xff]
        %v2334 = vld [vmem:[%s53 + $0x8] sm:$0xff]
        %v2335 = vld [vmem:[%s53 + $0x10] sm:$0xff]
        %v2336 = vld [vmem:[%s53 + $0x18] sm:$0xff]
        %v2337 = vld [vmem:[%s53 + $0x20] sm:$0xff]
        %v2338 = vld [vmem:[%s53 + $0x28] sm:$0xff]
        %v2339 = vld [vmem:[%s53 + $0x30] sm:$0xff]
        %v2340 = vld [vmem:[%s53 + $0x38] sm:$0xff]
        %v2341 = vld [vmem:[%s53 + $0x40] sm:$0xff]
        %v2342 = vld [vmem:[%s53 + $0x48] sm:$0xff]
        %v2343 = vld [vmem:[%s53 + $0x50] sm:$0xff]
        %v2344 = vld [vmem:[%s53 + $0x58] sm:$0xff]
        %v2345 = vld [vmem:[%s55] sm:$0x1]
        %v2347 = vlaneseq
        %v2348 = vshrl.u32 %v2347, 7
        %v2349 = vsub.s32 0, %v2348
        %v2350 = vrot.slane %v2345, %v2349
        %v2353 = vsel %vm1347, %v2332, 0
        %2355 = vmatprep.subr.mxu0 0.0
        %2356 = vmatpush1.msra.mxu0 %v2333
        %2357 = vmatprep.subr.mxu0 0.0
        %2358 = vmatpush1.msra.mxu0 %v2334
        %2359 = vmatprep.subr.mxu0 0.0
        %2360 = vmatpush1.msra.mxu0 %v2335
        %2361 = vmatprep.subr.mxu0 0.0
        %2362 = vmatpush1.msra.mxu0 %v2336
        %2363 = vmatprep.subr.mxu0 0.0
        %2364 = vmatpush1.msra.mxu0 %v2337
        %2365 = vmatprep.subr.mxu0 0.0
        %2366 = vmatpush1.msra.mxu0 %v2338
        %2367 = vmatprep.subr.mxu0 0.0
        %2368 = vmatpush1.msra.mxu0 %v2339
        %2369 = vmatprep.subr.mxu0 0.0
        %2370 = vmatpush1.msra.mxu0 %v2340
        %2371 = vmatprep.subr.mxu0 0.0
        %2372 = vmatpush1.msra.mxu0 %v2341
        %2373 = vmatprep.subr.mxu0 0.0
        %2374 = vmatpush1.msra.mxu0 %v2342
        %2375 = vmatprep.subr.mxu0 0.0
        %2376 = vmatpush1.msra.mxu0 %v2343
        %2377 = vmatprep.subr.mxu0 0.0
        %2378 = vmatpush1.msra.mxu0 %v2344
        %2379 = vmatprep.subr.mxu0 0.0
        %2380 = vmatpush1.msra.mxu0 0.0
        %2381 = vmatprep.subr.mxu0 0.0
        %2382 = vmatpush1.msra.mxu0 0.0
        %2383 = vmatprep.subr.mxu0 0.0
        %2384 = vmatpush1.msra.mxu0 0.0
        %2385 = vmatprep.subr.mxu0 0.0
        %2386 = vmatpush1.msra.mxu0 0.0
        %2387 = vmatprep.subr.mxu0 0.0
        %2388 = vmatpush1.msra.mxu0 0.0
        %2389 = vmatprep.subr.mxu0 0.0
        %2390 = vmatpush1.msra.mxu0 0.0
        %2391 = vmatprep.subr.mxu0 0.0
        %2392 = vmatpush1.msra.mxu0 0.0
        %2393 = vmatprep.subr.mxu0 0.0
        %2394 = vmatpush1.msra.mxu0 0.0
        %2395 = vmatprep.subr.mxu0 0.0
        %2396 = vmatpush1.msra.mxu0 0.0
        %2397 = vmatprep.subr.mxu0 0.0
        %2398 = vmatpush1.msra.mxu0 0.0
        %2399 = vmatprep.subr.mxu0 0.0
        %2400 = vmatpush1.msra.mxu0 0.0
        %2401 = vmatprep.subr.mxu0 0.0
        %2402 = vmatpush1.msra.mxu0 0.0
        %2403 = vmatprep.subr.mxu0 0.0
        %2404 = vmatpush1.msra.mxu0 0.0
        %2405 = vmatprep.subr.mxu0 0.0
        %2406 = vmatpush1.msra.mxu0 0.0
        %2407 = vmatprep.subr.mxu0 0.0
        %2408 = vmatpush1.msra.mxu0 0.0
        %2409 = vmatprep.subr.mxu0 0.0
        %2410 = vmatpush1.msra.mxu0 0.0
        %2411 = vmatprep.subr.mxu0 0.0
        %2412 = vmatpush1.msra.mxu0 0.0
        %2413 = vmatprep.subr.mxu0 0.0
        %2414 = vmatpush1.msra.mxu0 0.0
        %2415 = vmatprep.subr.mxu0 0.0
        %2416 = vmatpush1.msra.mxu0 0.0
        %2417 = vmatprep.subr.mxu0 0.0
        %2418 = vmatpush1.msra.mxu0 0.0
        %2419 = vmatprep.mubr.f32.mxu0 0.0
        %2420 = vmatmul.mubr.f32.gmra.mrb[0].mxu0 %v2353
        %v2421 = vpop.f32.mrb[0].mxu0
        %v2422 = vadd.f32 %v2350, %v2421
        %v2423 = vpop.f32.mrb[0].mxu0
        %2424 = vdwg.mxu0
        %v2425 = vmax.f32 %v2422, 0.0
        %v2426 = vsel %vm1324, %v2425, 0.0
        %2427 = vadd.xlane.f32.xlu0 %v2426
        %v2428 = vpop.xlane.xlu0 %2427
        %v2429 = vmul.f32 %v2428, %v1425
        %v2430 = vmul.f32 %v2425, %v2425
        %v2431 = vsel %vm1324, %v2430, 0.0
        %2432 = vadd.xlane.f32.xlu0 %v2431
        %v2433 = vpop.xlane.xlu0 %2432
        %v2434 = vmul.f32 %v2433, %v1425
        %v2435 = vmul.f32 %v2429, %v2429
        %v2436 = vsub.f32 %v2434, %v2435
        %v2437 = vsub.f32 %v2425, %v2429
        %v2438 = vadd.f32 %v2436, 1e-05
        %v2439 = vrsqrt.pop %v2438
        %v2440 = vmul.f32 %v2437, %v2439
        %v2441 = vld [vmem:[%s57] sm:$0x1]
        %v2443 = vlaneseq
        %v2444 = vshrl.u32 %v2443, 7
        %v2445 = vsub.s32 0, %v2444
        %v2446 = vrot.slane %v2441, %v2445
        %v2448 = vmul.f32 %v2440, %v2446
        %v2449 = vld [vmem:[%s59] sm:$0x1]
        %v2451 = vlaneseq
        %v2452 = vshrl.u32 %v2451, 7
        %v2453 = vsub.s32 0, %v2452
        %v2454 = vrot.slane %v2449, %v2453
        %v2456 = vadd.f32 %v2448, %v2454
        %v2457 = vld [vmem:[%s61] sm:$0xff]
        %v2458 = vld [vmem:[%s61 + $0x8] sm:$0xff]
        %v2459 = vld [vmem:[%s61 + $0x10] sm:$0xff]
        %v2460 = vld [vmem:[%s61 + $0x18] sm:$0xff]
        %v2461 = vld [vmem:[#allocation4] sm:$0x1]
        %v2463 = vlaneseq
        %v2464 = vshrl.u32 %v2463, 7
        %v2465 = vsub.s32 0, %v2464
        %v2466 = vrot.slane %v2461, %v2465
        %v2469 = vsel %vm1324, %v2456, 0
        %2471 = vmatprep.subr.mxu0 0.0
        %2472 = vmatpush1.msra.mxu0 %v2457
        %2473 = vmatprep.subr.mxu0 0.0
        %2474 = vmatpush1.msra.mxu0 %v2458
        %2475 = vmatprep.subr.mxu0 0.0
        %2476 = vmatpush1.msra.mxu0 %v2459
        %2477 = vmatprep.subr.mxu0 0.0
        %2478 = vmatpush1.msra.mxu0 %v2460
        %2479 = vmatprep.subr.mxu0 0.0
        %2480 = vmatpush1.msra.mxu0 0.0
        %2481 = vmatprep.subr.mxu0 0.0
        %2482 = vmatpush1.msra.mxu0 0.0
        %2483 = vmatprep.subr.mxu0 0.0
        %2484 = vmatpush1.msra.mxu0 0.0
        %2485 = vmatprep.subr.mxu0 0.0
        %2486 = vmatpush1.msra.mxu0 0.0
        %2487 = vmatprep.subr.mxu0 0.0
        %2488 = vmatpush1.msra.mxu0 0.0
        %2489 = vmatprep.subr.mxu0 0.0
        %2490 = vmatpush1.msra.mxu0 0.0
        %2491 = vmatprep.subr.mxu0 0.0
        %2492 = vmatpush1.msra.mxu0 0.0
        %2493 = vmatprep.subr.mxu0 0.0
        %2494 = vmatpush1.msra.mxu0 0.0
        %2495 = vmatprep.subr.mxu0 0.0
        %2496 = vmatpush1.msra.mxu0 0.0
        %2497 = vmatprep.subr.mxu0 0.0
        %2498 = vmatpush1.msra.mxu0 0.0
        %2499 = vmatprep.subr.mxu0 0.0
        %2500 = vmatpush1.msra.mxu0 0.0
        %2501 = vmatprep.subr.mxu0 0.0
        %2502 = vmatpush1.msra.mxu0 0.0
        %2503 = vmatprep.subr.mxu0 0.0
        %2504 = vmatpush1.msra.mxu0 0.0
        %2505 = vmatprep.subr.mxu0 0.0
        %2506 = vmatpush1.msra.mxu0 0.0
        %2507 = vmatprep.subr.mxu0 0.0
        %2508 = vmatpush1.msra.mxu0 0.0
        %2509 = vmatprep.subr.mxu0 0.0
        %2510 = vmatpush1.msra.mxu0 0.0
        %2511 = vmatprep.subr.mxu0 0.0
        %2512 = vmatpush1.msra.mxu0 0.0
        %2513 = vmatprep.subr.mxu0 0.0
        %2514 = vmatpush1.msra.mxu0 0.0
        %2515 = vmatprep.subr.mxu0 0.0
        %2516 = vmatpush1.msra.mxu0 0.0
        %2517 = vmatprep.subr.mxu0 0.0
        %2518 = vmatpush1.msra.mxu0 0.0
        %2519 = vmatprep.subr.mxu0 0.0
        %2520 = vmatpush1.msra.mxu0 0.0
        %2521 = vmatprep.subr.mxu0 0.0
        %2522 = vmatpush1.msra.mxu0 0.0
        %2523 = vmatprep.subr.mxu0 0.0
        %2524 = vmatpush1.msra.mxu0 0.0
        %2525 = vmatprep.subr.mxu0 0.0
        %2526 = vmatpush1.msra.mxu0 0.0
        %2527 = vmatprep.subr.mxu0 0.0
        %2528 = vmatpush1.msra.mxu0 0.0
        %2529 = vmatprep.subr.mxu0 0.0
        %2530 = vmatpush1.msra.mxu0 0.0
        %2531 = vmatprep.subr.mxu0 0.0
        %2532 = vmatpush1.msra.mxu0 0.0
        %2533 = vmatprep.subr.mxu0 0.0
        %2534 = vmatpush1.msra.mxu0 0.0
        %2535 = vmatprep.mubr.f32.mxu0 0.0
        %2536 = vmatmul.mubr.f32.gmra.mrb[0].mxu0 %v2469
        %v2537 = vpop.f32.mrb[0].mxu0
        %v2538 = vadd.f32 %v2466, %v2537
        %v2539 = vpop.f32.mrb[0].mxu0
        %2540 = vdwg.mxu0
        %v2541 = vsel %vm1678, 0.0, %v2538
        %2542 = vst.msk [vmem:[%s1294] sm:$0xff] %vm1680, %v2541
        %v2543 = vld [vmem:[%s69] sm:$0x3]
        %v2545 = vlaneseq
        %v2546 = vshrl.u32 %v2545, 7
        %v2547 = vsub.s32 0, %v2546
        %v2548 = vrot.slane %v2543, %v2547
        %v2549 = vlaneseq
        %v2550 = vshrl.u32 %v2549, 7
        %v2551 = vsub.s32 1, %v2550
        %v2552 = vrot.slane %v2543, %v2551
        %2556 = vset.pattern.permute.xlu0 0
        %2557 = vperm.xlu0 %2556, %v2541
        %v2558 = vpop.permute.xlu0 %2557
        %vm2560 = vcmp.lt.f32.partialorder %v2548, %v2558
        %vm2561 = vcmp.lt.f32.partialorder %v2552, %v2558
        %v2562 = vsel %vm2560, 1, 0
        %v2563 = vsel %vm2561, 1, 0
        %v2564 = vsel %vm2050, %v2563, 0
        %v2565 = vadd.s32 %v2562, %v2564
        %v2566 = vand.u32 %v2565, 65535
        %v2567 = vshrl.u32 %v2565, 16
        %v2568 = vcvt.s32.f32 %v2566
        %v2569 = vcvt.s32.f32 %v2567
        %2570 = vadd.xlane.f32.xlu0 %v2568
        %v2571 = vpop.xlane.xlu0 %2570
        %2572 = vadd.xlane.f32.xlu0 %v2569
        %v2573 = vpop.xlane.xlu0 %2572
        %v2574 = vcvt.f32.s32 %v2571
        %v2575 = vcvt.f32.s32 %v2573
        %v2576 = vshll.u32 %v2575, 16
        %v2577 = vadd.s32 %v2576, %v2574
        %vm2578 = vcmp.eq.s32.totalorder %v2066, %v2577
        %vm2579 = vcmp.eq.s32.totalorder %v2067, %v2577
        %v2580 = vsel %vm2578, 1, 0
        %v2581 = vsel %vm2579, 1, 0
        %v2582 = vcvt.s32.f32 %v2580
        %v2583 = vcvt.s32.f32 %v2581
        %v2584 = vld [vmem:[%s71] sm:$0xff]
        %v2585 = vld [vmem:[%s71 + $0x8] sm:$0xff]
        %v2586 = vld [vmem:[%s71 + $0x10] sm:$0xff]
        %v2587 = vld [vmem:[%s71 + $0x18] sm:$0xff]
        %v2588 = vld [vmem:[%s71 + $0x20] sm:$0xff]
        %v2589 = vld [vmem:[%s71 + $0x28] sm:$0xff]
        %v2590 = vld [vmem:[%s71 + $0x30] sm:$0xff]
        %v2591 = vld [vmem:[%s71 + $0x38] sm:$0xff]
        %v2592 = vld [vmem:[%s71 + $0x40] sm:$0xff]
        %v2593 = vld [vmem:[%s71 + $0x48] sm:$0xff]
        %v2594 = vld [vmem:[%s71 + $0x50] sm:$0xff]
        %v2595 = vld [vmem:[%s71 + $0x58] sm:$0xff]
        %v2596 = vld [vmem:[%s71 + $0x60] sm:$0xff]
        %v2597 = vld [vmem:[%s71 + $0x68] sm:$0xff]
        %v2598 = vld [vmem:[%s71 + $0x70] sm:$0xff]
        %v2599 = vld [vmem:[%s71 + $0x78] sm:$0xff]
        %v2600 = vld [vmem:[%s71 + $0x80] sm:$0xff]
        %v2601 = vld [vmem:[%s71 + $0x88] sm:$0xff]
        %v2602 = vld [vmem:[%s71 + $0x90] sm:$0xff]
        %v2603 = vld [vmem:[%s71 + $0x98] sm:$0xff]
        %v2604 = vld [vmem:[%s71 + $0xa0] sm:$0xff]
        %v2605 = vld [vmem:[%s71 + $0xa8] sm:$0xff]
        %v2606 = vld [vmem:[%s71 + $0xb0] sm:$0xff]
        %v2607 = vld [vmem:[%s71 + $0xb8] sm:$0xff]
        %v2608 = vld [vmem:[%s71 + $0xc0] sm:$0xff]
        %v2609 = vld [vmem:[%s71 + $0xc8] sm:$0xff]
        %v2610 = vld [vmem:[%s71 + $0xd0] sm:$0xff]
        %v2611 = vld [vmem:[%s71 + $0xd8] sm:$0xff]
        %v2612 = vld [vmem:[%s71 + $0xe0] sm:$0xff]
        %v2613 = vld [vmem:[%s71 + $0xe8] sm:$0xff]
        %v2614 = vld [vmem:[%s71 + $0xf0] sm:$0xff]
        %v2615 = vld [vmem:[%s71 + $0xf8] sm:$0xff]
        %2616 = vmatprep.subr.mxu0 0.0
        %2617 = vmatpush1.msra.mxu0 %v2584
        %2618 = vmatprep.subr.mxu0 0.0
        %2619 = vmatpush1.msra.mxu0 %v2585
        %2620 = vmatprep.subr.mxu0 0.0
        %2621 = vmatpush1.msra.mxu0 %v2586
        %2622 = vmatprep.subr.mxu0 0.0
        %2623 = vmatpush1.msra.mxu0 %v2587
        %2624 = vmatprep.subr.mxu0 0.0
        %2625 = vmatpush1.msra.mxu0 %v2588
        %2626 = vmatprep.subr.mxu0 0.0
        %2627 = vmatpush1.msra.mxu0 %v2589
        %2628 = vmatprep.subr.mxu0 0.0
        %2629 = vmatpush1.msra.mxu0 %v2590
        %2630 = vmatprep.subr.mxu0 0.0
        %2631 = vmatpush1.msra.mxu0 %v2591
        %2632 = vmatprep.subr.mxu0 0.0
        %2633 = vmatpush1.msra.mxu0 %v2592
        %2634 = vmatprep.subr.mxu0 0.0
        %2635 = vmatpush1.msra.mxu0 %v2593
        %2636 = vmatprep.subr.mxu0 0.0
        %2637 = vmatpush1.msra.mxu0 %v2594
        %2638 = vmatprep.subr.mxu0 0.0
        %2639 = vmatpush1.msra.mxu0 %v2595
        %2640 = vmatprep.subr.mxu0 0.0
        %2641 = vmatpush1.msra.mxu0 %v2596
        %2642 = vmatprep.subr.mxu0 0.0
        %2643 = vmatpush1.msra.mxu0 %v2597
        %2644 = vmatprep.subr.mxu0 0.0
        %2645 = vmatpush1.msra.mxu0 %v2598
        %2646 = vmatprep.subr.mxu0 0.0
        %2647 = vmatpush1.msra.mxu0 %v2599
        %2648 = vmatprep.subr.mxu0 0.0
        %2649 = vmatpush1.msra.mxu0 %v2600
        %2650 = vmatprep.subr.mxu0 0.0
        %2651 = vmatpush1.msra.mxu0 %v2601
        %2652 = vmatprep.subr.mxu0 0.0
        %2653 = vmatpush1.msra.mxu0 %v2602
        %2654 = vmatprep.subr.mxu0 0.0
        %2655 = vmatpush1.msra.mxu0 %v2603
        %2656 = vmatprep.subr.mxu0 0.0
        %2657 = vmatpush1.msra.mxu0 %v2604
        %2658 = vmatprep.subr.mxu0 0.0
        %2659 = vmatpush1.msra.mxu0 %v2605
        %2660 = vmatprep.subr.mxu0 0.0
        %2661 = vmatpush1.msra.mxu0 %v2606
        %2662 = vmatprep.subr.mxu0 0.0
        %2663 = vmatpush1.msra.mxu0 %v2607
        %2664 = vmatprep.subr.mxu0 0.0
        %2665 = vmatpush1.msra.mxu0 %v2608
        %2666 = vmatprep.subr.mxu0 0.0
        %2667 = vmatpush1.msra.mxu0 %v2609
        %2668 = vmatprep.subr.mxu0 0.0
        %2669 = vmatpush1.msra.mxu0 %v2610
        %2670 = vmatprep.subr.mxu0 0.0
        %2671 = vmatpush1.msra.mxu0 %v2611
        %2672 = vmatprep.subr.mxu0 0.0
        %2673 = vmatpush1.msra.mxu0 %v2612
        %2674 = vmatprep.subr.mxu0 0.0
        %2675 = vmatpush1.msra.mxu0 %v2613
        %2676 = vmatprep.subr.mxu0 0.0
        %2677 = vmatpush1.msra.mxu0 %v2614
        %2678 = vmatprep.subr.mxu0 0.0
        %2679 = vmatpush1.msra.mxu0 %v2615
        %2680 = vmatprep.mubr.f32.mxu0 %v2583
        %2681 = vmatmul.mubr.f32.gmra.mrb[0].mxu0 %v2582
        %v2682 = vpop.f32.mrb[0].mxu0
        %v2683 = vadd.f32 0.0, %v2682
        %v2684 = vpop.f32.mrb[0].mxu0
        %2685 = vdwg.mxu0
        %v2686 = vadd.f32 %v2176, %v2683
        %v2687 = vmul.f32 %v1679, 1.442695
        %v2688 = vpow.pop %v2687
        %v2689 = vsub.f32 %v2688, 1.0
        %v2690 = vround.ne.pseudo %v2689
        %v2691 = vmax.f32 %v2690, 0.0
        %2692 = vst.msk [vmem:[%s1302] sm:$0xff] %vm1680, %v2691
        %v2693 = vlaneseq
        %v2694 = vshrl.u32 %v2693, 7
        %vm2695 = vcmp.eq.s32.totalorder %v2694, %v2066
        %v2696 = vsel %vm2695, 1, 0
        %v2697 = vcvt.s32.f32 %v2696
        %2699 = vset.pattern.permute.xlu0 0
        %2700 = vperm.xlu0 %2699, %v2691
        %v2701 = vpop.permute.xlu0 %2700
        %v2703 = vmul.f32 %v2701, %v2697
        %vm2704 = vcmask 64512
        %v2705 = vsel %vm2704, %v2703, 0.0
        %v2706 = vrot.slane %v2705, 4
        %v2707 = vadd.f32 %v2705, %v2706
        %v2708 = vrot.slane %v2707, 2
        %v2709 = vadd.f32 %v2707, %v2708
        %v2710 = vrot.slane %v2709, 1
        %v2711 = vadd.f32 %v2709, %v2710
        %vm2712 = vcmp.le.s32.totalorder %v2694, %v2066
        %v2713 = vsel %vm2712, 1, 0
        %v2714 = vcvt.s32.f32 %v2713
        %v2716 = vsel %vm2704, %v2711, 0
        %2718 = vmatprep.subr.mxu0 0.0
        %2719 = vmatpush1.msra.mxu0 %v2714
        %2720 = vmatprep.subr.mxu0 0.0
        %2721 = vmatpush1.msra.mxu0 0.0
        %2722 = vmatprep.subr.mxu0 0.0
        %2723 = vmatpush1.msra.mxu0 0.0
        %2724 = vmatprep.subr.mxu0 0.0
        %2725 = vmatpush1.msra.mxu0 0.0
        %2726 = vmatprep.subr.mxu0 0.0
        %2727 = vmatpush1.msra.mxu0 0.0
        %2728 = vmatprep.subr.mxu0 0.0
        %2729 = vmatpush1.msra.mxu0 0.0
        %2730 = vmatprep.subr.mxu0 0.0
        %2731 = vmatpush1.msra.mxu0 0.0
        %2732 = vmatprep.subr.mxu0 0.0
        %2733 = vmatpush1.msra.mxu0 0.0
        %2734 = vmatprep.subr.mxu0 0.0
        %2735 = vmatpush1.msra.mxu0 0.0
        %2736 = vmatprep.subr.mxu0 0.0
        %2737 = vmatpush1.msra.mxu0 0.0
        %2738 = vmatprep.subr.mxu0 0.0
        %2739 = vmatpush1.msra.mxu0 0.0
        %2740 = vmatprep.subr.mxu0 0.0
        %2741 = vmatpush1.msra.mxu0 0.0
        %2742 = vmatprep.subr.mxu0 0.0
        %2743 = vmatpush1.msra.mxu0 0.0
        %2744 = vmatprep.subr.mxu0 0.0
        %2745 = vmatpush1.msra.mxu0 0.0
        %2746 = vmatprep.subr.mxu0 0.0
        %2747 = vmatpush1.msra.mxu0 0.0
        %2748 = vmatprep.subr.mxu0 0.0
        %2749 = vmatpush1.msra.mxu0 0.0
        %2750 = vmatprep.subr.mxu0 0.0
        %2751 = vmatpush1.msra.mxu0 0.0
        %2752 = vmatprep.subr.mxu0 0.0
        %2753 = vmatpush1.msra.mxu0 0.0
        %2754 = vmatprep.subr.mxu0 0.0
        %2755 = vmatpush1.msra.mxu0 0.0
        %2756 = vmatprep.subr.mxu0 0.0
        %2757 = vmatpush1.msra.mxu0 0.0
        %2758 = vmatprep.subr.mxu0 0.0
        %2759 = vmatpush1.msra.mxu0 0.0
        %2760 = vmatprep.subr.mxu0 0.0
        %2761 = vmatpush1.msra.mxu0 0.0
        %2762 = vmatprep.subr.mxu0 0.0
        %2763 = vmatpush1.msra.mxu0 0.0
        %2764 = vmatprep.subr.mxu0 0.0
        %2765 = vmatpush1.msra.mxu0 0.0
        %2766 = vmatprep.subr.mxu0 0.0
        %2767 = vmatpush1.msra.mxu0 0.0
        %2768 = vmatprep.subr.mxu0 0.0
        %2769 = vmatpush1.msra.mxu0 0.0
        %2770 = vmatprep.subr.mxu0 0.0
        %2771 = vmatpush1.msra.mxu0 0.0
        %2772 = vmatprep.subr.mxu0 0.0
        %2773 = vmatpush1.msra.mxu0 0.0
        %2774 = vmatprep.subr.mxu0 0.0
        %2775 = vmatpush1.msra.mxu0 0.0
        %2776 = vmatprep.subr.mxu0 0.0
        %2777 = vmatpush1.msra.mxu0 0.0
        %2778 = vmatprep.subr.mxu0 0.0
        %2779 = vmatpush1.msra.mxu0 0.0
        %2780 = vmatprep.subr.mxu0 0.0
        %2781 = vmatpush1.msra.mxu0 0.0
        %2782 = vmatprep.mubr.f32.mxu0 0.0
        %2783 = vmatmul.mubr.f32.gmra.mrb[0].mxu0 %v2716
        %v2784 = vpop.f32.mrb[0].mxu0
        %v2785 = vadd.f32 0.0, %v2784
        %v2786 = vpop.f32.mrb[0].mxu0
        %2787 = vdwg.mxu0
        %v2788 = vsub.f32 %v2785, %v2711
        %2790 = vrot.lane.b32.xlu0 %v2785, 121
        %v2791 = vpop.permute.xlu0 %2790
        %vm2793 = vcmask 0
        %2794 = vst.msk [vmem:[%s1305] sm:$0x1] %vm2793, %v2791
        %v2795 = vadd.s32 %v2694, 8
        %v2796 = vadd.s32 %v2694, 16
        %v2797 = vadd.s32 %v2694, 24
        %v2798 = vcvt.s32.f32 %v2694
        %v2799 = vcvt.s32.f32 %v2795
        %v2800 = vcvt.s32.f32 %v2796
        %v2801 = vcvt.s32.f32 %v2797
        %v2802 = vlaneseq
        %v2803 = vshrl.u32 %v2802, 7
        %v2804 = vsub.s32 0, %v2803
        %v2805 = vrot.slane %v2788, %v2804
        %vm2806 = vcmp.ge.f32.partialorder %v2798, %v2805
        %vm2807 = vcmp.ge.f32.partialorder %v2799, %v2805
        %vm2808 = vcmp.ge.f32.partialorder %v2800, %v2805
        %vm2809 = vcmp.ge.f32.partialorder %v2801, %v2805
        %v2810 = vlaneseq
        %v2811 = vshrl.u32 %v2810, 7
        %v2812 = vsub.s32 0, %v2811
        %v2813 = vrot.slane %v2785, %v2812
        %vm2814 = vcmp.lt.f32.partialorder %v2798, %v2813
        %vm2815 = vcmp.lt.f32.partialorder %v2799, %v2813
        %vm2816 = vcmp.lt.f32.partialorder %v2800, %v2813
        %vm2817 = vcmp.lt.f32.partialorder %v2801, %v2813
        %vm2818 = vmand %vm2806, %vm2814
        %vm2819 = vmand %vm2807, %vm2815
        %vm2820 = vmand %vm2808, %vm2816
        %vm2821 = vmand %vm2809, %vm2817
        %v2822 = vsel %vm2818, 1, 0
        %v2823 = vsel %vm2819, 1, 0
        %v2824 = vsel %vm2820, 1, 0
        %v2825 = vsel %vm2821, 1, 0
        %v2826 = vcvt.s32.f32 %v2822
        %v2827 = vcvt.s32.f32 %v2823
        %v2828 = vcvt.s32.f32 %v2824
        %v2829 = vcvt.s32.f32 %v2825
        %v2831 = vsel %vm2704, %v2826, 0
        %v2834 = vsel %vm2704, %v2827, 0
        %v2837 = vsel %vm2704, %v2828, 0
        %v2840 = vsel %vm2704, %v2829, 0
        %2842 = vmatprep.subr.mxu0 0.0
        %2843 = vmatpush1.msra.mxu0 %v2686
        %2844 = vmatprep.subr.mxu0 0.0
        %2845 = vmatpush1.msra.mxu0 0.0
        %2846 = vmatprep.subr.mxu0 0.0
        %2847 = vmatpush1.msra.mxu0 0.0
        %2848 = vmatprep.subr.mxu0 0.0
        %2849 = vmatpush1.msra.mxu0 0.0
        %2850 = vmatprep.subr.mxu0 0.0
        %2851 = vmatpush1.msra.mxu0 0.0
        %2852 = vmatprep.subr.mxu0 0.0
        %2853 = vmatpush1.msra.mxu0 0.0
        %2854 = vmatprep.subr.mxu0 0.0
        %2855 = vmatpush1.msra.mxu0 0.0
        %2856 = vmatprep.subr.mxu0 0.0
        %2857 = vmatpush1.msra.mxu0 0.0
        %2858 = vmatprep.subr.mxu0 0.0
        %2859 = vmatpush1.msra.mxu0 0.0
        %2860 = vmatprep.subr.mxu0 0.0
        %2861 = vmatpush1.msra.mxu0 0.0
        %2862 = vmatprep.subr.mxu0 0.0
        %2863 = vmatpush1.msra.mxu0 0.0
        %2864 = vmatprep.subr.mxu0 0.0
        %2865 = vmatpush1.msra.mxu0 0.0
        %2866 = vmatprep.subr.mxu0 0.0
        %2867 = vmatpush1.msra.mxu0 0.0
        %2868 = vmatprep.subr.mxu0 0.0
        %2869 = vmatpush1.msra.mxu0 0.0
        %2870 = vmatprep.subr.mxu0 0.0
        %2871 = vmatpush1.msra.mxu0 0.0
        %2872 = vmatprep.subr.mxu0 0.0
        %2873 = vmatpush1.msra.mxu0 0.0
        %2874 = vmatprep.subr.mxu0 0.0
        %2875 = vmatpush1.msra.mxu0 0.0
        %2876 = vmatprep.subr.mxu0 0.0
        %2877 = vmatpush1.msra.mxu0 0.0
        %2878 = vmatprep.subr.mxu0 0.0
        %2879 = vmatpush1.msra.mxu0 0.0
        %2880 = vmatprep.subr.mxu0 0.0
        %2881 = vmatpush1.msra.mxu0 0.0
        %2882 = vmatprep.subr.mxu0 0.0
        %2883 = vmatpush1.msra.mxu0 0.0
        %2884 = vmatprep.subr.mxu0 0.0
        %2885 = vmatpush1.msra.mxu0 0.0
        %2886 = vmatprep.subr.mxu0 0.0
        %2887 = vmatpush1.msra.mxu0 0.0
        %2888 = vmatprep.subr.mxu0 0.0
        %2889 = vmatpush1.msra.mxu0 0.0
        %2890 = vmatprep.subr.mxu0 0.0
        %2891 = vmatpush1.msra.mxu0 0.0
        %2892 = vmatprep.subr.mxu0 0.0
        %2893 = vmatpush1.msra.mxu0 0.0
        %2894 = vmatprep.subr.mxu0 0.0
        %2895 = vmatpush1.msra.mxu0 0.0
        %2896 = vmatprep.subr.mxu0 0.0
        %2897 = vmatpush1.msra.mxu0 0.0
        %2898 = vmatprep.subr.mxu0 0.0
        %2899 = vmatpush1.msra.mxu0 0.0
        %2900 = vmatprep.subr.mxu0 0.0
        %2901 = vmatpush1.msra.mxu0 0.0
        %2902 = vmatprep.subr.mxu0 0.0
        %2903 = vmatpush1.msra.mxu0 0.0
        %2904 = vmatprep.subr.mxu0 0.0
        %2905 = vmatpush1.msra.mxu0 0.0
        %2906 = vmatprep.mubr.f32.mxu0 0.0
        %2907 = vmatmul.mubr.f32.gmra.mrb[0].mxu0 %v2831
        %v2908 = vpop.f32.mrb[0].mxu0
        %v2909 = vadd.f32 0.0, %v2908
        %v2910 = vpop.f32.mrb[0].mxu0
        %2911 = vmatprep.mubr.f32.mxu0 0.0
        %2912 = vmatmul.mubr.f32.gmra.mrb[0].mxu0 %v2834
        %v2913 = vpop.f32.mrb[0].mxu0
        %v2914 = vadd.f32 0.0, %v2913
        %v2915 = vpop.f32.mrb[0].mxu0
        %2916 = vmatprep.mubr.f32.mxu0 0.0
        %2917 = vmatmul.mubr.f32.gmra.mrb[0].mxu0 %v2837
        %v2918 = vpop.f32.mrb[0].mxu0
        %v2919 = vadd.f32 0.0, %v2918
        %v2920 = vpop.f32.mrb[0].mxu0
        %2921 = vmatprep.mubr.f32.mxu0 0.0
        %2922 = vmatmul.mubr.f32.gmra.mrb[0].mxu0 %v2840
        %v2923 = vpop.f32.mrb[0].mxu0
        %v2924 = vadd.f32 0.0, %v2923
        %v2925 = vpop.f32.mrb[0].mxu0
        %2926 = vdwg.mxu0
        %2927 = vst.msk [vmem:[%s1249] sm:$0xff] %vm1324, %v2909
        %2928 = vst.msk [vmem:[%s1249 + $0x8] sm:$0xff] %vm1324, %v2914
        %2929 = vst.msk [vmem:[%s1249 + $0x10] sm:$0xff] %vm1324, %v2919
        %2930 = vst.msk [vmem:[%s1249 + $0x18] sm:$0xff] %vm1324, %v2924
        %s2931 = sand.u32 %s878, 1
        %s2932 = scalar_lea.sflag [#allocation6], %s2931
        %s2933 = sand.u32 %s878, 1
        %s2934 = smul.addr %s2933, 32
        %s2935 = scalar_lea.vmem [#allocation5], %s2934
        %p2936 = scmp.lt.s32.totalorder %s104, 1
        %s2937 = scalar_select %p2936, %s104, 1
        %s2938 = smul.addr %s2937, 8
        %s2939 = scalar_lea.vmem %s75, %s2938
        %p2940 = scmp.lt.s32.totalorder %s104, 1
        %s2941 = scalar_select %p2940, %s104, 1
        %s2942 = smul.addr %s2941, 8
        %s2943 = scalar_lea.vmem %s77, %s2942
        %p2944 = scmp.lt.s32.totalorder %s104, 1
        %s2945 = scalar_select %p2944, %s104, 1
        %s2946 = smul.addr %s2945, 8
        %s2947 = scalar_lea.vmem %s79, %s2946
        %p2948 = scmp.lt.s32.totalorder %s104, 1
        %s2949 = scalar_select %p2948, %s104, 1
        %s2950 = smul.addr %s2949, 8
        %s2951 = scalar_lea.vmem %s81, %s2950
        %p2952 = scmp.lt.s32.totalorder %s104, 1
        %s2953 = scalar_select %p2952, %s104, 1
        %s2954 = scalar_lea.vmem %s83, %s2953
        // Predicated region
        $region165: #{variance_adaptor_forward.1} parent=163 // pred_check
          %p2955 = pneg %p888
        $region166: #{variance_adaptor_forward.1} parent=163 // pred_check_branch
          %2957 = sbr.rel (%p2955) target = $region168
        $region167: #{variance_adaptor_forward.1} parent=163 // pred_region
          %s2959 = ssub.s32 512, 512
          %2960 = vsyncadd %s2932, %s2959
          %s2961 = smul.addr %s104, 4
          %s2962 = smul.addr %s2961, 128
          %s2963 = scalar_lea.hbm %s73, %s2962
          %s2964 = sshll.u32 %s2935, 4
          %s2965 = int_to_ptr.vmem [resolvable:$true] %s2964
          %2970 = dma.vmem_to_hbm [thread:$0]  %s2965, 512, %s2963, %s2932, 128, 128, 8
        $region168: #{variance_adaptor_forward.1} parent=163 // pred_fallthru
          _
        // Predicated region
        $region169: #{variance_adaptor_forward.1} parent=163 // pred_check
          %p2971 = pneg %p914
        $region170: #{variance_adaptor_forward.1} parent=163 // pred_check_branch
          %2973 = sbr.rel (%p2971) target = $region172
        $region171: #{variance_adaptor_forward.1} parent=163 // pred_region
          _
        $region172: #{variance_adaptor_forward.1} parent=163 // pred_fallthru
          _
        // Predicated region
        $region173: #{variance_adaptor_forward.1} parent=163 // pred_check
          %p2974 = pneg %p940
        $region174: #{variance_adaptor_forward.1} parent=163 // pred_check_branch
          %2976 = sbr.rel (%p2974) target = $region176
        $region175: #{variance_adaptor_forward.1} parent=163 // pred_region
          _
        $region176: #{variance_adaptor_forward.1} parent=163 // pred_fallthru
          _
        // Predicated region
        $region177: #{variance_adaptor_forward.1} parent=163 // pred_check
          %p2977 = pneg %p966
        $region178: #{variance_adaptor_forward.1} parent=163 // pred_check_branch
          %2979 = sbr.rel (%p2977) target = $region180
        $region179: #{variance_adaptor_forward.1} parent=163 // pred_region
          _
        $region180: #{variance_adaptor_forward.1} parent=163 // pred_fallthru
          _
        // Predicated region
        $region181: #{variance_adaptor_forward.1} parent=163 // pred_check
          %p2980 = pneg %p992
        $region182: #{variance_adaptor_forward.1} parent=163 // pred_check_branch
          %2982 = sbr.rel (%p2980) target = $region184
        $region183: #{variance_adaptor_forward.1} parent=163 // pred_region
          _
        $region184: #{variance_adaptor_forward.1} parent=163 // pred_fallthru
          _
        // Predicated region
        $region185: #{variance_adaptor_forward.1} parent=163 // pred_check
          %p2983 = pneg %p1018
        $region186: #{variance_adaptor_forward.1} parent=163 // pred_check_branch
          %2985 = sbr.rel (%p2983) target = $region188
        $region187: #{variance_adaptor_forward.1} parent=163 // pred_region
          _
        $region188: #{variance_adaptor_forward.1} parent=163 // pred_fallthru
          _
      $region164: #{variance_adaptor_forward.1} parent=5 // pred_fallthru
        _
      %p2986 = scmp.le.s32.totalorder 2, %s99
      // Predicated region
      $region189: #{variance_adaptor_forward.1} parent=5 // pred_check
        %p2987 = pneg %p2986
      $region190: #{variance_adaptor_forward.1} parent=5 // pred_check_branch
        %2989 = sbr.rel (%p2987) target = $region192
      $region191: #{variance_adaptor_forward.1} parent=5 // pred_region
        %s2990 = ssub.s32 %s99, 2
        // Predicated region
        $region193: #{variance_adaptor_forward.1} parent=191 // pred_check
          %p2991 = pneg %p894
        $region194: #{variance_adaptor_forward.1} parent=191 // pred_check_branch
          %2993 = sbr.rel (%p2991) target = $region196
        $region195: #{variance_adaptor_forward.1} parent=191 // pred_region
          %s2994 = sand.u32 %s879, 1
          %s2995 = scalar_lea.sflag [#allocation6], %s2994
          %s2996 = sand.u32 %s879, 1
          %s2997 = smul.addr %s2996, 32
          %s2998 = scalar_lea.vmem [#allocation5], %s2997
          %2999 = dma.done %s2995, 512
        $region196: #{variance_adaptor_forward.1} parent=191 // pred_fallthru
          _
        // Predicated region
        $region197: #{variance_adaptor_forward.1} parent=191 // pred_check
          %p3000 = pneg %p920
        $region198: #{variance_adaptor_forward.1} parent=191 // pred_check_branch
          %3002 = sbr.rel (%p3000) target = $region200
        $region199: #{variance_adaptor_forward.1} parent=191 // pred_region
          %p3003 = scmp.lt.s32.totalorder %s105, 1
          %s3004 = scalar_select %p3003, %s105, 1
          %s3005 = smul.addr %s3004, 8
          %s3006 = scalar_lea.vmem %s75, %s3005
        $region200: #{variance_adaptor_forward.1} parent=191 // pred_fallthru
          _
        // Predicated region
        $region201: #{variance_adaptor_forward.1} parent=191 // pred_check
          %p3007 = pneg %p946
        $region202: #{variance_adaptor_forward.1} parent=191 // pred_check_branch
          %3009 = sbr.rel (%p3007) target = $region204
        $region203: #{variance_adaptor_forward.1} parent=191 // pred_region
          %p3010 = scmp.lt.s32.totalorder %s105, 1
          %s3011 = scalar_select %p3010, %s105, 1
          %s3012 = smul.addr %s3011, 8
          %s3013 = scalar_lea.vmem %s77, %s3012
        $region204: #{variance_adaptor_forward.1} parent=191 // pred_fallthru
          _
        // Predicated region
        $region205: #{variance_adaptor_forward.1} parent=191 // pred_check
          %p3014 = pneg %p972
        $region206: #{variance_adaptor_forward.1} parent=191 // pred_check_branch
          %3016 = sbr.rel (%p3014) target = $region208
        $region207: #{variance_adaptor_forward.1} parent=191 // pred_region
          %p3017 = scmp.lt.s32.totalorder %s105, 1
          %s3018 = scalar_select %p3017, %s105, 1
          %s3019 = smul.addr %s3018, 8
          %s3020 = scalar_lea.vmem %s79, %s3019
        $region208: #{variance_adaptor_forward.1} parent=191 // pred_fallthru
          _
        // Predicated region
        $region209: #{variance_adaptor_forward.1} parent=191 // pred_check
          %p3021 = pneg %p998
        $region210: #{variance_adaptor_forward.1} parent=191 // pred_check_branch
          %3023 = sbr.rel (%p3021) target = $region212
        $region211: #{variance_adaptor_forward.1} parent=191 // pred_region
          %p3024 = scmp.lt.s32.totalorder %s105, 1
          %s3025 = scalar_select %p3024, %s105, 1
          %s3026 = smul.addr %s3025, 8
          %s3027 = scalar_lea.vmem %s81, %s3026
        $region212: #{variance_adaptor_forward.1} parent=191 // pred_fallthru
          _
        // Predicated region
        $region213: #{variance_adaptor_forward.1} parent=191 // pred_check
          %p3028 = pneg %p1024
        $region214: #{variance_adaptor_forward.1} parent=191 // pred_check_branch
          %3030 = sbr.rel (%p3028) target = $region216
        $region215: #{variance_adaptor_forward.1} parent=191 // pred_region
          %p3031 = scmp.lt.s32.totalorder %s105, 1
          %s3032 = scalar_select %p3031, %s105, 1
          %s3033 = scalar_lea.vmem %s83, %s3032
        $region216: #{variance_adaptor_forward.1} parent=191 // pred_fallthru
          _
      $region192: #{variance_adaptor_forward.1} parent=5 // pred_fallthru
        _
    $region6: #{variance_adaptor_forward.1} parent=1 // loop_footer
      %s103 = sadd.s32 1, %s99
    $region7: #{variance_adaptor_forward.1} parent=1 // loop_footer_branch
      %98 = sbr.rel target = $region3
    $region8: #{variance_adaptor_forward.1} parent=1 // loop_exit
      _
    %3034 = vsyncpa [#allocation6], 1
    %s3035 = scalar_lea.sflag [#allocation6], 1
    %3036 = vsyncpa %s3035, 1

</llo_original>
